<compile_context>
chip_gen: v7x
topology: tpu7x:2x2x1
jax: 0.10.0
libtpu: 0.0.40
codegen_flags: <defaults>
</compile_context>

<pallas_src>
import jax
import jax.numpy as jnp
from jax.experimental import pallas as pl
from jax.experimental.pallas import tpu as pltpu  # noqa: F401  (kept for TPU-specific params if needed)

HIDDEN = 64   # LSTM hidden size
KSIZE = 4     # Conv1d kernel size
PAD_B = 8     # LSTM batch rows padded to a sublane multiple


# --------------------------------------------------------------------------------------
# Kernel 1: Conv1d(k=4) + BN(eval) + ReLU, twice -- whole batch, single invocation.
# Channel-major layout throughout: x (N, Cin, L) -> out (N, 32, L2)  (PyTorch NCL).
# --------------------------------------------------------------------------------------
def conv_block_kernel(x_ref, w1_ref, s1_ref, w2_ref, s2_ref, o_ref):
    # x_ref: (N, Cin, L)   w1_ref: (K, 16, Cin)  s1_ref: (16, 2) [scale | shift]
    # w2_ref: (K, 32, 16)  s2_ref: (32, 2)       o_ref: (N, 32, L2)
    N, Cin, L = x_ref.shape
    L1 = L - KSIZE + 1
    L2 = L1 - KSIZE + 1

    sc1 = s1_ref[:, 0:1]
    sh1 = s1_ref[:, 1:2]
    sc2 = s2_ref[:, 0:1]
    sh2 = s2_ref[:, 1:2]

    for n in range(N):                               # N is tiny & static: unrolled
        x = x_ref[n]                                 # (Cin, L)
        acc1 = jnp.zeros((16, L1), jnp.float32)
        for k in range(KSIZE):                       # conv as sum of shifted matmuls
            acc1 += jnp.dot(w1_ref[k], x[:, k:k + L1],
                            preferred_element_type=jnp.float32)
        h1 = jnp.maximum(acc1 * sc1 + sh1, 0.0)      # BN(eval)+bias fold, ReLU  (16, L1)

        acc2 = jnp.zeros((32, L2), jnp.float32)
        for k in range(KSIZE):
            acc2 += jnp.dot(w2_ref[k], h1[:, k:k + L2],
                            preferred_element_type=jnp.float32)
        h2 = jnp.maximum(acc2 * sc2 + sh2, 0.0)      # (32, L2)
        # TODO(synk): nn.Dropout(0.5) is identity in eval mode; train-mode dropout not implemented.
        o_ref[n] = h2.astype(o_ref.dtype)


def conv_block(x_ncl, w1k, s1, w2k, s2):
    N, Cin, L = x_ncl.shape
    L2 = L - 2 * (KSIZE - 1)
    return pl.pallas_call(
        conv_block_kernel,
        out_shape=jax.ShapeDtypeStruct((N, 32, L2), jnp.float32),
    )(x_ncl, w1k, s1, w2k, s2)


# --------------------------------------------------------------------------------------
# Kernel 2: bidirectional LSTM (only what fc(output[-1]) needs) + FC head, fused.
# Input xb: (T*PAD_B, 32) with the real LSTM batch rows in rows [t*PAD_B, t*PAD_B + N).
# --------------------------------------------------------------------------------------
def lstm_fc_kernel(xb_ref, wi_f_ref, wh_f_ref, b_f_ref,
                   wi_b_ref, b_b_ref,
                   fc1a_ref, fc1b_ref, fc1_bias_ref, fc2w_ref, fc2b_ref,
                   o_ref):
    T = xb_ref.shape[0] // PAD_B
    X = xb_ref[...]                                              # (T*8, 32)

    # Hoisted input projection for the forward direction: all timesteps in one matmul.
    gf_all = (jnp.dot(X, wi_f_ref[...], preferred_element_type=jnp.float32)
              + b_f_ref[...])                                    # (T*8, 256)
    wh = wh_f_ref[...]                                           # (64, 256)

    h = jnp.zeros((PAD_B, HIDDEN), jnp.float32)
    c = jnp.zeros((PAD_B, HIDDEN), jnp.float32)
    for t in range(T):                                           # static unroll (T small)
        g = gf_all[t * PAD_B:(t + 1) * PAD_B, :] + jnp.dot(
            h, wh, preferred_element_type=jnp.float32)           # (8, 256)
        sg = jax.nn.sigmoid(g)                                   # full-width on EUP
        tg = jnp.tanh(g)
        i_g = sg[:, 0 * HIDDEN:1 * HIDDEN]
        f_g = sg[:, 1 * HIDDEN:2 * HIDDEN]
        g_g = tg[:, 2 * HIDDEN:3 * HIDDEN]
        o_g = sg[:, 3 * HIDDEN:4 * HIDDEN]
        c = f_g * c + i_g * g_g
        h = o_g * jnp.tanh(c)

    # Backward direction: output[-1]'s backward half is the backward cell's first step
    # (zero initial state), so one cell evaluation suffices (h0 @ W_hh_b == 0).
    x_last = X[(T - 1) * PAD_B:T * PAD_B, :]                     # (8, 32)
    gb = (jnp.dot(x_last, wi_b_ref[...], preferred_element_type=jnp.float32)
          + b_b_ref[...])                                        # (8, 256)
    sgb = jax.nn.sigmoid(gb)
    tgb = jnp.tanh(gb)
    cb = sgb[:, 0 * HIDDEN:1 * HIDDEN] * tgb[:, 2 * HIDDEN:3 * HIDDEN]
    hb = sgb[:, 3 * HIDDEN:4 * HIDDEN] * jnp.tanh(cb)            # (8, 64)

    # FC head: Linear(128,32)+ReLU+Linear(32,C).  fc1 weight split avoids an in-kernel concat.
    z = (jnp.dot(h, fc1a_ref[...], preferred_element_type=jnp.float32)
         + jnp.dot(hb, fc1b_ref[...], preferred_element_type=jnp.float32)
         + fc1_bias_ref[...])
    z = jnp.maximum(z, 0.0)
    out = jnp.dot(z, fc2w_ref[...], preferred_element_type=jnp.float32) + fc2b_ref[...]

    n_out = o_ref.shape[0]
    o_ref[...] = out[:n_out, :].astype(o_ref.dtype)


def lstm_fc(xb, wi_f, wh_f, b_f, wi_b, b_b, fc1a, fc1b, fc1_bias, fc2w, fc2b, n_out):
    C = fc2w.shape[1]
    return pl.pallas_call(
        lstm_fc_kernel,
        out_shape=jax.ShapeDtypeStruct((n_out, C), jnp.float32),
    )(xb, wi_f, wh_f, b_f, wi_b, b_b, fc1a, fc1b, fc1_bias, fc2w, fc2b)


# --------------------------------------------------------------------------------------
# Parameters (deterministic, synthetic) and end-to-end forward
# --------------------------------------------------------------------------------------
def init_params(key, input_size, num_classes):
    ks = jax.random.split(key, 24)
    n = lambda k, shape, s=0.1: jax.random.normal(k, shape, jnp.float32) * s
    u = lambda k, shape: jax.random.uniform(k, shape, jnp.float32, 0.5, 1.5)
    p = {}
    p["conv1_w"] = n(ks[0], (16, input_size, KSIZE))
    p["conv1_b"] = n(ks[1], (16,))
    p["bn1_gamma"], p["bn1_beta"] = u(ks[2], (16,)), n(ks[3], (16,))
    p["bn1_mean"], p["bn1_var"] = n(ks[4], (16,)), u(ks[5], (16,))
    p["conv2_w"] = n(ks[6], (32, 16, KSIZE))
    p["conv2_b"] = n(ks[7], (32,))
    p["bn2_gamma"], p["bn2_beta"] = u(ks[8], (32,)), n(ks[9], (32,))
    p["bn2_mean"], p["bn2_var"] = n(ks[10], (32,)), u(ks[11], (32,))
    p["w_ih_f"] = n(ks[12], (4 * HIDDEN, 32))
    p["w_hh_f"] = n(ks[13], (4 * HIDDEN, HIDDEN))
    p["b_ih_f"] = n(ks[14], (4 * HIDDEN,))
    p["b_hh_f"] = n(ks[15], (4 * HIDDEN,))
    p["w_ih_b"] = n(ks[16], (4 * HIDDEN, 32))
    p["w_hh_b"] = n(ks[17], (4 * HIDDEN, HIDDEN))   # unused on the consumed path (h0 == 0)
    p["b_ih_b"] = n(ks[18], (4 * HIDDEN,))
    p["b_hh_b"] = n(ks[19], (4 * HIDDEN,))
    p["fc1_w"] = n(ks[20], (32, 2 * HIDDEN))
    p["fc1_b"] = n(ks[21], (32,))
    p["fc2_w"] = n(ks[22], (num_classes, 32))
    p["fc2_b"] = n(ks[23], (num_classes,))
    return p


def crnn_forward(x, p):
    d0, d1, d2 = x.shape
    # torch: x = x.view(x.size(1), x.size(2), x.size(0))  -> raw row-major reshape
    x_ncl = x.reshape(d1, d2, d0)                  # (N, Cin, L) PyTorch Conv1d layout
    N, Cin, L = x_ncl.shape
    assert N <= PAD_B
    L2 = L - 2 * (KSIZE - 1)

    eps = 1e-5
    scale1 = p["bn1_gamma"] / jnp.sqrt(p["bn1_var"] + eps)
    shift1 = (p["conv1_b"] - p["bn1_mean"]) * scale1 + p["bn1_beta"]
    scale2 = p["bn2_gamma"] / jnp.sqrt(p["bn2_var"] + eps)
    shift2 = (p["conv2_b"] - p["bn2_mean"]) * scale2 + p["bn2_beta"]
    w1k = jnp.transpose(p["conv1_w"], (2, 0, 1))   # (K, 16, Cin)
    w2k = jnp.transpose(p["conv2_w"], (2, 0, 1))   # (K, 32, 16)
    s1 = jnp.stack([scale1, shift1], axis=1)       # (16, 2)
    s2 = jnp.stack([scale2, shift2], axis=1)       # (32, 2)

    conv_ncl = conv_block(x_ncl, w1k, s1, w2k, s2)          # (N, 32, L2) PyTorch layout

    # torch: output.view(output.size(2), output.size(0), output.size(1)) -> raw reshape (free)
    lstm_in = conv_ncl.reshape(L2, N, 32)
    # zero-pad the LSTM batch rows to PAD_B so per-timestep tiles are sublane-aligned
    lstm_in_p = jnp.pad(lstm_in, ((0, 0), (0, PAD_B - N), (0, 0)))
    xb = lstm_in_p.reshape(L2 * PAD_B, 32)

    fc1_wT = jnp.transpose(p["fc1_w"])             # (128, 32)
    return lstm_fc(
        xb,
        jnp.transpose(p["w_ih_f"]), jnp.transpose(p["w_hh_f"]),
        (p["b_ih_f"] + p["b_hh_f"]).reshape(1, -1),
        jnp.transpose(p["w_ih_b"]),
        (p["b_ih_b"] + p["b_hh_b"]).reshape(1, -1),
        fc1_wT[:HIDDEN], fc1_wT[HIDDEN:], p["fc1_b"].reshape(1, -1),
        jnp.transpose(p["fc2_w"]), p["fc2_b"].reshape(1, -1),
        n_out=N)


if __name__ == "__main__":
    key = jax.random.PRNGKey(0)
    k_x, k_p = jax.random.split(key)
    seq_len, batch, input_size, num_classes = 16, 2, 4, 5
    x = jax.random.normal(k_x, (seq_len, batch, input_size), jnp.float32)
    params = init_params(k_p, input_size, num_classes)

    out = jax.jit(crnn_forward)(x, params)
    out = jax.block_until_ready(out)
    assert out.shape == (batch, num_classes), out.shape
    assert bool(jnp.all(jnp.isfinite(out)))
    print("KERNEL_OK")
</pallas_src>

<mosaic_0001>
module attributes {stable_mosaic.version = 11 : i64} {
  func.func @conv_block_kernel(%arg0: memref<2x4x16xf32, #tpu.memory_space<vmem>>, %arg1: memref<4x16x4xf32, #tpu.memory_space<vmem>>, %arg2: memref<16x2xf32, #tpu.memory_space<vmem>>, %arg3: memref<4x32x16xf32, #tpu.memory_space<vmem>>, %arg4: memref<32x2xf32, #tpu.memory_space<vmem>>, %arg5: memref<2x32x10xf32, #tpu.memory_space<vmem>>) attributes {dimension_semantics = [], scalar_prefetch = 0 : i64, scratch_operands = 0 : i64, tpu.core_type = #tpu.core_type<tc>} {
    %c0 = arith.constant 0 : index
    %c0_0 = arith.constant 0 : index
    %0 = vector.load %arg2[%c0, %c0_0] : memref<16x2xf32, #tpu.memory_space<vmem>>, vector<16x1xf32>
    %c0_1 = arith.constant 0 : index
    %c1 = arith.constant 1 : index
    %1 = vector.load %arg2[%c0_1, %c1] : memref<16x2xf32, #tpu.memory_space<vmem>>, vector<16x1xf32>
    %c0_2 = arith.constant 0 : index
    %c0_3 = arith.constant 0 : index
    %2 = vector.load %arg4[%c0_2, %c0_3] : memref<32x2xf32, #tpu.memory_space<vmem>>, vector<32x1xf32>
    %c0_4 = arith.constant 0 : index
    %c1_5 = arith.constant 1 : index
    %3 = vector.load %arg4[%c0_4, %c1_5] : memref<32x2xf32, #tpu.memory_space<vmem>>, vector<32x1xf32>
    %c0_6 = arith.constant 0 : index
    %c0_7 = arith.constant 0 : index
    %c0_8 = arith.constant 0 : index
    %4 = vector.load %arg0[%c0_6, %c0_7, %c0_8] : memref<2x4x16xf32, #tpu.memory_space<vmem>>, vector<1x4x16xf32>
    %5 = vector.shape_cast %4 : vector<1x4x16xf32> to vector<4x16xf32>
    %cst = arith.constant 0.000000e+00 : f32
    %6 = vector.broadcast %cst : f32 to vector<16x13xf32>
    %c0_9 = arith.constant 0 : index
    %c0_10 = arith.constant 0 : index
    %c0_11 = arith.constant 0 : index
    %7 = vector.load %arg1[%c0_9, %c0_10, %c0_11] : memref<4x16x4xf32, #tpu.memory_space<vmem>>, vector<1x16x4xf32>
    %8 = vector.shape_cast %7 : vector<1x16x4xf32> to vector<16x4xf32>
    %9 = vector.extract_strided_slice %5 {offsets = [0, 0], sizes = [4, 13], strides = [1, 1]} : vector<4x16xf32> to vector<4x13xf32>
    %cst_12 = arith.constant dense<0.000000e+00> : vector<16x13xf32>
    %10 = tpu.matmul %8, %9, %cst_12 {dimension_numbers = #tpu.dot_dimension_numbers<[1], [0], [0], [1], [0, 0, 1, 1], [], []>} : vector<16x4xf32>, vector<4x13xf32>, vector<16x13xf32> -> vector<16x13xf32>
    %11 = arith.addf %6, %10 : vector<16x13xf32>
    %c1_13 = arith.constant 1 : index
    %c0_14 = arith.constant 0 : index
    %c0_15 = arith.constant 0 : index
    %12 = vector.load %arg1[%c1_13, %c0_14, %c0_15] : memref<4x16x4xf32, #tpu.memory_space<vmem>>, vector<1x16x4xf32>
    %13 = vector.shape_cast %12 : vector<1x16x4xf32> to vector<16x4xf32>
    %14 = vector.extract_strided_slice %5 {offsets = [0, 1], sizes = [4, 13], strides = [1, 1]} : vector<4x16xf32> to vector<4x13xf32>
    %cst_16 = arith.constant dense<0.000000e+00> : vector<16x13xf32>
    %15 = tpu.matmul %13, %14, %cst_16 {dimension_numbers = #tpu.dot_dimension_numbers<[1], [0], [0], [1], [0, 0, 1, 1], [], []>} : vector<16x4xf32>, vector<4x13xf32>, vector<16x13xf32> -> vector<16x13xf32>
    %16 = arith.addf %11, %15 : vector<16x13xf32>
    %c2 = arith.constant 2 : index
    %c0_17 = arith.constant 0 : index
    %c0_18 = arith.constant 0 : index
    %17 = vector.load %arg1[%c2, %c0_17, %c0_18] : memref<4x16x4xf32, #tpu.memory_space<vmem>>, vector<1x16x4xf32>
    %18 = vector.shape_cast %17 : vector<1x16x4xf32> to vector<16x4xf32>
    %19 = vector.extract_strided_slice %5 {offsets = [0, 2], sizes = [4, 13], strides = [1, 1]} : vector<4x16xf32> to vector<4x13xf32>
    %cst_19 = arith.constant dense<0.000000e+00> : vector<16x13xf32>
    %20 = tpu.matmul %18, %19, %cst_19 {dimension_numbers = #tpu.dot_dimension_numbers<[1], [0], [0], [1], [0, 0, 1, 1], [], []>} : vector<16x4xf32>, vector<4x13xf32>, vector<16x13xf32> -> vector<16x13xf32>
    %21 = arith.addf %16, %20 : vector<16x13xf32>
    %c3 = arith.constant 3 : index
    %c0_20 = arith.constant 0 : index
    %c0_21 = arith.constant 0 : index
    %22 = vector.load %arg1[%c3, %c0_20, %c0_21] : memref<4x16x4xf32, #tpu.memory_space<vmem>>, vector<1x16x4xf32>
    %23 = vector.shape_cast %22 : vector<1x16x4xf32> to vector<16x4xf32>
    %24 = vector.extract_strided_slice %5 {offsets = [0, 3], sizes = [4, 13], strides = [1, 1]} : vector<4x16xf32> to vector<4x13xf32>
    %cst_22 = arith.constant dense<0.000000e+00> : vector<16x13xf32>
    %25 = tpu.matmul %23, %24, %cst_22 {dimension_numbers = #tpu.dot_dimension_numbers<[1], [0], [0], [1], [0, 0, 1, 1], [], []>} : vector<16x4xf32>, vector<4x13xf32>, vector<16x13xf32> -> vector<16x13xf32>
    %26 = arith.addf %21, %25 : vector<16x13xf32>
    %27 = vector.broadcast %0 : vector<16x1xf32> to vector<16x13xf32>
    %28 = arith.mulf %26, %27 : vector<16x13xf32>
    %29 = vector.broadcast %1 : vector<16x1xf32> to vector<16x13xf32>
    %30 = arith.addf %28, %29 : vector<16x13xf32>
    %cst_23 = arith.constant 0.000000e+00 : f32
    %31 = vector.broadcast %cst_23 : f32 to vector<16x13xf32>
    %32 = arith.maximumf %30, %31 : vector<16x13xf32>
    %cst_24 = arith.constant 0.000000e+00 : f32
    %33 = vector.broadcast %cst_24 : f32 to vector<32x10xf32>
    %c0_25 = arith.constant 0 : index
    %c0_26 = arith.constant 0 : index
    %c0_27 = arith.constant 0 : index
    %34 = vector.load %arg3[%c0_25, %c0_26, %c0_27] : memref<4x32x16xf32, #tpu.memory_space<vmem>>, vector<1x32x16xf32>
    %35 = vector.shape_cast %34 : vector<1x32x16xf32> to vector<32x16xf32>
    %36 = vector.extract_strided_slice %32 {offsets = [0, 0], sizes = [16, 10], strides = [1, 1]} : vector<16x13xf32> to vector<16x10xf32>
    %cst_28 = arith.constant dense<0.000000e+00> : vector<32x10xf32>
    %37 = tpu.matmul %35, %36, %cst_28 {dimension_numbers = #tpu.dot_dimension_numbers<[1], [0], [0], [1], [0, 0, 1, 1], [], []>} : vector<32x16xf32>, vector<16x10xf32>, vector<32x10xf32> -> vector<32x10xf32>
    %38 = arith.addf %33, %37 : vector<32x10xf32>
    %c1_29 = arith.constant 1 : index
    %c0_30 = arith.constant 0 : index
    %c0_31 = arith.constant 0 : index
    %39 = vector.load %arg3[%c1_29, %c0_30, %c0_31] : memref<4x32x16xf32, #tpu.memory_space<vmem>>, vector<1x32x16xf32>
    %40 = vector.shape_cast %39 : vector<1x32x16xf32> to vector<32x16xf32>
    %41 = vector.extract_strided_slice %32 {offsets = [0, 1], sizes = [16, 10], strides = [1, 1]} : vector<16x13xf32> to vector<16x10xf32>
    %cst_32 = arith.constant dense<0.000000e+00> : vector<32x10xf32>
    %42 = tpu.matmul %40, %41, %cst_32 {dimension_numbers = #tpu.dot_dimension_numbers<[1], [0], [0], [1], [0, 0, 1, 1], [], []>} : vector<32x16xf32>, vector<16x10xf32>, vector<32x10xf32> -> vector<32x10xf32>
    %43 = arith.addf %38, %42 : vector<32x10xf32>
    %c2_33 = arith.constant 2 : index
    %c0_34 = arith.constant 0 : index
    %c0_35 = arith.constant 0 : index
    %44 = vector.load %arg3[%c2_33, %c0_34, %c0_35] : memref<4x32x16xf32, #tpu.memory_space<vmem>>, vector<1x32x16xf32>
    %45 = vector.shape_cast %44 : vector<1x32x16xf32> to vector<32x16xf32>
    %46 = vector.extract_strided_slice %32 {offsets = [0, 2], sizes = [16, 10], strides = [1, 1]} : vector<16x13xf32> to vector<16x10xf32>
    %cst_36 = arith.constant dense<0.000000e+00> : vector<32x10xf32>
    %47 = tpu.matmul %45, %46, %cst_36 {dimension_numbers = #tpu.dot_dimension_numbers<[1], [0], [0], [1], [0, 0, 1, 1], [], []>} : vector<32x16xf32>, vector<16x10xf32>, vector<32x10xf32> -> vector<32x10xf32>
    %48 = arith.addf %43, %47 : vector<32x10xf32>
    %c3_37 = arith.constant 3 : index
    %c0_38 = arith.constant 0 : index
    %c0_39 = arith.constant 0 : index
    %49 = vector.load %arg3[%c3_37, %c0_38, %c0_39] : memref<4x32x16xf32, #tpu.memory_space<vmem>>, vector<1x32x16xf32>
    %50 = vector.shape_cast %49 : vector<1x32x16xf32> to vector<32x16xf32>
    %51 = vector.extract_strided_slice %32 {offsets = [0, 3], sizes = [16, 10], strides = [1, 1]} : vector<16x13xf32> to vector<16x10xf32>
    %cst_40 = arith.constant dense<0.000000e+00> : vector<32x10xf32>
    %52 = tpu.matmul %50, %51, %cst_40 {dimension_numbers = #tpu.dot_dimension_numbers<[1], [0], [0], [1], [0, 0, 1, 1], [], []>} : vector<32x16xf32>, vector<16x10xf32>, vector<32x10xf32> -> vector<32x10xf32>
    %53 = arith.addf %48, %52 : vector<32x10xf32>
    %54 = vector.broadcast %2 : vector<32x1xf32> to vector<32x10xf32>
    %55 = arith.mulf %53, %54 : vector<32x10xf32>
    %56 = vector.broadcast %3 : vector<32x1xf32> to vector<32x10xf32>
    %57 = arith.addf %55, %56 : vector<32x10xf32>
    %cst_41 = arith.constant 0.000000e+00 : f32
    %58 = vector.broadcast %cst_41 : f32 to vector<32x10xf32>
    %59 = arith.maximumf %57, %58 : vector<32x10xf32>
    %c0_42 = arith.constant 0 : index
    %c0_43 = arith.constant 0 : index
    %c0_44 = arith.constant 0 : index
    %60 = vector.load %arg5[%c0_42, %c0_43, %c0_44] : memref<2x32x10xf32, #tpu.memory_space<vmem>>, vector<1x32x10xf32>
    %61 = vector.shape_cast %60 : vector<1x32x10xf32> to vector<32x10xf32>
    %62 = vector.shape_cast %59 : vector<32x10xf32> to vector<1x32x10xf32>
    tpu.vector_store %arg5[%c0_42, %c0_43, %c0_44], %62 {strides = array<i32>} : memref<2x32x10xf32, #tpu.memory_space<vmem>>, vector<1x32x10xf32>,
    %c1_45 = arith.constant 1 : index
    %c0_46 = arith.constant 0 : index
    %c0_47 = arith.constant 0 : index
    %63 = vector.load %arg0[%c1_45, %c0_46, %c0_47] : memref<2x4x16xf32, #tpu.memory_space<vmem>>, vector<1x4x16xf32>
    %64 = vector.shape_cast %63 : vector<1x4x16xf32> to vector<4x16xf32>
    %cst_48 = arith.constant 0.000000e+00 : f32
    %65 = vector.broadcast %cst_48 : f32 to vector<16x13xf32>
    %c0_49 = arith.constant 0 : index
    %c0_50 = arith.constant 0 : index
    %c0_51 = arith.constant 0 : index
    %66 = vector.load %arg1[%c0_49, %c0_50, %c0_51] : memref<4x16x4xf32, #tpu.memory_space<vmem>>, vector<1x16x4xf32>
    %67 = vector.shape_cast %66 : vector<1x16x4xf32> to vector<16x4xf32>
    %68 = vector.extract_strided_slice %64 {offsets = [0, 0], sizes = [4, 13], strides = [1, 1]} : vector<4x16xf32> to vector<4x13xf32>
    %cst_52 = arith.constant dense<0.000000e+00> : vector<16x13xf32>
    %69 = tpu.matmul %67, %68, %cst_52 {dimension_numbers = #tpu.dot_dimension_numbers<[1], [0], [0], [1], [0, 0, 1, 1], [], []>} : vector<16x4xf32>, vector<4x13xf32>, vector<16x13xf32> -> vector<16x13xf32>
    %70 = arith.addf %65, %69 : vector<16x13xf32>
    %c1_53 = arith.constant 1 : index
    %c0_54 = arith.constant 0 : index
    %c0_55 = arith.constant 0 : index
    %71 = vector.load %arg1[%c1_53, %c0_54, %c0_55] : memref<4x16x4xf32, #tpu.memory_space<vmem>>, vector<1x16x4xf32>
    %72 = vector.shape_cast %71 : vector<1x16x4xf32> to vector<16x4xf32>
    %73 = vector.extract_strided_slice %64 {offsets = [0, 1], sizes = [4, 13], strides = [1, 1]} : vector<4x16xf32> to vector<4x13xf32>
    %cst_56 = arith.constant dense<0.000000e+00> : vector<16x13xf32>
    %74 = tpu.matmul %72, %73, %cst_56 {dimension_numbers = #tpu.dot_dimension_numbers<[1], [0], [0], [1], [0, 0, 1, 1], [], []>} : vector<16x4xf32>, vector<4x13xf32>, vector<16x13xf32> -> vector<16x13xf32>
    %75 = arith.addf %70, %74 : vector<16x13xf32>
    %c2_57 = arith.constant 2 : index
    %c0_58 = arith.constant 0 : index
    %c0_59 = arith.constant 0 : index
    %76 = vector.load %arg1[%c2_57, %c0_58, %c0_59] : memref<4x16x4xf32, #tpu.memory_space<vmem>>, vector<1x16x4xf32>
    %77 = vector.shape_cast %76 : vector<1x16x4xf32> to vector<16x4xf32>
    %78 = vector.extract_strided_slice %64 {offsets = [0, 2], sizes = [4, 13], strides = [1, 1]} : vector<4x16xf32> to vector<4x13xf32>
    %cst_60 = arith.constant dense<0.000000e+00> : vector<16x13xf32>
    %79 = tpu.matmul %77, %78, %cst_60 {dimension_numbers = #tpu.dot_dimension_numbers<[1], [0], [0], [1], [0, 0, 1, 1], [], []>} : vector<16x4xf32>, vector<4x13xf32>, vector<16x13xf32> -> vector<16x13xf32>
    %80 = arith.addf %75, %79 : vector<16x13xf32>
    %c3_61 = arith.constant 3 : index
    %c0_62 = arith.constant 0 : index
    %c0_63 = arith.constant 0 : index
    %81 = vector.load %arg1[%c3_61, %c0_62, %c0_63] : memref<4x16x4xf32, #tpu.memory_space<vmem>>, vector<1x16x4xf32>
    %82 = vector.shape_cast %81 : vector<1x16x4xf32> to vector<16x4xf32>
    %83 = vector.extract_strided_slice %64 {offsets = [0, 3], sizes = [4, 13], strides = [1, 1]} : vector<4x16xf32> to vector<4x13xf32>
    %cst_64 = arith.constant dense<0.000000e+00> : vector<16x13xf32>
    %84 = tpu.matmul %82, %83, %cst_64 {dimension_numbers = #tpu.dot_dimension_numbers<[1], [0], [0], [1], [0, 0, 1, 1], [], []>} : vector<16x4xf32>, vector<4x13xf32>, vector<16x13xf32> -> vector<16x13xf32>
    %85 = arith.addf %80, %84 : vector<16x13xf32>
    %86 = vector.broadcast %0 : vector<16x1xf32> to vector<16x13xf32>
    %87 = arith.mulf %85, %86 : vector<16x13xf32>
    %88 = vector.broadcast %1 : vector<16x1xf32> to vector<16x13xf32>
    %89 = arith.addf %87, %88 : vector<16x13xf32>
    %cst_65 = arith.constant 0.000000e+00 : f32
    %90 = vector.broadcast %cst_65 : f32 to vector<16x13xf32>
    %91 = arith.maximumf %89, %90 : vector<16x13xf32>
    %cst_66 = arith.constant 0.000000e+00 : f32
    %92 = vector.broadcast %cst_66 : f32 to vector<32x10xf32>
    %c0_67 = arith.constant 0 : index
    %c0_68 = arith.constant 0 : index
    %c0_69 = arith.constant 0 : index
    %93 = vector.load %arg3[%c0_67, %c0_68, %c0_69] : memref<4x32x16xf32, #tpu.memory_space<vmem>>, vector<1x32x16xf32>
    %94 = vector.shape_cast %93 : vector<1x32x16xf32> to vector<32x16xf32>
    %95 = vector.extract_strided_slice %91 {offsets = [0, 0], sizes = [16, 10], strides = [1, 1]} : vector<16x13xf32> to vector<16x10xf32>
    %cst_70 = arith.constant dense<0.000000e+00> : vector<32x10xf32>
    %96 = tpu.matmul %94, %95, %cst_70 {dimension_numbers = #tpu.dot_dimension_numbers<[1], [0], [0], [1], [0, 0, 1, 1], [], []>} : vector<32x16xf32>, vector<16x10xf32>, vector<32x10xf32> -> vector<32x10xf32>
    %97 = arith.addf %92, %96 : vector<32x10xf32>
    %c1_71 = arith.constant 1 : index
    %c0_72 = arith.constant 0 : index
    %c0_73 = arith.constant 0 : index
    %98 = vector.load %arg3[%c1_71, %c0_72, %c0_73] : memref<4x32x16xf32, #tpu.memory_space<vmem>>, vector<1x32x16xf32>
    %99 = vector.shape_cast %98 : vector<1x32x16xf32> to vector<32x16xf32>
    %100 = vector.extract_strided_slice %91 {offsets = [0, 1], sizes = [16, 10], strides = [1, 1]} : vector<16x13xf32> to vector<16x10xf32>
    %cst_74 = arith.constant dense<0.000000e+00> : vector<32x10xf32>
    %101 = tpu.matmul %99, %100, %cst_74 {dimension_numbers = #tpu.dot_dimension_numbers<[1], [0], [0], [1], [0, 0, 1, 1], [], []>} : vector<32x16xf32>, vector<16x10xf32>, vector<32x10xf32> -> vector<32x10xf32>
    %102 = arith.addf %97, %101 : vector<32x10xf32>
    %c2_75 = arith.constant 2 : index
    %c0_76 = arith.constant 0 : index
    %c0_77 = arith.constant 0 : index
    %103 = vector.load %arg3[%c2_75, %c0_76, %c0_77] : memref<4x32x16xf32, #tpu.memory_space<vmem>>, vector<1x32x16xf32>
    %104 = vector.shape_cast %103 : vector<1x32x16xf32> to vector<32x16xf32>
    %105 = vector.extract_strided_slice %91 {offsets = [0, 2], sizes = [16, 10], strides = [1, 1]} : vector<16x13xf32> to vector<16x10xf32>
    %cst_78 = arith.constant dense<0.000000e+00> : vector<32x10xf32>
    %106 = tpu.matmul %104, %105, %cst_78 {dimension_numbers = #tpu.dot_dimension_numbers<[1], [0], [0], [1], [0, 0, 1, 1], [], []>} : vector<32x16xf32>, vector<16x10xf32>, vector<32x10xf32> -> vector<32x10xf32>
    %107 = arith.addf %102, %106 : vector<32x10xf32>
    %c3_79 = arith.constant 3 : index
    %c0_80 = arith.constant 0 : index
    %c0_81 = arith.constant 0 : index
    %108 = vector.load %arg3[%c3_79, %c0_80, %c0_81] : memref<4x32x16xf32, #tpu.memory_space<vmem>>, vector<1x32x16xf32>
    %109 = vector.shape_cast %108 : vector<1x32x16xf32> to vector<32x16xf32>
    %110 = vector.extract_strided_slice %91 {offsets = [0, 3], sizes = [16, 10], strides = [1, 1]} : vector<16x13xf32> to vector<16x10xf32>
    %cst_82 = arith.constant dense<0.000000e+00> : vector<32x10xf32>
    %111 = tpu.matmul %109, %110, %cst_82 {dimension_numbers = #tpu.dot_dimension_numbers<[1], [0], [0], [1], [0, 0, 1, 1], [], []>} : vector<32x16xf32>, vector<16x10xf32>, vector<32x10xf32> -> vector<32x10xf32>
    %112 = arith.addf %107, %111 : vector<32x10xf32>
    %113 = vector.broadcast %2 : vector<32x1xf32> to vector<32x10xf32>
    %114 = arith.mulf %112, %113 : vector<32x10xf32>
    %115 = vector.broadcast %3 : vector<32x1xf32> to vector<32x10xf32>
    %116 = arith.addf %114, %115 : vector<32x10xf32>
    %cst_83 = arith.constant 0.000000e+00 : f32
    %117 = vector.broadcast %cst_83 : f32 to vector<32x10xf32>
    %118 = arith.maximumf %116, %117 : vector<32x10xf32>
    %c1_84 = arith.constant 1 : index
    %c0_85 = arith.constant 0 : index
    %c0_86 = arith.constant 0 : index
    %119 = vector.load %arg5[%c1_84, %c0_85, %c0_86] : memref<2x32x10xf32, #tpu.memory_space<vmem>>, vector<1x32x10xf32>
    %120 = vector.shape_cast %119 : vector<1x32x10xf32> to vector<32x10xf32>
    %121 = vector.shape_cast %118 : vector<32x10xf32> to vector<1x32x10xf32>
    tpu.vector_store %arg5[%c1_84, %c0_85, %c0_86], %121 {strides = array<i32>} : memref<2x32x10xf32, #tpu.memory_space<vmem>>, vector<1x32x10xf32>,
    return
  }
}

module attributes {stable_mosaic.version = 11 : i64} {
  func.func @lstm_fc_kernel(%arg0: memref<80x32xf32, #tpu.memory_space<vmem>>, %arg1: memref<32x256xf32, #tpu.memory_space<vmem>>, %arg2: memref<64x256xf32, #tpu.memory_space<vmem>>, %arg3: memref<1x256xf32, #tpu.memory_space<vmem>>, %arg4: memref<32x256xf32, #tpu.memory_space<vmem>>, %arg5: memref<1x256xf32, #tpu.memory_space<vmem>>, %arg6: memref<64x32xf32, #tpu.memory_space<vmem>>, %arg7: memref<64x32xf32, #tpu.memory_space<vmem>>, %arg8: memref<1x32xf32, #tpu.memory_space<vmem>>, %arg9: memref<32x5xf32, #tpu.memory_space<vmem>>, %arg10: memref<1x5xf32, #tpu.memory_space<vmem>>, %arg11: memref<2x5xf32, #tpu.memory_space<vmem>>) attributes {dimension_semantics = [], scalar_prefetch = 0 : i64, scratch_operands = 0 : i64, tpu.core_type = #tpu.core_type<tc>} {
    %c0 = arith.constant 0 : index
    %c0_0 = arith.constant 0 : index
    %0 = vector.load %arg0[%c0, %c0_0] : memref<80x32xf32, #tpu.memory_space<vmem>>, vector<80x32xf32>
    %c0_1 = arith.constant 0 : index
    %c0_2 = arith.constant 0 : index
    %1 = vector.load %arg1[%c0_1, %c0_2] : memref<32x256xf32, #tpu.memory_space<vmem>>, vector<32x256xf32>
    %cst = arith.constant dense<0.000000e+00> : vector<80x256xf32>
    %2 = tpu.matmul %0, %1, %cst {dimension_numbers = #tpu.dot_dimension_numbers<[1], [0], [0], [1], [0, 0, 1, 1], [], []>} : vector<80x32xf32>, vector<32x256xf32>, vector<80x256xf32> -> vector<80x256xf32>
    %c0_3 = arith.constant 0 : index
    %c0_4 = arith.constant 0 : index
    %3 = vector.load %arg3[%c0_3, %c0_4] : memref<1x256xf32, #tpu.memory_space<vmem>>, vector<1x256xf32>
    %4 = vector.broadcast %3 : vector<1x256xf32> to vector<80x256xf32>
    %5 = arith.addf %2, %4 : vector<80x256xf32>
    %c0_5 = arith.constant 0 : index
    %c0_6 = arith.constant 0 : index
    %6 = vector.load %arg2[%c0_5, %c0_6] : memref<64x256xf32, #tpu.memory_space<vmem>>, vector<64x256xf32>
    %cst_7 = arith.constant 0.000000e+00 : f32
    %7 = vector.broadcast %cst_7 : f32 to vector<8x64xf32>
    %cst_8 = arith.constant 0.000000e+00 : f32
    %8 = vector.broadcast %cst_8 : f32 to vector<8x64xf32>
    %9 = vector.extract_strided_slice %5 {offsets = [0, 0], sizes = [8, 256], strides = [1, 1]} : vector<80x256xf32> to vector<8x256xf32>
    %cst_9 = arith.constant dense<0.000000e+00> : vector<8x256xf32>
    %10 = tpu.matmul %7, %6, %cst_9 {dimension_numbers = #tpu.dot_dimension_numbers<[1], [0], [0], [1], [0, 0, 1, 1], [], []>} : vector<8x64xf32>, vector<64x256xf32>, vector<8x256xf32> -> vector<8x256xf32>
    %11 = arith.addf %9, %10 : vector<8x256xf32>
    %12 = arith.negf %11 : vector<8x256xf32>
    %13 = math.exp %12 : vector<8x256xf32>
    %cst_10 = arith.constant 1.000000e+00 : f32
    %14 = vector.broadcast %cst_10 : f32 to vector<8x256xf32>
    %15 = arith.addf %14, %13 : vector<8x256xf32>
    %16 = arith.divf %14, %15 : vector<8x256xf32>
    %17 = math.tanh %11 : vector<8x256xf32>
    %18 = vector.extract_strided_slice %16 {offsets = [0, 0], sizes = [8, 64], strides = [1, 1]} : vector<8x256xf32> to vector<8x64xf32>
    %19 = vector.extract_strided_slice %16 {offsets = [0, 64], sizes = [8, 64], strides = [1, 1]} : vector<8x256xf32> to vector<8x64xf32>
    %20 = vector.extract_strided_slice %17 {offsets = [0, 128], sizes = [8, 64], strides = [1, 1]} : vector<8x256xf32> to vector<8x64xf32>
    %21 = vector.extract_strided_slice %16 {offsets = [0, 192], sizes = [8, 64], strides = [1, 1]} : vector<8x256xf32> to vector<8x64xf32>
    %22 = arith.mulf %19, %8 : vector<8x64xf32>
    %23 = arith.mulf %18, %20 : vector<8x64xf32>
    %24 = arith.addf %22, %23 : vector<8x64xf32>
    %25 = math.tanh %24 : vector<8x64xf32>
    %26 = arith.mulf %21, %25 : vector<8x64xf32>
    %27 = vector.extract_strided_slice %5 {offsets = [8, 0], sizes = [8, 256], strides = [1, 1]} : vector<80x256xf32> to vector<8x256xf32>
    %cst_11 = arith.constant dense<0.000000e+00> : vector<8x256xf32>
    %28 = tpu.matmul %26, %6, %cst_11 {dimension_numbers = #tpu.dot_dimension_numbers<[1], [0], [0], [1], [0, 0, 1, 1], [], []>} : vector<8x64xf32>, vector<64x256xf32>, vector<8x256xf32> -> vector<8x256xf32>
    %29 = arith.addf %27, %28 : vector<8x256xf32>
    %30 = arith.negf %29 : vector<8x256xf32>
    %31 = math.exp %30 : vector<8x256xf32>
    %cst_12 = arith.constant 1.000000e+00 : f32
    %32 = vector.broadcast %cst_12 : f32 to vector<8x256xf32>
    %33 = arith.addf %32, %31 : vector<8x256xf32>
    %34 = arith.divf %32, %33 : vector<8x256xf32>
    %35 = math.tanh %29 : vector<8x256xf32>
    %36 = vector.extract_strided_slice %34 {offsets = [0, 0], sizes = [8, 64], strides = [1, 1]} : vector<8x256xf32> to vector<8x64xf32>
    %37 = vector.extract_strided_slice %34 {offsets = [0, 64], sizes = [8, 64], strides = [1, 1]} : vector<8x256xf32> to vector<8x64xf32>
    %38 = vector.extract_strided_slice %35 {offsets = [0, 128], sizes = [8, 64], strides = [1, 1]} : vector<8x256xf32> to vector<8x64xf32>
    %39 = vector.extract_strided_slice %34 {offsets = [0, 192], sizes = [8, 64], strides = [1, 1]} : vector<8x256xf32> to vector<8x64xf32>
    %40 = arith.mulf %37, %24 : vector<8x64xf32>
    %41 = arith.mulf %36, %38 : vector<8x64xf32>
    %42 = arith.addf %40, %41 : vector<8x64xf32>
    %43 = math.tanh %42 : vector<8x64xf32>
    %44 = arith.mulf %39, %43 : vector<8x64xf32>
    %45 = vector.extract_strided_slice %5 {offsets = [16, 0], sizes = [8, 256], strides = [1, 1]} : vector<80x256xf32> to vector<8x256xf32>
    %cst_13 = arith.constant dense<0.000000e+00> : vector<8x256xf32>
    %46 = tpu.matmul %44, %6, %cst_13 {dimension_numbers = #tpu.dot_dimension_numbers<[1], [0], [0], [1], [0, 0, 1, 1], [], []>} : vector<8x64xf32>, vector<64x256xf32>, vector<8x256xf32> -> vector<8x256xf32>
    %47 = arith.addf %45, %46 : vector<8x256xf32>
    %48 = arith.negf %47 : vector<8x256xf32>
    %49 = math.exp %48 : vector<8x256xf32>
    %cst_14 = arith.constant 1.000000e+00 : f32
    %50 = vector.broadcast %cst_14 : f32 to vector<8x256xf32>
    %51 = arith.addf %50, %49 : vector<8x256xf32>
    %52 = arith.divf %50, %51 : vector<8x256xf32>
    %53 = math.tanh %47 : vector<8x256xf32>
    %54 = vector.extract_strided_slice %52 {offsets = [0, 0], sizes = [8, 64], strides = [1, 1]} : vector<8x256xf32> to vector<8x64xf32>
    %55 = vector.extract_strided_slice %52 {offsets = [0, 64], sizes = [8, 64], strides = [1, 1]} : vector<8x256xf32> to vector<8x64xf32>
    %56 = vector.extract_strided_slice %53 {offsets = [0, 128], sizes = [8, 64], strides = [1, 1]} : vector<8x256xf32> to vector<8x64xf32>
    %57 = vector.extract_strided_slice %52 {offsets = [0, 192], sizes = [8, 64], strides = [1, 1]} : vector<8x256xf32> to vector<8x64xf32>
    %58 = arith.mulf %55, %42 : vector<8x64xf32>
    %59 = arith.mulf %54, %56 : vector<8x64xf32>
    %60 = arith.addf %58, %59 : vector<8x64xf32>
    %61 = math.tanh %60 : vector<8x64xf32>
    %62 = arith.mulf %57, %61 : vector<8x64xf32>
    %63 = vector.extract_strided_slice %5 {offsets = [24, 0], sizes = [8, 256], strides = [1, 1]} : vector<80x256xf32> to vector<8x256xf32>
    %cst_15 = arith.constant dense<0.000000e+00> : vector<8x256xf32>
    %64 = tpu.matmul %62, %6, %cst_15 {dimension_numbers = #tpu.dot_dimension_numbers<[1], [0], [0], [1], [0, 0, 1, 1], [], []>} : vector<8x64xf32>, vector<64x256xf32>, vector<8x256xf32> -> vector<8x256xf32>
    %65 = arith.addf %63, %64 : vector<8x256xf32>
    %66 = arith.negf %65 : vector<8x256xf32>
    %67 = math.exp %66 : vector<8x256xf32>
    %cst_16 = arith.constant 1.000000e+00 : f32
    %68 = vector.broadcast %cst_16 : f32 to vector<8x256xf32>
    %69 = arith.addf %68, %67 : vector<8x256xf32>
    %70 = arith.divf %68, %69 : vector<8x256xf32>
    %71 = math.tanh %65 : vector<8x256xf32>
    %72 = vector.extract_strided_slice %70 {offsets = [0, 0], sizes = [8, 64], strides = [1, 1]} : vector<8x256xf32> to vector<8x64xf32>
    %73 = vector.extract_strided_slice %70 {offsets = [0, 64], sizes = [8, 64], strides = [1, 1]} : vector<8x256xf32> to vector<8x64xf32>
    %74 = vector.extract_strided_slice %71 {offsets = [0, 128], sizes = [8, 64], strides = [1, 1]} : vector<8x256xf32> to vector<8x64xf32>
    %75 = vector.extract_strided_slice %70 {offsets = [0, 192], sizes = [8, 64], strides = [1, 1]} : vector<8x256xf32> to vector<8x64xf32>
    %76 = arith.mulf %73, %60 : vector<8x64xf32>
    %77 = arith.mulf %72, %74 : vector<8x64xf32>
    %78 = arith.addf %76, %77 : vector<8x64xf32>
    %79 = math.tanh %78 : vector<8x64xf32>
    %80 = arith.mulf %75, %79 : vector<8x64xf32>
    %81 = vector.extract_strided_slice %5 {offsets = [32, 0], sizes = [8, 256], strides = [1, 1]} : vector<80x256xf32> to vector<8x256xf32>
    %cst_17 = arith.constant dense<0.000000e+00> : vector<8x256xf32>
    %82 = tpu.matmul %80, %6, %cst_17 {dimension_numbers = #tpu.dot_dimension_numbers<[1], [0], [0], [1], [0, 0, 1, 1], [], []>} : vector<8x64xf32>, vector<64x256xf32>, vector<8x256xf32> -> vector<8x256xf32>
    %83 = arith.addf %81, %82 : vector<8x256xf32>
    %84 = arith.negf %83 : vector<8x256xf32>
    %85 = math.exp %84 : vector<8x256xf32>
    %cst_18 = arith.constant 1.000000e+00 : f32
    %86 = vector.broadcast %cst_18 : f32 to vector<8x256xf32>
    %87 = arith.addf %86, %85 : vector<8x256xf32>
    %88 = arith.divf %86, %87 : vector<8x256xf32>
    %89 = math.tanh %83 : vector<8x256xf32>
    %90 = vector.extract_strided_slice %88 {offsets = [0, 0], sizes = [8, 64], strides = [1, 1]} : vector<8x256xf32> to vector<8x64xf32>
    %91 = vector.extract_strided_slice %88 {offsets = [0, 64], sizes = [8, 64], strides = [1, 1]} : vector<8x256xf32> to vector<8x64xf32>
    %92 = vector.extract_strided_slice %89 {offsets = [0, 128], sizes = [8, 64], strides = [1, 1]} : vector<8x256xf32> to vector<8x64xf32>
    %93 = vector.extract_strided_slice %88 {offsets = [0, 192], sizes = [8, 64], strides = [1, 1]} : vector<8x256xf32> to vector<8x64xf32>
    %94 = arith.mulf %91, %78 : vector<8x64xf32>
    %95 = arith.mulf %90, %92 : vector<8x64xf32>
    %96 = arith.addf %94, %95 : vector<8x64xf32>
    %97 = math.tanh %96 : vector<8x64xf32>
    %98 = arith.mulf %93, %97 : vector<8x64xf32>
    %99 = vector.extract_strided_slice %5 {offsets = [40, 0], sizes = [8, 256], strides = [1, 1]} : vector<80x256xf32> to vector<8x256xf32>
    %cst_19 = arith.constant dense<0.000000e+00> : vector<8x256xf32>
    %100 = tpu.matmul %98, %6, %cst_19 {dimension_numbers = #tpu.dot_dimension_numbers<[1], [0], [0], [1], [0, 0, 1, 1], [], []>} : vector<8x64xf32>, vector<64x256xf32>, vector<8x256xf32> -> vector<8x256xf32>
    %101 = arith.addf %99, %100 : vector<8x256xf32>
    %102 = arith.negf %101 : vector<8x256xf32>
    %103 = math.exp %102 : vector<8x256xf32>
    %cst_20 = arith.constant 1.000000e+00 : f32
    %104 = vector.broadcast %cst_20 : f32 to vector<8x256xf32>
    %105 = arith.addf %104, %103 : vector<8x256xf32>
    %106 = arith.divf %104, %105 : vector<8x256xf32>
    %107 = math.tanh %101 : vector<8x256xf32>
    %108 = vector.extract_strided_slice %106 {offsets = [0, 0], sizes = [8, 64], strides = [1, 1]} : vector<8x256xf32> to vector<8x64xf32>
    %109 = vector.extract_strided_slice %106 {offsets = [0, 64], sizes = [8, 64], strides = [1, 1]} : vector<8x256xf32> to vector<8x64xf32>
    %110 = vector.extract_strided_slice %107 {offsets = [0, 128], sizes = [8, 64], strides = [1, 1]} : vector<8x256xf32> to vector<8x64xf32>
    %111 = vector.extract_strided_slice %106 {offsets = [0, 192], sizes = [8, 64], strides = [1, 1]} : vector<8x256xf32> to vector<8x64xf32>
    %112 = arith.mulf %109, %96 : vector<8x64xf32>
    %113 = arith.mulf %108, %110 : vector<8x64xf32>
    %114 = arith.addf %112, %113 : vector<8x64xf32>
    %115 = math.tanh %114 : vector<8x64xf32>
    %116 = arith.mulf %111, %115 : vector<8x64xf32>
    %117 = vector.extract_strided_slice %5 {offsets = [48, 0], sizes = [8, 256], strides = [1, 1]} : vector<80x256xf32> to vector<8x256xf32>
    %cst_21 = arith.constant dense<0.000000e+00> : vector<8x256xf32>
    %118 = tpu.matmul %116, %6, %cst_21 {dimension_numbers = #tpu.dot_dimension_numbers<[1], [0], [0], [1], [0, 0, 1, 1], [], []>} : vector<8x64xf32>, vector<64x256xf32>, vector<8x256xf32> -> vector<8x256xf32>
    %119 = arith.addf %117, %118 : vector<8x256xf32>
    %120 = arith.negf %119 : vector<8x256xf32>
    %121 = math.exp %120 : vector<8x256xf32>
    %cst_22 = arith.constant 1.000000e+00 : f32
    %122 = vector.broadcast %cst_22 : f32 to vector<8x256xf32>
    %123 = arith.addf %122, %121 : vector<8x256xf32>
    %124 = arith.divf %122, %123 : vector<8x256xf32>
    %125 = math.tanh %119 : vector<8x256xf32>
    %126 = vector.extract_strided_slice %124 {offsets = [0, 0], sizes = [8, 64], strides = [1, 1]} : vector<8x256xf32> to vector<8x64xf32>
    %127 = vector.extract_strided_slice %124 {offsets = [0, 64], sizes = [8, 64], strides = [1, 1]} : vector<8x256xf32> to vector<8x64xf32>
    %128 = vector.extract_strided_slice %125 {offsets = [0, 128], sizes = [8, 64], strides = [1, 1]} : vector<8x256xf32> to vector<8x64xf32>
    %129 = vector.extract_strided_slice %124 {offsets = [0, 192], sizes = [8, 64], strides = [1, 1]} : vector<8x256xf32> to vector<8x64xf32>
    %130 = arith.mulf %127, %114 : vector<8x64xf32>
    %131 = arith.mulf %126, %128 : vector<8x64xf32>
    %132 = arith.addf %130, %131 : vector<8x64xf32>
    %133 = math.tanh %132 : vector<8x64xf32>
    %134 = arith.mulf %129, %133 : vector<8x64xf32>
    %135 = vector.extract_strided_slice %5 {offsets = [56, 0], sizes = [8, 256], strides = [1, 1]} : vector<80x256xf32> to vector<8x256xf32>
    %cst_23 = arith.constant dense<0.000000e+00> : vector<8x256xf32>
    %136 = tpu.matmul %134, %6, %cst_23 {dimension_numbers = #tpu.dot_dimension_numbers<[1], [0], [0], [1], [0, 0, 1, 1], [], []>} : vector<8x64xf32>, vector<64x256xf32>, vector<8x256xf32> -> vector<8x256xf32>
    %137 = arith.addf %135, %136 : vector<8x256xf32>
    %138 = arith.negf %137 : vector<8x256xf32>
    %139 = math.exp %138 : vector<8x256xf32>
    %cst_24 = arith.constant 1.000000e+00 : f32
    %140 = vector.broadcast %cst_24 : f32 to vector<8x256xf32>
    %141 = arith.addf %140, %139 : vector<8x256xf32>
    %142 = arith.divf %140, %141 : vector<8x256xf32>
    %143 = math.tanh %137 : vector<8x256xf32>
    %144 = vector.extract_strided_slice %142 {offsets = [0, 0], sizes = [8, 64], strides = [1, 1]} : vector<8x256xf32> to vector<8x64xf32>
    %145 = vector.extract_strided_slice %142 {offsets = [0, 64], sizes = [8, 64], strides = [1, 1]} : vector<8x256xf32> to vector<8x64xf32>
    %146 = vector.extract_strided_slice %143 {offsets = [0, 128], sizes = [8, 64], strides = [1, 1]} : vector<8x256xf32> to vector<8x64xf32>
    %147 = vector.extract_strided_slice %142 {offsets = [0, 192], sizes = [8, 64], strides = [1, 1]} : vector<8x256xf32> to vector<8x64xf32>
    %148 = arith.mulf %145, %132 : vector<8x64xf32>
    %149 = arith.mulf %144, %146 : vector<8x64xf32>
    %150 = arith.addf %148, %149 : vector<8x64xf32>
    %151 = math.tanh %150 : vector<8x64xf32>
    %152 = arith.mulf %147, %151 : vector<8x64xf32>
    %153 = vector.extract_strided_slice %5 {offsets = [64, 0], sizes = [8, 256], strides = [1, 1]} : vector<80x256xf32> to vector<8x256xf32>
    %cst_25 = arith.constant dense<0.000000e+00> : vector<8x256xf32>
    %154 = tpu.matmul %152, %6, %cst_25 {dimension_numbers = #tpu.dot_dimension_numbers<[1], [0], [0], [1], [0, 0, 1, 1], [], []>} : vector<8x64xf32>, vector<64x256xf32>, vector<8x256xf32> -> vector<8x256xf32>
    %155 = arith.addf %153, %154 : vector<8x256xf32>
    %156 = arith.negf %155 : vector<8x256xf32>
    %157 = math.exp %156 : vector<8x256xf32>
    %cst_26 = arith.constant 1.000000e+00 : f32
    %158 = vector.broadcast %cst_26 : f32 to vector<8x256xf32>
    %159 = arith.addf %158, %157 : vector<8x256xf32>
    %160 = arith.divf %158, %159 : vector<8x256xf32>
    %161 = math.tanh %155 : vector<8x256xf32>
    %162 = vector.extract_strided_slice %160 {offsets = [0, 0], sizes = [8, 64], strides = [1, 1]} : vector<8x256xf32> to vector<8x64xf32>
    %163 = vector.extract_strided_slice %160 {offsets = [0, 64], sizes = [8, 64], strides = [1, 1]} : vector<8x256xf32> to vector<8x64xf32>
    %164 = vector.extract_strided_slice %161 {offsets = [0, 128], sizes = [8, 64], strides = [1, 1]} : vector<8x256xf32> to vector<8x64xf32>
    %165 = vector.extract_strided_slice %160 {offsets = [0, 192], sizes = [8, 64], strides = [1, 1]} : vector<8x256xf32> to vector<8x64xf32>
    %166 = arith.mulf %163, %150 : vector<8x64xf32>
    %167 = arith.mulf %162, %164 : vector<8x64xf32>
    %168 = arith.addf %166, %167 : vector<8x64xf32>
    %169 = math.tanh %168 : vector<8x64xf32>
    %170 = arith.mulf %165, %169 : vector<8x64xf32>
    %171 = vector.extract_strided_slice %5 {offsets = [72, 0], sizes = [8, 256], strides = [1, 1]} : vector<80x256xf32> to vector<8x256xf32>
    %cst_27 = arith.constant dense<0.000000e+00> : vector<8x256xf32>
    %172 = tpu.matmul %170, %6, %cst_27 {dimension_numbers = #tpu.dot_dimension_numbers<[1], [0], [0], [1], [0, 0, 1, 1], [], []>} : vector<8x64xf32>, vector<64x256xf32>, vector<8x256xf32> -> vector<8x256xf32>
    %173 = arith.addf %171, %172 : vector<8x256xf32>
    %174 = arith.negf %173 : vector<8x256xf32>
    %175 = math.exp %174 : vector<8x256xf32>
    %cst_28 = arith.constant 1.000000e+00 : f32
    %176 = vector.broadcast %cst_28 : f32 to vector<8x256xf32>
    %177 = arith.addf %176, %175 : vector<8x256xf32>
    %178 = arith.divf %176, %177 : vector<8x256xf32>
    %179 = math.tanh %173 : vector<8x256xf32>
    %180 = vector.extract_strided_slice %178 {offsets = [0, 0], sizes = [8, 64], strides = [1, 1]} : vector<8x256xf32> to vector<8x64xf32>
    %181 = vector.extract_strided_slice %178 {offsets = [0, 64], sizes = [8, 64], strides = [1, 1]} : vector<8x256xf32> to vector<8x64xf32>
    %182 = vector.extract_strided_slice %179 {offsets = [0, 128], sizes = [8, 64], strides = [1, 1]} : vector<8x256xf32> to vector<8x64xf32>
    %183 = vector.extract_strided_slice %178 {offsets = [0, 192], sizes = [8, 64], strides = [1, 1]} : vector<8x256xf32> to vector<8x64xf32>
    %184 = arith.mulf %181, %168 : vector<8x64xf32>
    %185 = arith.mulf %180, %182 : vector<8x64xf32>
    %186 = arith.addf %184, %185 : vector<8x64xf32>
    %187 = math.tanh %186 : vector<8x64xf32>
    %188 = arith.mulf %183, %187 : vector<8x64xf32>
    %189 = vector.extract_strided_slice %0 {offsets = [72, 0], sizes = [8, 32], strides = [1, 1]} : vector<80x32xf32> to vector<8x32xf32>
    %c0_29 = arith.constant 0 : index
    %c0_30 = arith.constant 0 : index
    %190 = vector.load %arg4[%c0_29, %c0_30] : memref<32x256xf32, #tpu.memory_space<vmem>>, vector<32x256xf32>
    %cst_31 = arith.constant dense<0.000000e+00> : vector<8x256xf32>
    %191 = tpu.matmul %189, %190, %cst_31 {dimension_numbers = #tpu.dot_dimension_numbers<[1], [0], [0], [1], [0, 0, 1, 1], [], []>} : vector<8x32xf32>, vector<32x256xf32>, vector<8x256xf32> -> vector<8x256xf32>
    %c0_32 = arith.constant 0 : index
    %c0_33 = arith.constant 0 : index
    %192 = vector.load %arg5[%c0_32, %c0_33] : memref<1x256xf32, #tpu.memory_space<vmem>>, vector<1x256xf32>
    %193 = vector.broadcast %192 : vector<1x256xf32> to vector<8x256xf32>
    %194 = arith.addf %191, %193 : vector<8x256xf32>
    %195 = arith.negf %194 : vector<8x256xf32>
    %196 = math.exp %195 : vector<8x256xf32>
    %cst_34 = arith.constant 1.000000e+00 : f32
    %197 = vector.broadcast %cst_34 : f32 to vector<8x256xf32>
    %198 = arith.addf %197, %196 : vector<8x256xf32>
    %199 = arith.divf %197, %198 : vector<8x256xf32>
    %200 = math.tanh %194 : vector<8x256xf32>
    %201 = vector.extract_strided_slice %199 {offsets = [0, 0], sizes = [8, 64], strides = [1, 1]} : vector<8x256xf32> to vector<8x64xf32>
    %202 = vector.extract_strided_slice %200 {offsets = [0, 128], sizes = [8, 64], strides = [1, 1]} : vector<8x256xf32> to vector<8x64xf32>
    %203 = arith.mulf %201, %202 : vector<8x64xf32>
    %204 = vector.extract_strided_slice %199 {offsets = [0, 192], sizes = [8, 64], strides = [1, 1]} : vector<8x256xf32> to vector<8x64xf32>
    %205 = math.tanh %203 : vector<8x64xf32>
    %206 = arith.mulf %204, %205 : vector<8x64xf32>
    %c0_35 = arith.constant 0 : index
    %c0_36 = arith.constant 0 : index
    %207 = vector.load %arg6[%c0_35, %c0_36] : memref<64x32xf32, #tpu.memory_space<vmem>>, vector<64x32xf32>
    %cst_37 = arith.constant dense<0.000000e+00> : vector<8x32xf32>
    %208 = tpu.matmul %188, %207, %cst_37 {dimension_numbers = #tpu.dot_dimension_numbers<[1], [0], [0], [1], [0, 0, 1, 1], [], []>} : vector<8x64xf32>, vector<64x32xf32>, vector<8x32xf32> -> vector<8x32xf32>
    %c0_38 = arith.constant 0 : index
    %c0_39 = arith.constant 0 : index
    %209 = vector.load %arg7[%c0_38, %c0_39] : memref<64x32xf32, #tpu.memory_space<vmem>>, vector<64x32xf32>
    %cst_40 = arith.constant dense<0.000000e+00> : vector<8x32xf32>
    %210 = tpu.matmul %206, %209, %cst_40 {dimension_numbers = #tpu.dot_dimension_numbers<[1], [0], [0], [1], [0, 0, 1, 1], [], []>} : vector<8x64xf32>, vector<64x32xf32>, vector<8x32xf32> -> vector<8x32xf32>
    %211 = arith.addf %208, %210 : vector<8x32xf32>
    %c0_41 = arith.constant 0 : index
    %c0_42 = arith.constant 0 : index
    %212 = vector.load %arg8[%c0_41, %c0_42] : memref<1x32xf32, #tpu.memory_space<vmem>>, vector<1x32xf32>
    %213 = vector.broadcast %212 : vector<1x32xf32> to vector<8x32xf32>
    %214 = arith.addf %211, %213 : vector<8x32xf32>
    %cst_43 = arith.constant 0.000000e+00 : f32
    %215 = vector.broadcast %cst_43 : f32 to vector<8x32xf32>
    %216 = arith.maximumf %214, %215 : vector<8x32xf32>
    %c0_44 = arith.constant 0 : index
    %c0_45 = arith.constant 0 : index
    %217 = vector.load %arg9[%c0_44, %c0_45] : memref<32x5xf32, #tpu.memory_space<vmem>>, vector<32x5xf32>
    %cst_46 = arith.constant dense<0.000000e+00> : vector<8x5xf32>
    %218 = tpu.matmul %216, %217, %cst_46 {dimension_numbers = #tpu.dot_dimension_numbers<[1], [0], [0], [1], [0, 0, 1, 1], [], []>} : vector<8x32xf32>, vector<32x5xf32>, vector<8x5xf32> -> vector<8x5xf32>
    %c0_47 = arith.constant 0 : index
    %c0_48 = arith.constant 0 : index
    %219 = vector.load %arg10[%c0_47, %c0_48] : memref<1x5xf32, #tpu.memory_space<vmem>>, vector<1x5xf32>
    %220 = vector.broadcast %219 : vector<1x5xf32> to vector<8x5xf32>
    %221 = arith.addf %218, %220 : vector<8x5xf32>
    %222 = vector.extract_strided_slice %221 {offsets = [0, 0], sizes = [2, 5], strides = [1, 1]} : vector<8x5xf32> to vector<2x5xf32>
    %c0_49 = arith.constant 0 : index
    %c0_50 = arith.constant 0 : index
    %223 = vector.load %arg11[%c0_49, %c0_50] : memref<2x5xf32, #tpu.memory_space<vmem>>, vector<2x5xf32>
    tpu.vector_store %arg11[%c0_49, %c0_50], %222 {strides = array<i32>} : memref<2x5xf32, #tpu.memory_space<vmem>>, vector<2x5xf32>,
    return
  }
}

</mosaic_0001>

<llo_original>
// kernel: crnn_forward.2
$region0: #{crnn_forward.2}
  #allocation0 [shape = 'u32[]', space=smem, size = 0x4, offset = 0x4, fixed_abs, tag = 'smem constant byte address 0x4 - core index']
  #allocation1 [shape = 'u32[144,128]{1,0:T(1,128)}', space=vmem, size = 0x12000, scoped, tag = 'internal scratch']
  %s0 = inlined_call_operand.vmem [shape: f32[2,4,16], index: 0, kind: input, shape index: {}]
  %s1 = inlined_call_operand.vmem [shape: f32[4,16,4], index: 1, kind: input, shape index: {}]
  %s2 = inlined_call_operand.vmem [shape: f32[16,2], index: 2, kind: input, shape index: {}]
  %s3 = inlined_call_operand.vmem [shape: f32[4,32,16], index: 3, kind: input, shape index: {}]
  %s4 = inlined_call_operand.vmem [shape: f32[32,2], index: 4, kind: input, shape index: {}]
  %s5 = inlined_call_operand.vmem [shape: f32[2,32,10], index: 5, kind: output, shape index: {}]
  %s6 = sld [smem:[#allocation0]]
  $region30: #{crnn_forward.2} parent=0
    _
  %s8 = ssub.s32 1, %s6
  %s9 = scalar_select 0, %s8, %s6
  // Predicated region
  $region2: #{crnn_forward.2} parent=0 // pred_check
    _
  $region3: #{crnn_forward.2} parent=0 // pred_check_branch
    %11 = sbr.rel (0) target = $region5
  $region4: #{crnn_forward.2} parent=0 // pred_region
    _
  $region5: #{crnn_forward.2} parent=0 // pred_fallthru
    _
  // Predicated region
  $region6: #{crnn_forward.2} parent=0 // pred_check
    _
  $region7: #{crnn_forward.2} parent=0 // pred_check_branch
    %13 = sbr.rel (0) target = $region9
  $region8: #{crnn_forward.2} parent=0 // pred_region
    _
  $region9: #{crnn_forward.2} parent=0 // pred_fallthru
    _
  // Predicated region
  $region10: #{crnn_forward.2} parent=0 // pred_check
    _
  $region11: #{crnn_forward.2} parent=0 // pred_check_branch
    %15 = sbr.rel (0) target = $region13
  $region12: #{crnn_forward.2} parent=0 // pred_region
    _
  $region13: #{crnn_forward.2} parent=0 // pred_fallthru
    _
  // Predicated region
  $region14: #{crnn_forward.2} parent=0 // pred_check
    _
  $region15: #{crnn_forward.2} parent=0 // pred_check_branch
    %17 = sbr.rel (0) target = $region17
  $region16: #{crnn_forward.2} parent=0 // pred_region
    _
  $region17: #{crnn_forward.2} parent=0 // pred_fallthru
    _
  // Predicated region
  $region18: #{crnn_forward.2} parent=0 // pred_check
    _
  $region19: #{crnn_forward.2} parent=0 // pred_check_branch
    %19 = sbr.rel (0) target = $region21
  $region20: #{crnn_forward.2} parent=0 // pred_region
    _
  $region21: #{crnn_forward.2} parent=0 // pred_fallthru
    _
  %v20 = vld [vmem:[%s2] sm:$0xff]
  %v21 = vld [vmem:[%s2 + $0x8] sm:$0xff]
  %v22 = vld [vmem:[%s4] sm:$0xff]
  %v23 = vld [vmem:[%s4 + $0x8] sm:$0xff]
  %v24 = vld [vmem:[%s4 + $0x10] sm:$0xff]
  %v25 = vld [vmem:[%s4 + $0x18] sm:$0xff]
  %v26 = vld [vmem:[%s0] sm:$0xf]
  %v27 = vld [vmem:[%s1] sm:$0xff]
  %v28 = vld [vmem:[%s1 + $0x8] sm:$0xff]
  %s29 = scalar_lea.vmem %s1, 16
  %v30 = vld [vmem:[%s29] sm:$0xff]
  %v31 = vld [vmem:[%s29 + $0x8] sm:$0xff]
  %33 = vrot.lane.b32.xlu0 %v26, 127
  %v34 = vpop.permute.xlu0 %33
  %vm35 = vcmask 31744
  %v37 = vsel %vm35, %v30, 0
  %v40 = vsel %vm35, %v31, 0
  %vm42 = vcmask 1043456
  %v43 = vsel %vm42, %v34, 0
  %45 = vmatprep.subr.mxu0 0.0
  %46 = vmatpush1.msra.mxu0 %v43
  %47 = vmatprep.subr.mxu0 0.0
  %48 = vmatpush1.msra.mxu0 0.0
  %49 = vmatprep.subr.mxu0 0.0
  %50 = vmatpush1.msra.mxu0 0.0
  %51 = vmatprep.subr.mxu0 0.0
  %52 = vmatpush1.msra.mxu0 0.0
  %53 = vmatprep.subr.mxu0 0.0
  %54 = vmatpush1.msra.mxu0 0.0
  %55 = vmatprep.subr.mxu0 0.0
  %56 = vmatpush1.msra.mxu0 0.0
  %57 = vmatprep.subr.mxu0 0.0
  %58 = vmatpush1.msra.mxu0 0.0
  %59 = vmatprep.subr.mxu0 0.0
  %60 = vmatpush1.msra.mxu0 0.0
  %61 = vmatprep.subr.mxu0 0.0
  %62 = vmatpush1.msra.mxu0 0.0
  %63 = vmatprep.subr.mxu0 0.0
  %64 = vmatpush1.msra.mxu0 0.0
  %65 = vmatprep.subr.mxu0 0.0
  %66 = vmatpush1.msra.mxu0 0.0
  %67 = vmatprep.subr.mxu0 0.0
  %68 = vmatpush1.msra.mxu0 0.0
  %69 = vmatprep.subr.mxu0 0.0
  %70 = vmatpush1.msra.mxu0 0.0
  %71 = vmatprep.subr.mxu0 0.0
  %72 = vmatpush1.msra.mxu0 0.0
  %73 = vmatprep.subr.mxu0 0.0
  %74 = vmatpush1.msra.mxu0 0.0
  %75 = vmatprep.subr.mxu0 0.0
  %76 = vmatpush1.msra.mxu0 0.0
  %77 = vmatprep.subr.mxu0 0.0
  %78 = vmatpush1.msra.mxu0 0.0
  %79 = vmatprep.subr.mxu0 0.0
  %80 = vmatpush1.msra.mxu0 0.0
  %81 = vmatprep.subr.mxu0 0.0
  %82 = vmatpush1.msra.mxu0 0.0
  %83 = vmatprep.subr.mxu0 0.0
  %84 = vmatpush1.msra.mxu0 0.0
  %85 = vmatprep.subr.mxu0 0.0
  %86 = vmatpush1.msra.mxu0 0.0
  %87 = vmatprep.subr.mxu0 0.0
  %88 = vmatpush1.msra.mxu0 0.0
  %89 = vmatprep.subr.mxu0 0.0
  %90 = vmatpush1.msra.mxu0 0.0
  %91 = vmatprep.subr.mxu0 0.0
  %92 = vmatpush1.msra.mxu0 0.0
  %93 = vmatprep.subr.mxu0 0.0
  %94 = vmatpush1.msra.mxu0 0.0
  %95 = vmatprep.subr.mxu0 0.0
  %96 = vmatpush1.msra.mxu0 0.0
  %97 = vmatprep.subr.mxu0 0.0
  %98 = vmatpush1.msra.mxu0 0.0
  %99 = vmatprep.subr.mxu0 0.0
  %100 = vmatpush1.msra.mxu0 0.0
  %101 = vmatprep.subr.mxu0 0.0
  %102 = vmatpush1.msra.mxu0 0.0
  %103 = vmatprep.subr.mxu0 0.0
  %104 = vmatpush1.msra.mxu0 0.0
  %105 = vmatprep.subr.mxu0 0.0
  %106 = vmatpush1.msra.mxu0 0.0
  %107 = vmatprep.subr.mxu0 0.0
  %108 = vmatpush1.msra.mxu0 0.0
  %109 = vmatprep.mubr.f32.mxu0 0.0
  %110 = vmatmul.mubr.f32.gmra.mrb[0].mxu0 %v37
  %v111 = vpop.f32.mrb[0].mxu0
  %v112 = vadd.f32 0.0, %v111
  %v113 = vpop.f32.mrb[0].mxu0
  %114 = vmatprep.mubr.f32.mxu0 0.0
  %115 = vmatmul.mubr.f32.gmra.mrb[0].mxu0 %v40
  %v116 = vpop.f32.mrb[0].mxu0
  %v117 = vadd.f32 0.0, %v116
  %v118 = vpop.f32.mrb[0].mxu0
  %119 = vdwg.mxu0
  %v121 = vsel %vm35, %v27, 0
  %v124 = vsel %vm35, %v28, 0
  %v126 = vsel %vm42, %v26, 0
  %128 = vmatprep.subr.mxu0 0.0
  %129 = vmatpush1.msra.mxu0 %v126
  %130 = vmatprep.subr.mxu0 0.0
  %131 = vmatpush1.msra.mxu0 0.0
  %132 = vmatprep.subr.mxu0 0.0
  %133 = vmatpush1.msra.mxu0 0.0
  %134 = vmatprep.subr.mxu0 0.0
  %135 = vmatpush1.msra.mxu0 0.0
  %136 = vmatprep.subr.mxu0 0.0
  %137 = vmatpush1.msra.mxu0 0.0
  %138 = vmatprep.subr.mxu0 0.0
  %139 = vmatpush1.msra.mxu0 0.0
  %140 = vmatprep.subr.mxu0 0.0
  %141 = vmatpush1.msra.mxu0 0.0
  %142 = vmatprep.subr.mxu0 0.0
  %143 = vmatpush1.msra.mxu0 0.0
  %144 = vmatprep.subr.mxu0 0.0
  %145 = vmatpush1.msra.mxu0 0.0
  %146 = vmatprep.subr.mxu0 0.0
  %147 = vmatpush1.msra.mxu0 0.0
  %148 = vmatprep.subr.mxu0 0.0
  %149 = vmatpush1.msra.mxu0 0.0
  %150 = vmatprep.subr.mxu0 0.0
  %151 = vmatpush1.msra.mxu0 0.0
  %152 = vmatprep.subr.mxu0 0.0
  %153 = vmatpush1.msra.mxu0 0.0
  %154 = vmatprep.subr.mxu0 0.0
  %155 = vmatpush1.msra.mxu0 0.0
  %156 = vmatprep.subr.mxu0 0.0
  %157 = vmatpush1.msra.mxu0 0.0
  %158 = vmatprep.subr.mxu0 0.0
  %159 = vmatpush1.msra.mxu0 0.0
  %160 = vmatprep.subr.mxu0 0.0
  %161 = vmatpush1.msra.mxu0 0.0
  %162 = vmatprep.subr.mxu0 0.0
  %163 = vmatpush1.msra.mxu0 0.0
  %164 = vmatprep.subr.mxu0 0.0
  %165 = vmatpush1.msra.mxu0 0.0
  %166 = vmatprep.subr.mxu0 0.0
  %167 = vmatpush1.msra.mxu0 0.0
  %168 = vmatprep.subr.mxu0 0.0
  %169 = vmatpush1.msra.mxu0 0.0
  %170 = vmatprep.subr.mxu0 0.0
  %171 = vmatpush1.msra.mxu0 0.0
  %172 = vmatprep.subr.mxu0 0.0
  %173 = vmatpush1.msra.mxu0 0.0
  %174 = vmatprep.subr.mxu0 0.0
  %175 = vmatpush1.msra.mxu0 0.0
  %176 = vmatprep.subr.mxu0 0.0
  %177 = vmatpush1.msra.mxu0 0.0
  %178 = vmatprep.subr.mxu0 0.0
  %179 = vmatpush1.msra.mxu0 0.0
  %180 = vmatprep.subr.mxu0 0.0
  %181 = vmatpush1.msra.mxu0 0.0
  %182 = vmatprep.subr.mxu0 0.0
  %183 = vmatpush1.msra.mxu0 0.0
  %184 = vmatprep.subr.mxu0 0.0
  %185 = vmatpush1.msra.mxu0 0.0
  %186 = vmatprep.subr.mxu0 0.0
  %187 = vmatpush1.msra.mxu0 0.0
  %188 = vmatprep.subr.mxu0 0.0
  %189 = vmatpush1.msra.mxu0 0.0
  %190 = vmatprep.subr.mxu0 0.0
  %191 = vmatpush1.msra.mxu0 0.0
  %192 = vmatprep.mubr.f32.mxu0 0.0
  %193 = vmatmul.mubr.f32.gmra.mrb[0].mxu0 %v121
  %v194 = vpop.f32.mrb[0].mxu0
  %v195 = vadd.f32 %v112, %v194
  %v196 = vpop.f32.mrb[0].mxu0
  %197 = vmatprep.mubr.f32.mxu0 0.0
  %198 = vmatmul.mubr.f32.gmra.mrb[0].mxu0 %v124
  %v199 = vpop.f32.mrb[0].mxu0
  %v200 = vadd.f32 %v117, %v199
  %v201 = vpop.f32.mrb[0].mxu0
  %202 = vdwg.mxu0
  %s203 = scalar_lea.vmem %s1, 32
  %v204 = vld [vmem:[%s203] sm:$0xff]
  %v205 = vld [vmem:[%s203 + $0x8] sm:$0xff]
  %206 = vrot.lane.b32.xlu0 %v26, 126
  %v207 = vpop.permute.xlu0 %206
  %v209 = vsel %vm35, %v204, 0
  %v212 = vsel %vm35, %v205, 0
  %v214 = vsel %vm42, %v207, 0
  %216 = vmatprep.subr.mxu0 0.0
  %217 = vmatpush1.msra.mxu0 %v214
  %218 = vmatprep.subr.mxu0 0.0
  %219 = vmatpush1.msra.mxu0 0.0
  %220 = vmatprep.subr.mxu0 0.0
  %221 = vmatpush1.msra.mxu0 0.0
  %222 = vmatprep.subr.mxu0 0.0
  %223 = vmatpush1.msra.mxu0 0.0
  %224 = vmatprep.subr.mxu0 0.0
  %225 = vmatpush1.msra.mxu0 0.0
  %226 = vmatprep.subr.mxu0 0.0
  %227 = vmatpush1.msra.mxu0 0.0
  %228 = vmatprep.subr.mxu0 0.0
  %229 = vmatpush1.msra.mxu0 0.0
  %230 = vmatprep.subr.mxu0 0.0
  %231 = vmatpush1.msra.mxu0 0.0
  %232 = vmatprep.subr.mxu0 0.0
  %233 = vmatpush1.msra.mxu0 0.0
  %234 = vmatprep.subr.mxu0 0.0
  %235 = vmatpush1.msra.mxu0 0.0
  %236 = vmatprep.subr.mxu0 0.0
  %237 = vmatpush1.msra.mxu0 0.0
  %238 = vmatprep.subr.mxu0 0.0
  %239 = vmatpush1.msra.mxu0 0.0
  %240 = vmatprep.subr.mxu0 0.0
  %241 = vmatpush1.msra.mxu0 0.0
  %242 = vmatprep.subr.mxu0 0.0
  %243 = vmatpush1.msra.mxu0 0.0
  %244 = vmatprep.subr.mxu0 0.0
  %245 = vmatpush1.msra.mxu0 0.0
  %246 = vmatprep.subr.mxu0 0.0
  %247 = vmatpush1.msra.mxu0 0.0
  %248 = vmatprep.subr.mxu0 0.0
  %249 = vmatpush1.msra.mxu0 0.0
  %250 = vmatprep.subr.mxu0 0.0
  %251 = vmatpush1.msra.mxu0 0.0
  %252 = vmatprep.subr.mxu0 0.0
  %253 = vmatpush1.msra.mxu0 0.0
  %254 = vmatprep.subr.mxu0 0.0
  %255 = vmatpush1.msra.mxu0 0.0
  %256 = vmatprep.subr.mxu0 0.0
  %257 = vmatpush1.msra.mxu0 0.0
  %258 = vmatprep.subr.mxu0 0.0
  %259 = vmatpush1.msra.mxu0 0.0
  %260 = vmatprep.subr.mxu0 0.0
  %261 = vmatpush1.msra.mxu0 0.0
  %262 = vmatprep.subr.mxu0 0.0
  %263 = vmatpush1.msra.mxu0 0.0
  %264 = vmatprep.subr.mxu0 0.0
  %265 = vmatpush1.msra.mxu0 0.0
  %266 = vmatprep.subr.mxu0 0.0
  %267 = vmatpush1.msra.mxu0 0.0
  %268 = vmatprep.subr.mxu0 0.0
  %269 = vmatpush1.msra.mxu0 0.0
  %270 = vmatprep.subr.mxu0 0.0
  %271 = vmatpush1.msra.mxu0 0.0
  %272 = vmatprep.subr.mxu0 0.0
  %273 = vmatpush1.msra.mxu0 0.0
  %274 = vmatprep.subr.mxu0 0.0
  %275 = vmatpush1.msra.mxu0 0.0
  %276 = vmatprep.subr.mxu0 0.0
  %277 = vmatpush1.msra.mxu0 0.0
  %278 = vmatprep.subr.mxu0 0.0
  %279 = vmatpush1.msra.mxu0 0.0
  %280 = vmatprep.mubr.f32.mxu0 0.0
  %281 = vmatmul.mubr.f32.gmra.mrb[0].mxu0 %v209
  %v282 = vpop.f32.mrb[0].mxu0
  %v283 = vadd.f32 0.0, %v282
  %v284 = vpop.f32.mrb[0].mxu0
  %285 = vmatprep.mubr.f32.mxu0 0.0
  %286 = vmatmul.mubr.f32.gmra.mrb[0].mxu0 %v212
  %v287 = vpop.f32.mrb[0].mxu0
  %v288 = vadd.f32 0.0, %v287
  %v289 = vpop.f32.mrb[0].mxu0
  %290 = vdwg.mxu0
  %v291 = vadd.f32 %v195, %v283
  %v292 = vadd.f32 %v200, %v288
  %s293 = scalar_lea.vmem %s1, 48
  %v294 = vld [vmem:[%s293] sm:$0xff]
  %v295 = vld [vmem:[%s293 + $0x8] sm:$0xff]
  %296 = vrot.lane.b32.xlu0 %v26, 125
  %v297 = vpop.permute.xlu0 %296
  %v299 = vsel %vm35, %v294, 0
  %v302 = vsel %vm35, %v295, 0
  %v304 = vsel %vm42, %v297, 0
  %306 = vmatprep.subr.mxu0 0.0
  %307 = vmatpush1.msra.mxu0 %v304
  %308 = vmatprep.subr.mxu0 0.0
  %309 = vmatpush1.msra.mxu0 0.0
  %310 = vmatprep.subr.mxu0 0.0
  %311 = vmatpush1.msra.mxu0 0.0
  %312 = vmatprep.subr.mxu0 0.0
  %313 = vmatpush1.msra.mxu0 0.0
  %314 = vmatprep.subr.mxu0 0.0
  %315 = vmatpush1.msra.mxu0 0.0
  %316 = vmatprep.subr.mxu0 0.0
  %317 = vmatpush1.msra.mxu0 0.0
  %318 = vmatprep.subr.mxu0 0.0
  %319 = vmatpush1.msra.mxu0 0.0
  %320 = vmatprep.subr.mxu0 0.0
  %321 = vmatpush1.msra.mxu0 0.0
  %322 = vmatprep.subr.mxu0 0.0
  %323 = vmatpush1.msra.mxu0 0.0
  %324 = vmatprep.subr.mxu0 0.0
  %325 = vmatpush1.msra.mxu0 0.0
  %326 = vmatprep.subr.mxu0 0.0
  %327 = vmatpush1.msra.mxu0 0.0
  %328 = vmatprep.subr.mxu0 0.0
  %329 = vmatpush1.msra.mxu0 0.0
  %330 = vmatprep.subr.mxu0 0.0
  %331 = vmatpush1.msra.mxu0 0.0
  %332 = vmatprep.subr.mxu0 0.0
  %333 = vmatpush1.msra.mxu0 0.0
  %334 = vmatprep.subr.mxu0 0.0
  %335 = vmatpush1.msra.mxu0 0.0
  %336 = vmatprep.subr.mxu0 0.0
  %337 = vmatpush1.msra.mxu0 0.0
  %338 = vmatprep.subr.mxu0 0.0
  %339 = vmatpush1.msra.mxu0 0.0
  %340 = vmatprep.subr.mxu0 0.0
  %341 = vmatpush1.msra.mxu0 0.0
  %342 = vmatprep.subr.mxu0 0.0
  %343 = vmatpush1.msra.mxu0 0.0
  %344 = vmatprep.subr.mxu0 0.0
  %345 = vmatpush1.msra.mxu0 0.0
  %346 = vmatprep.subr.mxu0 0.0
  %347 = vmatpush1.msra.mxu0 0.0
  %348 = vmatprep.subr.mxu0 0.0
  %349 = vmatpush1.msra.mxu0 0.0
  %350 = vmatprep.subr.mxu0 0.0
  %351 = vmatpush1.msra.mxu0 0.0
  %352 = vmatprep.subr.mxu0 0.0
  %353 = vmatpush1.msra.mxu0 0.0
  %354 = vmatprep.subr.mxu0 0.0
  %355 = vmatpush1.msra.mxu0 0.0
  %356 = vmatprep.subr.mxu0 0.0
  %357 = vmatpush1.msra.mxu0 0.0
  %358 = vmatprep.subr.mxu0 0.0
  %359 = vmatpush1.msra.mxu0 0.0
  %360 = vmatprep.subr.mxu0 0.0
  %361 = vmatpush1.msra.mxu0 0.0
  %362 = vmatprep.subr.mxu0 0.0
  %363 = vmatpush1.msra.mxu0 0.0
  %364 = vmatprep.subr.mxu0 0.0
  %365 = vmatpush1.msra.mxu0 0.0
  %366 = vmatprep.subr.mxu0 0.0
  %367 = vmatpush1.msra.mxu0 0.0
  %368 = vmatprep.subr.mxu0 0.0
  %369 = vmatpush1.msra.mxu0 0.0
  %370 = vmatprep.mubr.f32.mxu0 0.0
  %371 = vmatmul.mubr.f32.gmra.mrb[0].mxu0 %v299
  %v372 = vpop.f32.mrb[0].mxu0
  %v373 = vadd.f32 0.0, %v372
  %v374 = vpop.f32.mrb[0].mxu0
  %375 = vmatprep.mubr.f32.mxu0 0.0
  %376 = vmatmul.mubr.f32.gmra.mrb[0].mxu0 %v302
  %v377 = vpop.f32.mrb[0].mxu0
  %v378 = vadd.f32 0.0, %v377
  %v379 = vpop.f32.mrb[0].mxu0
  %380 = vdwg.mxu0
  %v381 = vadd.f32 %v291, %v373
  %v382 = vadd.f32 %v292, %v378
  %384 = vset.pattern.permute.xlu0 0
  %385 = vperm.xlu0 %384, %v20
  %v386 = vpop.permute.xlu0 %385
  %389 = vset.pattern.permute.xlu0 0
  %390 = vperm.xlu0 %389, %v21
  %v391 = vpop.permute.xlu0 %390
  %v393 = vmul.f32 %v381, %v386
  %v394 = vmul.f32 %v382, %v391
  %395 = vset.pattern.permute.xlu0 1
  %396 = vperm.xlu0 %395, %v20
  %v397 = vpop.permute.xlu0 %396
  %399 = vset.pattern.permute.xlu0 1
  %400 = vperm.xlu0 %399, %v21
  %v401 = vpop.permute.xlu0 %400
  %v403 = vadd.f32 %v393, %v397
  %v404 = vadd.f32 %v394, %v401
  %v405 = vmax.f32 %v403, 0.0
  %v406 = vmax.f32 %v404, 0.0
  %v407 = vld [vmem:[%s3] sm:$0xff]
  %v408 = vld [vmem:[%s3 + $0x8] sm:$0xff]
  %v409 = vld [vmem:[%s3 + $0x10] sm:$0xff]
  %v410 = vld [vmem:[%s3 + $0x18] sm:$0xff]
  %s411 = scalar_lea.vmem %s3, 32
  %v412 = vld [vmem:[%s411] sm:$0xff]
  %v413 = vld [vmem:[%s411 + $0x8] sm:$0xff]
  %v414 = vld [vmem:[%s411 + $0x10] sm:$0xff]
  %v415 = vld [vmem:[%s411 + $0x18] sm:$0xff]
  %418 = vrot.lane.b32.xlu0 %v405, 127
  %v419 = vpop.permute.xlu0 %418
  %420 = vrot.lane.b32.xlu0 %v406, 127
  %v421 = vpop.permute.xlu0 %420
  %vm424 = vcmask 130048
  %v426 = vsel %vm424, %v412, 0
  %v429 = vsel %vm424, %v413, 0
  %v432 = vsel %vm424, %v414, 0
  %v435 = vsel %vm424, %v415, 0
  %437 = vmatprep.subr.mxu0 0.0
  %438 = vmatpush1.msra.mxu0 %v419
  %439 = vmatprep.subr.mxu0 0.0
  %440 = vmatpush1.msra.mxu0 %v421
  %441 = vmatprep.subr.mxu0 0.0
  %442 = vmatpush1.msra.mxu0 0.0
  %443 = vmatprep.subr.mxu0 0.0
  %444 = vmatpush1.msra.mxu0 0.0
  %445 = vmatprep.subr.mxu0 0.0
  %446 = vmatpush1.msra.mxu0 0.0
  %447 = vmatprep.subr.mxu0 0.0
  %448 = vmatpush1.msra.mxu0 0.0
  %449 = vmatprep.subr.mxu0 0.0
  %450 = vmatpush1.msra.mxu0 0.0
  %451 = vmatprep.subr.mxu0 0.0
  %452 = vmatpush1.msra.mxu0 0.0
  %453 = vmatprep.subr.mxu0 0.0
  %454 = vmatpush1.msra.mxu0 0.0
  %455 = vmatprep.subr.mxu0 0.0
  %456 = vmatpush1.msra.mxu0 0.0
  %457 = vmatprep.subr.mxu0 0.0
  %458 = vmatpush1.msra.mxu0 0.0
  %459 = vmatprep.subr.mxu0 0.0
  %460 = vmatpush1.msra.mxu0 0.0
  %461 = vmatprep.subr.mxu0 0.0
  %462 = vmatpush1.msra.mxu0 0.0
  %463 = vmatprep.subr.mxu0 0.0
  %464 = vmatpush1.msra.mxu0 0.0
  %465 = vmatprep.subr.mxu0 0.0
  %466 = vmatpush1.msra.mxu0 0.0
  %467 = vmatprep.subr.mxu0 0.0
  %468 = vmatpush1.msra.mxu0 0.0
  %469 = vmatprep.subr.mxu0 0.0
  %470 = vmatpush1.msra.mxu0 0.0
  %471 = vmatprep.subr.mxu0 0.0
  %472 = vmatpush1.msra.mxu0 0.0
  %473 = vmatprep.subr.mxu0 0.0
  %474 = vmatpush1.msra.mxu0 0.0
  %475 = vmatprep.subr.mxu0 0.0
  %476 = vmatpush1.msra.mxu0 0.0
  %477 = vmatprep.subr.mxu0 0.0
  %478 = vmatpush1.msra.mxu0 0.0
  %479 = vmatprep.subr.mxu0 0.0
  %480 = vmatpush1.msra.mxu0 0.0
  %481 = vmatprep.subr.mxu0 0.0
  %482 = vmatpush1.msra.mxu0 0.0
  %483 = vmatprep.subr.mxu0 0.0
  %484 = vmatpush1.msra.mxu0 0.0
  %485 = vmatprep.subr.mxu0 0.0
  %486 = vmatpush1.msra.mxu0 0.0
  %487 = vmatprep.subr.mxu0 0.0
  %488 = vmatpush1.msra.mxu0 0.0
  %489 = vmatprep.subr.mxu0 0.0
  %490 = vmatpush1.msra.mxu0 0.0
  %491 = vmatprep.subr.mxu0 0.0
  %492 = vmatpush1.msra.mxu0 0.0
  %493 = vmatprep.subr.mxu0 0.0
  %494 = vmatpush1.msra.mxu0 0.0
  %495 = vmatprep.subr.mxu0 0.0
  %496 = vmatpush1.msra.mxu0 0.0
  %497 = vmatprep.subr.mxu0 0.0
  %498 = vmatpush1.msra.mxu0 0.0
  %499 = vmatprep.subr.mxu0 0.0
  %500 = vmatpush1.msra.mxu0 0.0
  %501 = vmatprep.mubr.f32.mxu0 0.0
  %502 = vmatmul.mubr.f32.gmra.mrb[0].mxu0 %v426
  %v503 = vpop.f32.mrb[0].mxu0
  %v504 = vadd.f32 0.0, %v503
  %v505 = vpop.f32.mrb[0].mxu0
  %506 = vmatprep.mubr.f32.mxu0 0.0
  %507 = vmatmul.mubr.f32.gmra.mrb[0].mxu0 %v429
  %v508 = vpop.f32.mrb[0].mxu0
  %v509 = vadd.f32 0.0, %v508
  %v510 = vpop.f32.mrb[0].mxu0
  %511 = vmatprep.mubr.f32.mxu0 0.0
  %512 = vmatmul.mubr.f32.gmra.mrb[0].mxu0 %v432
  %v513 = vpop.f32.mrb[0].mxu0
  %v514 = vadd.f32 0.0, %v513
  %v515 = vpop.f32.mrb[0].mxu0
  %516 = vmatprep.mubr.f32.mxu0 0.0
  %517 = vmatmul.mubr.f32.gmra.mrb[0].mxu0 %v435
  %v518 = vpop.f32.mrb[0].mxu0
  %v519 = vadd.f32 0.0, %v518
  %v520 = vpop.f32.mrb[0].mxu0
  %521 = vdwg.mxu0
  %v523 = vsel %vm424, %v407, 0
  %v526 = vsel %vm424, %v408, 0
  %v529 = vsel %vm424, %v409, 0
  %v532 = vsel %vm424, %v410, 0
  %534 = vmatprep.subr.mxu0 0.0
  %535 = vmatpush1.msra.mxu0 %v405
  %536 = vmatprep.subr.mxu0 0.0
  %537 = vmatpush1.msra.mxu0 %v406
  %538 = vmatprep.subr.mxu0 0.0
  %539 = vmatpush1.msra.mxu0 0.0
  %540 = vmatprep.subr.mxu0 0.0
  %541 = vmatpush1.msra.mxu0 0.0
  %542 = vmatprep.subr.mxu0 0.0
  %543 = vmatpush1.msra.mxu0 0.0
  %544 = vmatprep.subr.mxu0 0.0
  %545 = vmatpush1.msra.mxu0 0.0
  %546 = vmatprep.subr.mxu0 0.0
  %547 = vmatpush1.msra.mxu0 0.0
  %548 = vmatprep.subr.mxu0 0.0
  %549 = vmatpush1.msra.mxu0 0.0
  %550 = vmatprep.subr.mxu0 0.0
  %551 = vmatpush1.msra.mxu0 0.0
  %552 = vmatprep.subr.mxu0 0.0
  %553 = vmatpush1.msra.mxu0 0.0
  %554 = vmatprep.subr.mxu0 0.0
  %555 = vmatpush1.msra.mxu0 0.0
  %556 = vmatprep.subr.mxu0 0.0
  %557 = vmatpush1.msra.mxu0 0.0
  %558 = vmatprep.subr.mxu0 0.0
  %559 = vmatpush1.msra.mxu0 0.0
  %560 = vmatprep.subr.mxu0 0.0
  %561 = vmatpush1.msra.mxu0 0.0
  %562 = vmatprep.subr.mxu0 0.0
  %563 = vmatpush1.msra.mxu0 0.0
  %564 = vmatprep.subr.mxu0 0.0
  %565 = vmatpush1.msra.mxu0 0.0
  %566 = vmatprep.subr.mxu0 0.0
  %567 = vmatpush1.msra.mxu0 0.0
  %568 = vmatprep.subr.mxu0 0.0
  %569 = vmatpush1.msra.mxu0 0.0
  %570 = vmatprep.subr.mxu0 0.0
  %571 = vmatpush1.msra.mxu0 0.0
  %572 = vmatprep.subr.mxu0 0.0
  %573 = vmatpush1.msra.mxu0 0.0
  %574 = vmatprep.subr.mxu0 0.0
  %575 = vmatpush1.msra.mxu0 0.0
  %576 = vmatprep.subr.mxu0 0.0
  %577 = vmatpush1.msra.mxu0 0.0
  %578 = vmatprep.subr.mxu0 0.0
  %579 = vmatpush1.msra.mxu0 0.0
  %580 = vmatprep.subr.mxu0 0.0
  %581 = vmatpush1.msra.mxu0 0.0
  %582 = vmatprep.subr.mxu0 0.0
  %583 = vmatpush1.msra.mxu0 0.0
  %584 = vmatprep.subr.mxu0 0.0
  %585 = vmatpush1.msra.mxu0 0.0
  %586 = vmatprep.subr.mxu0 0.0
  %587 = vmatpush1.msra.mxu0 0.0
  %588 = vmatprep.subr.mxu0 0.0
  %589 = vmatpush1.msra.mxu0 0.0
  %590 = vmatprep.subr.mxu0 0.0
  %591 = vmatpush1.msra.mxu0 0.0
  %592 = vmatprep.subr.mxu0 0.0
  %593 = vmatpush1.msra.mxu0 0.0
  %594 = vmatprep.subr.mxu0 0.0
  %595 = vmatpush1.msra.mxu0 0.0
  %596 = vmatprep.subr.mxu0 0.0
  %597 = vmatpush1.msra.mxu0 0.0
  %598 = vmatprep.mubr.f32.mxu0 0.0
  %599 = vmatmul.mubr.f32.gmra.mrb[0].mxu0 %v523
  %v600 = vpop.f32.mrb[0].mxu0
  %v601 = vadd.f32 %v504, %v600
  %v602 = vpop.f32.mrb[0].mxu0
  %603 = vmatprep.mubr.f32.mxu0 0.0
  %604 = vmatmul.mubr.f32.gmra.mrb[0].mxu0 %v526
  %v605 = vpop.f32.mrb[0].mxu0
  %v606 = vadd.f32 %v509, %v605
  %v607 = vpop.f32.mrb[0].mxu0
  %608 = vmatprep.mubr.f32.mxu0 0.0
  %609 = vmatmul.mubr.f32.gmra.mrb[0].mxu0 %v529
  %v610 = vpop.f32.mrb[0].mxu0
  %v611 = vadd.f32 %v514, %v610
  %v612 = vpop.f32.mrb[0].mxu0
  %613 = vmatprep.mubr.f32.mxu0 0.0
  %614 = vmatmul.mubr.f32.gmra.mrb[0].mxu0 %v532
  %v615 = vpop.f32.mrb[0].mxu0
  %v616 = vadd.f32 %v519, %v615
  %v617 = vpop.f32.mrb[0].mxu0
  %618 = vdwg.mxu0
  %s619 = scalar_lea.vmem %s3, 64
  %v620 = vld [vmem:[%s619] sm:$0xff]
  %v621 = vld [vmem:[%s619 + $0x8] sm:$0xff]
  %v622 = vld [vmem:[%s619 + $0x10] sm:$0xff]
  %v623 = vld [vmem:[%s619 + $0x18] sm:$0xff]
  %624 = vrot.lane.b32.xlu0 %v405, 126
  %v625 = vpop.permute.xlu0 %624
  %626 = vrot.lane.b32.xlu0 %v406, 126
  %v627 = vpop.permute.xlu0 %626
  %v631 = vsel %vm424, %v620, 0
  %v634 = vsel %vm424, %v621, 0
  %v637 = vsel %vm424, %v622, 0
  %v640 = vsel %vm424, %v623, 0
  %642 = vmatprep.subr.mxu0 0.0
  %643 = vmatpush1.msra.mxu0 %v625
  %644 = vmatprep.subr.mxu0 0.0
  %645 = vmatpush1.msra.mxu0 %v627
  %646 = vmatprep.subr.mxu0 0.0
  %647 = vmatpush1.msra.mxu0 0.0
  %648 = vmatprep.subr.mxu0 0.0
  %649 = vmatpush1.msra.mxu0 0.0
  %650 = vmatprep.subr.mxu0 0.0
  %651 = vmatpush1.msra.mxu0 0.0
  %652 = vmatprep.subr.mxu0 0.0
  %653 = vmatpush1.msra.mxu0 0.0
  %654 = vmatprep.subr.mxu0 0.0
  %655 = vmatpush1.msra.mxu0 0.0
  %656 = vmatprep.subr.mxu0 0.0
  %657 = vmatpush1.msra.mxu0 0.0
  %658 = vmatprep.subr.mxu0 0.0
  %659 = vmatpush1.msra.mxu0 0.0
  %660 = vmatprep.subr.mxu0 0.0
  %661 = vmatpush1.msra.mxu0 0.0
  %662 = vmatprep.subr.mxu0 0.0
  %663 = vmatpush1.msra.mxu0 0.0
  %664 = vmatprep.subr.mxu0 0.0
  %665 = vmatpush1.msra.mxu0 0.0
  %666 = vmatprep.subr.mxu0 0.0
  %667 = vmatpush1.msra.mxu0 0.0
  %668 = vmatprep.subr.mxu0 0.0
  %669 = vmatpush1.msra.mxu0 0.0
  %670 = vmatprep.subr.mxu0 0.0
  %671 = vmatpush1.msra.mxu0 0.0
  %672 = vmatprep.subr.mxu0 0.0
  %673 = vmatpush1.msra.mxu0 0.0
  %674 = vmatprep.subr.mxu0 0.0
  %675 = vmatpush1.msra.mxu0 0.0
  %676 = vmatprep.subr.mxu0 0.0
  %677 = vmatpush1.msra.mxu0 0.0
  %678 = vmatprep.subr.mxu0 0.0
  %679 = vmatpush1.msra.mxu0 0.0
  %680 = vmatprep.subr.mxu0 0.0
  %681 = vmatpush1.msra.mxu0 0.0
  %682 = vmatprep.subr.mxu0 0.0
  %683 = vmatpush1.msra.mxu0 0.0
  %684 = vmatprep.subr.mxu0 0.0
  %685 = vmatpush1.msra.mxu0 0.0
  %686 = vmatprep.subr.mxu0 0.0
  %687 = vmatpush1.msra.mxu0 0.0
  %688 = vmatprep.subr.mxu0 0.0
  %689 = vmatpush1.msra.mxu0 0.0
  %690 = vmatprep.subr.mxu0 0.0
  %691 = vmatpush1.msra.mxu0 0.0
  %692 = vmatprep.subr.mxu0 0.0
  %693 = vmatpush1.msra.mxu0 0.0
  %694 = vmatprep.subr.mxu0 0.0
  %695 = vmatpush1.msra.mxu0 0.0
  %696 = vmatprep.subr.mxu0 0.0
  %697 = vmatpush1.msra.mxu0 0.0
  %698 = vmatprep.subr.mxu0 0.0
  %699 = vmatpush1.msra.mxu0 0.0
  %700 = vmatprep.subr.mxu0 0.0
  %701 = vmatpush1.msra.mxu0 0.0
  %702 = vmatprep.subr.mxu0 0.0
  %703 = vmatpush1.msra.mxu0 0.0
  %704 = vmatprep.subr.mxu0 0.0
  %705 = vmatpush1.msra.mxu0 0.0
  %706 = vmatprep.mubr.f32.mxu0 0.0
  %707 = vmatmul.mubr.f32.gmra.mrb[0].mxu0 %v631
  %v708 = vpop.f32.mrb[0].mxu0
  %v709 = vadd.f32 0.0, %v708
  %v710 = vpop.f32.mrb[0].mxu0
  %711 = vmatprep.mubr.f32.mxu0 0.0
  %712 = vmatmul.mubr.f32.gmra.mrb[0].mxu0 %v634
  %v713 = vpop.f32.mrb[0].mxu0
  %v714 = vadd.f32 0.0, %v713
  %v715 = vpop.f32.mrb[0].mxu0
  %716 = vmatprep.mubr.f32.mxu0 0.0
  %717 = vmatmul.mubr.f32.gmra.mrb[0].mxu0 %v637
  %v718 = vpop.f32.mrb[0].mxu0
  %v719 = vadd.f32 0.0, %v718
  %v720 = vpop.f32.mrb[0].mxu0
  %721 = vmatprep.mubr.f32.mxu0 0.0
  %722 = vmatmul.mubr.f32.gmra.mrb[0].mxu0 %v640
  %v723 = vpop.f32.mrb[0].mxu0
  %v724 = vadd.f32 0.0, %v723
  %v725 = vpop.f32.mrb[0].mxu0
  %726 = vdwg.mxu0
  %v727 = vadd.f32 %v601, %v709
  %v728 = vadd.f32 %v606, %v714
  %v729 = vadd.f32 %v611, %v719
  %v730 = vadd.f32 %v616, %v724
  %s731 = scalar_lea.vmem %s3, 96
  %v732 = vld [vmem:[%s731] sm:$0xff]
  %v733 = vld [vmem:[%s731 + $0x8] sm:$0xff]
  %v734 = vld [vmem:[%s731 + $0x10] sm:$0xff]
  %v735 = vld [vmem:[%s731 + $0x18] sm:$0xff]
  %736 = vrot.lane.b32.xlu0 %v405, 125
  %v737 = vpop.permute.xlu0 %736
  %738 = vrot.lane.b32.xlu0 %v406, 125
  %v739 = vpop.permute.xlu0 %738
  %v743 = vsel %vm424, %v732, 0
  %v746 = vsel %vm424, %v733, 0
  %v749 = vsel %vm424, %v734, 0
  %v752 = vsel %vm424, %v735, 0
  %754 = vmatprep.subr.mxu0 0.0
  %755 = vmatpush1.msra.mxu0 %v737
  %756 = vmatprep.subr.mxu0 0.0
  %757 = vmatpush1.msra.mxu0 %v739
  %758 = vmatprep.subr.mxu0 0.0
  %759 = vmatpush1.msra.mxu0 0.0
  %760 = vmatprep.subr.mxu0 0.0
  %761 = vmatpush1.msra.mxu0 0.0
  %762 = vmatprep.subr.mxu0 0.0
  %763 = vmatpush1.msra.mxu0 0.0
  %764 = vmatprep.subr.mxu0 0.0
  %765 = vmatpush1.msra.mxu0 0.0
  %766 = vmatprep.subr.mxu0 0.0
  %767 = vmatpush1.msra.mxu0 0.0
  %768 = vmatprep.subr.mxu0 0.0
  %769 = vmatpush1.msra.mxu0 0.0
  %770 = vmatprep.subr.mxu0 0.0
  %771 = vmatpush1.msra.mxu0 0.0
  %772 = vmatprep.subr.mxu0 0.0
  %773 = vmatpush1.msra.mxu0 0.0
  %774 = vmatprep.subr.mxu0 0.0
  %775 = vmatpush1.msra.mxu0 0.0
  %776 = vmatprep.subr.mxu0 0.0
  %777 = vmatpush1.msra.mxu0 0.0
  %778 = vmatprep.subr.mxu0 0.0
  %779 = vmatpush1.msra.mxu0 0.0
  %780 = vmatprep.subr.mxu0 0.0
  %781 = vmatpush1.msra.mxu0 0.0
  %782 = vmatprep.subr.mxu0 0.0
  %783 = vmatpush1.msra.mxu0 0.0
  %784 = vmatprep.subr.mxu0 0.0
  %785 = vmatpush1.msra.mxu0 0.0
  %786 = vmatprep.subr.mxu0 0.0
  %787 = vmatpush1.msra.mxu0 0.0
  %788 = vmatprep.subr.mxu0 0.0
  %789 = vmatpush1.msra.mxu0 0.0
  %790 = vmatprep.subr.mxu0 0.0
  %791 = vmatpush1.msra.mxu0 0.0
  %792 = vmatprep.subr.mxu0 0.0
  %793 = vmatpush1.msra.mxu0 0.0
  %794 = vmatprep.subr.mxu0 0.0
  %795 = vmatpush1.msra.mxu0 0.0
  %796 = vmatprep.subr.mxu0 0.0
  %797 = vmatpush1.msra.mxu0 0.0
  %798 = vmatprep.subr.mxu0 0.0
  %799 = vmatpush1.msra.mxu0 0.0
  %800 = vmatprep.subr.mxu0 0.0
  %801 = vmatpush1.msra.mxu0 0.0
  %802 = vmatprep.subr.mxu0 0.0
  %803 = vmatpush1.msra.mxu0 0.0
  %804 = vmatprep.subr.mxu0 0.0
  %805 = vmatpush1.msra.mxu0 0.0
  %806 = vmatprep.subr.mxu0 0.0
  %807 = vmatpush1.msra.mxu0 0.0
  %808 = vmatprep.subr.mxu0 0.0
  %809 = vmatpush1.msra.mxu0 0.0
  %810 = vmatprep.subr.mxu0 0.0
  %811 = vmatpush1.msra.mxu0 0.0
  %812 = vmatprep.subr.mxu0 0.0
  %813 = vmatpush1.msra.mxu0 0.0
  %814 = vmatprep.subr.mxu0 0.0
  %815 = vmatpush1.msra.mxu0 0.0
  %816 = vmatprep.subr.mxu0 0.0
  %817 = vmatpush1.msra.mxu0 0.0
  %818 = vmatprep.mubr.f32.mxu0 0.0
  %819 = vmatmul.mubr.f32.gmra.mrb[0].mxu0 %v743
  %v820 = vpop.f32.mrb[0].mxu0
  %v821 = vadd.f32 0.0, %v820
  %v822 = vpop.f32.mrb[0].mxu0
  %823 = vmatprep.mubr.f32.mxu0 0.0
  %824 = vmatmul.mubr.f32.gmra.mrb[0].mxu0 %v746
  %v825 = vpop.f32.mrb[0].mxu0
  %v826 = vadd.f32 0.0, %v825
  %v827 = vpop.f32.mrb[0].mxu0
  %828 = vmatprep.mubr.f32.mxu0 0.0
  %829 = vmatmul.mubr.f32.gmra.mrb[0].mxu0 %v749
  %v830 = vpop.f32.mrb[0].mxu0
  %v831 = vadd.f32 0.0, %v830
  %v832 = vpop.f32.mrb[0].mxu0
  %833 = vmatprep.mubr.f32.mxu0 0.0
  %834 = vmatmul.mubr.f32.gmra.mrb[0].mxu0 %v752
  %v835 = vpop.f32.mrb[0].mxu0
  %v836 = vadd.f32 0.0, %v835
  %v837 = vpop.f32.mrb[0].mxu0
  %838 = vdwg.mxu0
  %v839 = vadd.f32 %v727, %v821
  %v840 = vadd.f32 %v728, %v826
  %v841 = vadd.f32 %v729, %v831
  %v842 = vadd.f32 %v730, %v836
  %844 = vset.pattern.permute.xlu0 0
  %845 = vperm.xlu0 %844, %v22
  %v846 = vpop.permute.xlu0 %845
  %849 = vset.pattern.permute.xlu0 0
  %850 = vperm.xlu0 %849, %v23
  %v851 = vpop.permute.xlu0 %850
  %854 = vset.pattern.permute.xlu0 0
  %855 = vperm.xlu0 %854, %v24
  %v856 = vpop.permute.xlu0 %855
  %859 = vset.pattern.permute.xlu0 0
  %860 = vperm.xlu0 %859, %v25
  %v861 = vpop.permute.xlu0 %860
  %v863 = vmul.f32 %v839, %v846
  %v864 = vmul.f32 %v840, %v851
  %v865 = vmul.f32 %v841, %v856
  %v866 = vmul.f32 %v842, %v861
  %867 = vset.pattern.permute.xlu0 1
  %868 = vperm.xlu0 %867, %v22
  %v869 = vpop.permute.xlu0 %868
  %871 = vset.pattern.permute.xlu0 1
  %872 = vperm.xlu0 %871, %v23
  %v873 = vpop.permute.xlu0 %872
  %875 = vset.pattern.permute.xlu0 1
  %876 = vperm.xlu0 %875, %v24
  %v877 = vpop.permute.xlu0 %876
  %879 = vset.pattern.permute.xlu0 1
  %880 = vperm.xlu0 %879, %v25
  %v881 = vpop.permute.xlu0 %880
  %v883 = vadd.f32 %v863, %v869
  %v884 = vadd.f32 %v864, %v873
  %v885 = vadd.f32 %v865, %v877
  %v886 = vadd.f32 %v866, %v881
  %v887 = vmax.f32 %v883, 0.0
  %v888 = vmax.f32 %v884, 0.0
  %v889 = vmax.f32 %v885, 0.0
  %v890 = vmax.f32 %v886, 0.0
  %vm891 = vcmask 80896
  %892 = vst.msk [vmem:[%s5] sm:$0xff] %vm891, %v887
  %893 = vst.msk [vmem:[%s5 + $0x8] sm:$0xff] %vm891, %v888
  %894 = vst.msk [vmem:[%s5 + $0x10] sm:$0xff] %vm891, %v889
  %895 = vst.msk [vmem:[%s5 + $0x18] sm:$0xff] %vm891, %v890
  %s896 = scalar_lea.vmem %s0, 4
  %v897 = vld [vmem:[%s896] sm:$0xf]
  %v898 = vld [vmem:[%s1] sm:$0xff]
  %v899 = vld [vmem:[%s1 + $0x8] sm:$0xff]
  %v900 = vld [vmem:[%s29] sm:$0xff]
  %v901 = vld [vmem:[%s29 + $0x8] sm:$0xff]
  %903 = vrot.lane.b32.xlu0 %v897, 127
  %v904 = vpop.permute.xlu0 %903
  %v906 = vsel %vm35, %v900, 0
  %v909 = vsel %vm35, %v901, 0
  %v911 = vsel %vm42, %v904, 0
  %913 = vmatprep.subr.mxu0 0.0
  %914 = vmatpush1.msra.mxu0 %v911
  %915 = vmatprep.subr.mxu0 0.0
  %916 = vmatpush1.msra.mxu0 0.0
  %917 = vmatprep.subr.mxu0 0.0
  %918 = vmatpush1.msra.mxu0 0.0
  %919 = vmatprep.subr.mxu0 0.0
  %920 = vmatpush1.msra.mxu0 0.0
  %921 = vmatprep.subr.mxu0 0.0
  %922 = vmatpush1.msra.mxu0 0.0
  %923 = vmatprep.subr.mxu0 0.0
  %924 = vmatpush1.msra.mxu0 0.0
  %925 = vmatprep.subr.mxu0 0.0
  %926 = vmatpush1.msra.mxu0 0.0
  %927 = vmatprep.subr.mxu0 0.0
  %928 = vmatpush1.msra.mxu0 0.0
  %929 = vmatprep.subr.mxu0 0.0
  %930 = vmatpush1.msra.mxu0 0.0
  %931 = vmatprep.subr.mxu0 0.0
  %932 = vmatpush1.msra.mxu0 0.0
  %933 = vmatprep.subr.mxu0 0.0
  %934 = vmatpush1.msra.mxu0 0.0
  %935 = vmatprep.subr.mxu0 0.0
  %936 = vmatpush1.msra.mxu0 0.0
  %937 = vmatprep.subr.mxu0 0.0
  %938 = vmatpush1.msra.mxu0 0.0
  %939 = vmatprep.subr.mxu0 0.0
  %940 = vmatpush1.msra.mxu0 0.0
  %941 = vmatprep.subr.mxu0 0.0
  %942 = vmatpush1.msra.mxu0 0.0
  %943 = vmatprep.subr.mxu0 0.0
  %944 = vmatpush1.msra.mxu0 0.0
  %945 = vmatprep.subr.mxu0 0.0
  %946 = vmatpush1.msra.mxu0 0.0
  %947 = vmatprep.subr.mxu0 0.0
  %948 = vmatpush1.msra.mxu0 0.0
  %949 = vmatprep.subr.mxu0 0.0
  %950 = vmatpush1.msra.mxu0 0.0
  %951 = vmatprep.subr.mxu0 0.0
  %952 = vmatpush1.msra.mxu0 0.0
  %953 = vmatprep.subr.mxu0 0.0
  %954 = vmatpush1.msra.mxu0 0.0
  %955 = vmatprep.subr.mxu0 0.0
  %956 = vmatpush1.msra.mxu0 0.0
  %957 = vmatprep.subr.mxu0 0.0
  %958 = vmatpush1.msra.mxu0 0.0
  %959 = vmatprep.subr.mxu0 0.0
  %960 = vmatpush1.msra.mxu0 0.0
  %961 = vmatprep.subr.mxu0 0.0
  %962 = vmatpush1.msra.mxu0 0.0
  %963 = vmatprep.subr.mxu0 0.0
  %964 = vmatpush1.msra.mxu0 0.0
  %965 = vmatprep.subr.mxu0 0.0
  %966 = vmatpush1.msra.mxu0 0.0
  %967 = vmatprep.subr.mxu0 0.0
  %968 = vmatpush1.msra.mxu0 0.0
  %969 = vmatprep.subr.mxu0 0.0
  %970 = vmatpush1.msra.mxu0 0.0
  %971 = vmatprep.subr.mxu0 0.0
  %972 = vmatpush1.msra.mxu0 0.0
  %973 = vmatprep.subr.mxu0 0.0
  %974 = vmatpush1.msra.mxu0 0.0
  %975 = vmatprep.subr.mxu0 0.0
  %976 = vmatpush1.msra.mxu0 0.0
  %977 = vmatprep.mubr.f32.mxu0 0.0
  %978 = vmatmul.mubr.f32.gmra.mrb[0].mxu0 %v906
  %v979 = vpop.f32.mrb[0].mxu0
  %v980 = vadd.f32 0.0, %v979
  %v981 = vpop.f32.mrb[0].mxu0
  %982 = vmatprep.mubr.f32.mxu0 0.0
  %983 = vmatmul.mubr.f32.gmra.mrb[0].mxu0 %v909
  %v984 = vpop.f32.mrb[0].mxu0
  %v985 = vadd.f32 0.0, %v984
  %v986 = vpop.f32.mrb[0].mxu0
  %987 = vdwg.mxu0
  %v989 = vsel %vm35, %v898, 0
  %v992 = vsel %vm35, %v899, 0
  %v994 = vsel %vm42, %v897, 0
  %996 = vmatprep.subr.mxu0 0.0
  %997 = vmatpush1.msra.mxu0 %v994
  %998 = vmatprep.subr.mxu0 0.0
  %999 = vmatpush1.msra.mxu0 0.0
  %1000 = vmatprep.subr.mxu0 0.0
  %1001 = vmatpush1.msra.mxu0 0.0
  %1002 = vmatprep.subr.mxu0 0.0
  %1003 = vmatpush1.msra.mxu0 0.0
  %1004 = vmatprep.subr.mxu0 0.0
  %1005 = vmatpush1.msra.mxu0 0.0
  %1006 = vmatprep.subr.mxu0 0.0
  %1007 = vmatpush1.msra.mxu0 0.0
  %1008 = vmatprep.subr.mxu0 0.0
  %1009 = vmatpush1.msra.mxu0 0.0
  %1010 = vmatprep.subr.mxu0 0.0
  %1011 = vmatpush1.msra.mxu0 0.0
  %1012 = vmatprep.subr.mxu0 0.0
  %1013 = vmatpush1.msra.mxu0 0.0
  %1014 = vmatprep.subr.mxu0 0.0
  %1015 = vmatpush1.msra.mxu0 0.0
  %1016 = vmatprep.subr.mxu0 0.0
  %1017 = vmatpush1.msra.mxu0 0.0
  %1018 = vmatprep.subr.mxu0 0.0
  %1019 = vmatpush1.msra.mxu0 0.0
  %1020 = vmatprep.subr.mxu0 0.0
  %1021 = vmatpush1.msra.mxu0 0.0
  %1022 = vmatprep.subr.mxu0 0.0
  %1023 = vmatpush1.msra.mxu0 0.0
  %1024 = vmatprep.subr.mxu0 0.0
  %1025 = vmatpush1.msra.mxu0 0.0
  %1026 = vmatprep.subr.mxu0 0.0
  %1027 = vmatpush1.msra.mxu0 0.0
  %1028 = vmatprep.subr.mxu0 0.0
  %1029 = vmatpush1.msra.mxu0 0.0
  %1030 = vmatprep.subr.mxu0 0.0
  %1031 = vmatpush1.msra.mxu0 0.0
  %1032 = vmatprep.subr.mxu0 0.0
  %1033 = vmatpush1.msra.mxu0 0.0
  %1034 = vmatprep.subr.mxu0 0.0
  %1035 = vmatpush1.msra.mxu0 0.0
  %1036 = vmatprep.subr.mxu0 0.0
  %1037 = vmatpush1.msra.mxu0 0.0
  %1038 = vmatprep.subr.mxu0 0.0
  %1039 = vmatpush1.msra.mxu0 0.0
  %1040 = vmatprep.subr.mxu0 0.0
  %1041 = vmatpush1.msra.mxu0 0.0
  %1042 = vmatprep.subr.mxu0 0.0
  %1043 = vmatpush1.msra.mxu0 0.0
  %1044 = vmatprep.subr.mxu0 0.0
  %1045 = vmatpush1.msra.mxu0 0.0
  %1046 = vmatprep.subr.mxu0 0.0
  %1047 = vmatpush1.msra.mxu0 0.0
  %1048 = vmatprep.subr.mxu0 0.0
  %1049 = vmatpush1.msra.mxu0 0.0
  %1050 = vmatprep.subr.mxu0 0.0
  %1051 = vmatpush1.msra.mxu0 0.0
  %1052 = vmatprep.subr.mxu0 0.0
  %1053 = vmatpush1.msra.mxu0 0.0
  %1054 = vmatprep.subr.mxu0 0.0
  %1055 = vmatpush1.msra.mxu0 0.0
  %1056 = vmatprep.subr.mxu0 0.0
  %1057 = vmatpush1.msra.mxu0 0.0
  %1058 = vmatprep.subr.mxu0 0.0
  %1059 = vmatpush1.msra.mxu0 0.0
  %1060 = vmatprep.mubr.f32.mxu0 0.0
  %1061 = vmatmul.mubr.f32.gmra.mrb[0].mxu0 %v989
  %v1062 = vpop.f32.mrb[0].mxu0
  %v1063 = vadd.f32 %v980, %v1062
  %v1064 = vpop.f32.mrb[0].mxu0
  %1065 = vmatprep.mubr.f32.mxu0 0.0
  %1066 = vmatmul.mubr.f32.gmra.mrb[0].mxu0 %v992
  %v1067 = vpop.f32.mrb[0].mxu0
  %v1068 = vadd.f32 %v985, %v1067
  %v1069 = vpop.f32.mrb[0].mxu0
  %1070 = vdwg.mxu0
  %v1071 = vld [vmem:[%s203] sm:$0xff]
  %v1072 = vld [vmem:[%s203 + $0x8] sm:$0xff]
  %1073 = vrot.lane.b32.xlu0 %v897, 126
  %v1074 = vpop.permute.xlu0 %1073
  %v1076 = vsel %vm35, %v1071, 0
  %v1079 = vsel %vm35, %v1072, 0
  %v1081 = vsel %vm42, %v1074, 0
  %1083 = vmatprep.subr.mxu0 0.0
  %1084 = vmatpush1.msra.mxu0 %v1081
  %1085 = vmatprep.subr.mxu0 0.0
  %1086 = vmatpush1.msra.mxu0 0.0
  %1087 = vmatprep.subr.mxu0 0.0
  %1088 = vmatpush1.msra.mxu0 0.0
  %1089 = vmatprep.subr.mxu0 0.0
  %1090 = vmatpush1.msra.mxu0 0.0
  %1091 = vmatprep.subr.mxu0 0.0
  %1092 = vmatpush1.msra.mxu0 0.0
  %1093 = vmatprep.subr.mxu0 0.0
  %1094 = vmatpush1.msra.mxu0 0.0
  %1095 = vmatprep.subr.mxu0 0.0
  %1096 = vmatpush1.msra.mxu0 0.0
  %1097 = vmatprep.subr.mxu0 0.0
  %1098 = vmatpush1.msra.mxu0 0.0
  %1099 = vmatprep.subr.mxu0 0.0
  %1100 = vmatpush1.msra.mxu0 0.0
  %1101 = vmatprep.subr.mxu0 0.0
  %1102 = vmatpush1.msra.mxu0 0.0
  %1103 = vmatprep.subr.mxu0 0.0
  %1104 = vmatpush1.msra.mxu0 0.0
  %1105 = vmatprep.subr.mxu0 0.0
  %1106 = vmatpush1.msra.mxu0 0.0
  %1107 = vmatprep.subr.mxu0 0.0
  %1108 = vmatpush1.msra.mxu0 0.0
  %1109 = vmatprep.subr.mxu0 0.0
  %1110 = vmatpush1.msra.mxu0 0.0
  %1111 = vmatprep.subr.mxu0 0.0
  %1112 = vmatpush1.msra.mxu0 0.0
  %1113 = vmatprep.subr.mxu0 0.0
  %1114 = vmatpush1.msra.mxu0 0.0
  %1115 = vmatprep.subr.mxu0 0.0
  %1116 = vmatpush1.msra.mxu0 0.0
  %1117 = vmatprep.subr.mxu0 0.0
  %1118 = vmatpush1.msra.mxu0 0.0
  %1119 = vmatprep.subr.mxu0 0.0
  %1120 = vmatpush1.msra.mxu0 0.0
  %1121 = vmatprep.subr.mxu0 0.0
  %1122 = vmatpush1.msra.mxu0 0.0
  %1123 = vmatprep.subr.mxu0 0.0
  %1124 = vmatpush1.msra.mxu0 0.0
  %1125 = vmatprep.subr.mxu0 0.0
  %1126 = vmatpush1.msra.mxu0 0.0
  %1127 = vmatprep.subr.mxu0 0.0
  %1128 = vmatpush1.msra.mxu0 0.0
  %1129 = vmatprep.subr.mxu0 0.0
  %1130 = vmatpush1.msra.mxu0 0.0
  %1131 = vmatprep.subr.mxu0 0.0
  %1132 = vmatpush1.msra.mxu0 0.0
  %1133 = vmatprep.subr.mxu0 0.0
  %1134 = vmatpush1.msra.mxu0 0.0
  %1135 = vmatprep.subr.mxu0 0.0
  %1136 = vmatpush1.msra.mxu0 0.0
  %1137 = vmatprep.subr.mxu0 0.0
  %1138 = vmatpush1.msra.mxu0 0.0
  %1139 = vmatprep.subr.mxu0 0.0
  %1140 = vmatpush1.msra.mxu0 0.0
  %1141 = vmatprep.subr.mxu0 0.0
  %1142 = vmatpush1.msra.mxu0 0.0
  %1143 = vmatprep.subr.mxu0 0.0
  %1144 = vmatpush1.msra.mxu0 0.0
  %1145 = vmatprep.subr.mxu0 0.0
  %1146 = vmatpush1.msra.mxu0 0.0
  %1147 = vmatprep.mubr.f32.mxu0 0.0
  %1148 = vmatmul.mubr.f32.gmra.mrb[0].mxu0 %v1076
  %v1149 = vpop.f32.mrb[0].mxu0
  %v1150 = vadd.f32 0.0, %v1149
  %v1151 = vpop.f32.mrb[0].mxu0
  %1152 = vmatprep.mubr.f32.mxu0 0.0
  %1153 = vmatmul.mubr.f32.gmra.mrb[0].mxu0 %v1079
  %v1154 = vpop.f32.mrb[0].mxu0
  %v1155 = vadd.f32 0.0, %v1154
  %v1156 = vpop.f32.mrb[0].mxu0
  %1157 = vdwg.mxu0
  %v1158 = vadd.f32 %v1063, %v1150
  %v1159 = vadd.f32 %v1068, %v1155
  %v1160 = vld [vmem:[%s293] sm:$0xff]
  %v1161 = vld [vmem:[%s293 + $0x8] sm:$0xff]
  %1162 = vrot.lane.b32.xlu0 %v897, 125
  %v1163 = vpop.permute.xlu0 %1162
  %v1165 = vsel %vm35, %v1160, 0
  %v1168 = vsel %vm35, %v1161, 0
  %v1170 = vsel %vm42, %v1163, 0
  %1172 = vmatprep.subr.mxu0 0.0
  %1173 = vmatpush1.msra.mxu0 %v1170
  %1174 = vmatprep.subr.mxu0 0.0
  %1175 = vmatpush1.msra.mxu0 0.0
  %1176 = vmatprep.subr.mxu0 0.0
  %1177 = vmatpush1.msra.mxu0 0.0
  %1178 = vmatprep.subr.mxu0 0.0
  %1179 = vmatpush1.msra.mxu0 0.0
  %1180 = vmatprep.subr.mxu0 0.0
  %1181 = vmatpush1.msra.mxu0 0.0
  %1182 = vmatprep.subr.mxu0 0.0
  %1183 = vmatpush1.msra.mxu0 0.0
  %1184 = vmatprep.subr.mxu0 0.0
  %1185 = vmatpush1.msra.mxu0 0.0
  %1186 = vmatprep.subr.mxu0 0.0
  %1187 = vmatpush1.msra.mxu0 0.0
  %1188 = vmatprep.subr.mxu0 0.0
  %1189 = vmatpush1.msra.mxu0 0.0
  %1190 = vmatprep.subr.mxu0 0.0
  %1191 = vmatpush1.msra.mxu0 0.0
  %1192 = vmatprep.subr.mxu0 0.0
  %1193 = vmatpush1.msra.mxu0 0.0
  %1194 = vmatprep.subr.mxu0 0.0
  %1195 = vmatpush1.msra.mxu0 0.0
  %1196 = vmatprep.subr.mxu0 0.0
  %1197 = vmatpush1.msra.mxu0 0.0
  %1198 = vmatprep.subr.mxu0 0.0
  %1199 = vmatpush1.msra.mxu0 0.0
  %1200 = vmatprep.subr.mxu0 0.0
  %1201 = vmatpush1.msra.mxu0 0.0
  %1202 = vmatprep.subr.mxu0 0.0
  %1203 = vmatpush1.msra.mxu0 0.0
  %1204 = vmatprep.subr.mxu0 0.0
  %1205 = vmatpush1.msra.mxu0 0.0
  %1206 = vmatprep.subr.mxu0 0.0
  %1207 = vmatpush1.msra.mxu0 0.0
  %1208 = vmatprep.subr.mxu0 0.0
  %1209 = vmatpush1.msra.mxu0 0.0
  %1210 = vmatprep.subr.mxu0 0.0
  %1211 = vmatpush1.msra.mxu0 0.0
  %1212 = vmatprep.subr.mxu0 0.0
  %1213 = vmatpush1.msra.mxu0 0.0
  %1214 = vmatprep.subr.mxu0 0.0
  %1215 = vmatpush1.msra.mxu0 0.0
  %1216 = vmatprep.subr.mxu0 0.0
  %1217 = vmatpush1.msra.mxu0 0.0
  %1218 = vmatprep.subr.mxu0 0.0
  %1219 = vmatpush1.msra.mxu0 0.0
  %1220 = vmatprep.subr.mxu0 0.0
  %1221 = vmatpush1.msra.mxu0 0.0
  %1222 = vmatprep.subr.mxu0 0.0
  %1223 = vmatpush1.msra.mxu0 0.0
  %1224 = vmatprep.subr.mxu0 0.0
  %1225 = vmatpush1.msra.mxu0 0.0
  %1226 = vmatprep.subr.mxu0 0.0
  %1227 = vmatpush1.msra.mxu0 0.0
  %1228 = vmatprep.subr.mxu0 0.0
  %1229 = vmatpush1.msra.mxu0 0.0
  %1230 = vmatprep.subr.mxu0 0.0
  %1231 = vmatpush1.msra.mxu0 0.0
  %1232 = vmatprep.subr.mxu0 0.0
  %1233 = vmatpush1.msra.mxu0 0.0
  %1234 = vmatprep.subr.mxu0 0.0
  %1235 = vmatpush1.msra.mxu0 0.0
  %1236 = vmatprep.mubr.f32.mxu0 0.0
  %1237 = vmatmul.mubr.f32.gmra.mrb[0].mxu0 %v1165
  %v1238 = vpop.f32.mrb[0].mxu0
  %v1239 = vadd.f32 0.0, %v1238
  %v1240 = vpop.f32.mrb[0].mxu0
  %1241 = vmatprep.mubr.f32.mxu0 0.0
  %1242 = vmatmul.mubr.f32.gmra.mrb[0].mxu0 %v1168
  %v1243 = vpop.f32.mrb[0].mxu0
  %v1244 = vadd.f32 0.0, %v1243
  %v1245 = vpop.f32.mrb[0].mxu0
  %1246 = vdwg.mxu0
  %v1247 = vadd.f32 %v1158, %v1239
  %v1248 = vadd.f32 %v1159, %v1244
  %v1249 = vmul.f32 %v1247, %v386
  %v1250 = vmul.f32 %v1248, %v391
  %v1251 = vadd.f32 %v1249, %v397
  %v1252 = vadd.f32 %v1250, %v401
  %v1253 = vmax.f32 %v1251, 0.0
  %v1254 = vmax.f32 %v1252, 0.0
  %v1255 = vld [vmem:[%s3] sm:$0xff]
  %v1256 = vld [vmem:[%s3 + $0x8] sm:$0xff]
  %v1257 = vld [vmem:[%s3 + $0x10] sm:$0xff]
  %v1258 = vld [vmem:[%s3 + $0x18] sm:$0xff]
  %v1259 = vld [vmem:[%s411] sm:$0xff]
  %v1260 = vld [vmem:[%s411 + $0x8] sm:$0xff]
  %v1261 = vld [vmem:[%s411 + $0x10] sm:$0xff]
  %v1262 = vld [vmem:[%s411 + $0x18] sm:$0xff]
  %1265 = vrot.lane.b32.xlu0 %v1253, 127
  %v1266 = vpop.permute.xlu0 %1265
  %1267 = vrot.lane.b32.xlu0 %v1254, 127
  %v1268 = vpop.permute.xlu0 %1267
  %v1272 = vsel %vm424, %v1259, 0
  %v1275 = vsel %vm424, %v1260, 0
  %v1278 = vsel %vm424, %v1261, 0
  %v1281 = vsel %vm424, %v1262, 0
  %1283 = vmatprep.subr.mxu0 0.0
  %1284 = vmatpush1.msra.mxu0 %v1266
  %1285 = vmatprep.subr.mxu0 0.0
  %1286 = vmatpush1.msra.mxu0 %v1268
  %1287 = vmatprep.subr.mxu0 0.0
  %1288 = vmatpush1.msra.mxu0 0.0
  %1289 = vmatprep.subr.mxu0 0.0
  %1290 = vmatpush1.msra.mxu0 0.0
  %1291 = vmatprep.subr.mxu0 0.0
  %1292 = vmatpush1.msra.mxu0 0.0
  %1293 = vmatprep.subr.mxu0 0.0
  %1294 = vmatpush1.msra.mxu0 0.0
  %1295 = vmatprep.subr.mxu0 0.0
  %1296 = vmatpush1.msra.mxu0 0.0
  %1297 = vmatprep.subr.mxu0 0.0
  %1298 = vmatpush1.msra.mxu0 0.0
  %1299 = vmatprep.subr.mxu0 0.0
  %1300 = vmatpush1.msra.mxu0 0.0
  %1301 = vmatprep.subr.mxu0 0.0
  %1302 = vmatpush1.msra.mxu0 0.0
  %1303 = vmatprep.subr.mxu0 0.0
  %1304 = vmatpush1.msra.mxu0 0.0
  %1305 = vmatprep.subr.mxu0 0.0
  %1306 = vmatpush1.msra.mxu0 0.0
  %1307 = vmatprep.subr.mxu0 0.0
  %1308 = vmatpush1.msra.mxu0 0.0
  %1309 = vmatprep.subr.mxu0 0.0
  %1310 = vmatpush1.msra.mxu0 0.0
  %1311 = vmatprep.subr.mxu0 0.0
  %1312 = vmatpush1.msra.mxu0 0.0
  %1313 = vmatprep.subr.mxu0 0.0
  %1314 = vmatpush1.msra.mxu0 0.0
  %1315 = vmatprep.subr.mxu0 0.0
  %1316 = vmatpush1.msra.mxu0 0.0
  %1317 = vmatprep.subr.mxu0 0.0
  %1318 = vmatpush1.msra.mxu0 0.0
  %1319 = vmatprep.subr.mxu0 0.0
  %1320 = vmatpush1.msra.mxu0 0.0
  %1321 = vmatprep.subr.mxu0 0.0
  %1322 = vmatpush1.msra.mxu0 0.0
  %1323 = vmatprep.subr.mxu0 0.0
  %1324 = vmatpush1.msra.mxu0 0.0
  %1325 = vmatprep.subr.mxu0 0.0
  %1326 = vmatpush1.msra.mxu0 0.0
  %1327 = vmatprep.subr.mxu0 0.0
  %1328 = vmatpush1.msra.mxu0 0.0
  %1329 = vmatprep.subr.mxu0 0.0
  %1330 = vmatpush1.msra.mxu0 0.0
  %1331 = vmatprep.subr.mxu0 0.0
  %1332 = vmatpush1.msra.mxu0 0.0
  %1333 = vmatprep.subr.mxu0 0.0
  %1334 = vmatpush1.msra.mxu0 0.0
  %1335 = vmatprep.subr.mxu0 0.0
  %1336 = vmatpush1.msra.mxu0 0.0
  %1337 = vmatprep.subr.mxu0 0.0
  %1338 = vmatpush1.msra.mxu0 0.0
  %1339 = vmatprep.subr.mxu0 0.0
  %1340 = vmatpush1.msra.mxu0 0.0
  %1341 = vmatprep.subr.mxu0 0.0
  %1342 = vmatpush1.msra.mxu0 0.0
  %1343 = vmatprep.subr.mxu0 0.0
  %1344 = vmatpush1.msra.mxu0 0.0
  %1345 = vmatprep.subr.mxu0 0.0
  %1346 = vmatpush1.msra.mxu0 0.0
  %1347 = vmatprep.mubr.f32.mxu0 0.0
  %1348 = vmatmul.mubr.f32.gmra.mrb[0].mxu0 %v1272
  %v1349 = vpop.f32.mrb[0].mxu0
  %v1350 = vadd.f32 0.0, %v1349
  %v1351 = vpop.f32.mrb[0].mxu0
  %1352 = vmatprep.mubr.f32.mxu0 0.0
  %1353 = vmatmul.mubr.f32.gmra.mrb[0].mxu0 %v1275
  %v1354 = vpop.f32.mrb[0].mxu0
  %v1355 = vadd.f32 0.0, %v1354
  %v1356 = vpop.f32.mrb[0].mxu0
  %1357 = vmatprep.mubr.f32.mxu0 0.0
  %1358 = vmatmul.mubr.f32.gmra.mrb[0].mxu0 %v1278
  %v1359 = vpop.f32.mrb[0].mxu0
  %v1360 = vadd.f32 0.0, %v1359
  %v1361 = vpop.f32.mrb[0].mxu0
  %1362 = vmatprep.mubr.f32.mxu0 0.0
  %1363 = vmatmul.mubr.f32.gmra.mrb[0].mxu0 %v1281
  %v1364 = vpop.f32.mrb[0].mxu0
  %v1365 = vadd.f32 0.0, %v1364
  %v1366 = vpop.f32.mrb[0].mxu0
  %1367 = vdwg.mxu0
  %v1369 = vsel %vm424, %v1255, 0
  %v1372 = vsel %vm424, %v1256, 0
  %v1375 = vsel %vm424, %v1257, 0
  %v1378 = vsel %vm424, %v1258, 0
  %1380 = vmatprep.subr.mxu0 0.0
  %1381 = vmatpush1.msra.mxu0 %v1253
  %1382 = vmatprep.subr.mxu0 0.0
  %1383 = vmatpush1.msra.mxu0 %v1254
  %1384 = vmatprep.subr.mxu0 0.0
  %1385 = vmatpush1.msra.mxu0 0.0
  %1386 = vmatprep.subr.mxu0 0.0
  %1387 = vmatpush1.msra.mxu0 0.0
  %1388 = vmatprep.subr.mxu0 0.0
  %1389 = vmatpush1.msra.mxu0 0.0
  %1390 = vmatprep.subr.mxu0 0.0
  %1391 = vmatpush1.msra.mxu0 0.0
  %1392 = vmatprep.subr.mxu0 0.0
  %1393 = vmatpush1.msra.mxu0 0.0
  %1394 = vmatprep.subr.mxu0 0.0
  %1395 = vmatpush1.msra.mxu0 0.0
  %1396 = vmatprep.subr.mxu0 0.0
  %1397 = vmatpush1.msra.mxu0 0.0
  %1398 = vmatprep.subr.mxu0 0.0
  %1399 = vmatpush1.msra.mxu0 0.0
  %1400 = vmatprep.subr.mxu0 0.0
  %1401 = vmatpush1.msra.mxu0 0.0
  %1402 = vmatprep.subr.mxu0 0.0
  %1403 = vmatpush1.msra.mxu0 0.0
  %1404 = vmatprep.subr.mxu0 0.0
  %1405 = vmatpush1.msra.mxu0 0.0
  %1406 = vmatprep.subr.mxu0 0.0
  %1407 = vmatpush1.msra.mxu0 0.0
  %1408 = vmatprep.subr.mxu0 0.0
  %1409 = vmatpush1.msra.mxu0 0.0
  %1410 = vmatprep.subr.mxu0 0.0
  %1411 = vmatpush1.msra.mxu0 0.0
  %1412 = vmatprep.subr.mxu0 0.0
  %1413 = vmatpush1.msra.mxu0 0.0
  %1414 = vmatprep.subr.mxu0 0.0
  %1415 = vmatpush1.msra.mxu0 0.0
  %1416 = vmatprep.subr.mxu0 0.0
  %1417 = vmatpush1.msra.mxu0 0.0
  %1418 = vmatprep.subr.mxu0 0.0
  %1419 = vmatpush1.msra.mxu0 0.0
  %1420 = vmatprep.subr.mxu0 0.0
  %1421 = vmatpush1.msra.mxu0 0.0
  %1422 = vmatprep.subr.mxu0 0.0
  %1423 = vmatpush1.msra.mxu0 0.0
  %1424 = vmatprep.subr.mxu0 0.0
  %1425 = vmatpush1.msra.mxu0 0.0
  %1426 = vmatprep.subr.mxu0 0.0
  %1427 = vmatpush1.msra.mxu0 0.0
  %1428 = vmatprep.subr.mxu0 0.0
  %1429 = vmatpush1.msra.mxu0 0.0
  %1430 = vmatprep.subr.mxu0 0.0
  %1431 = vmatpush1.msra.mxu0 0.0
  %1432 = vmatprep.subr.mxu0 0.0
  %1433 = vmatpush1.msra.mxu0 0.0
  %1434 = vmatprep.subr.mxu0 0.0
  %1435 = vmatpush1.msra.mxu0 0.0
  %1436 = vmatprep.subr.mxu0 0.0
  %1437 = vmatpush1.msra.mxu0 0.0
  %1438 = vmatprep.subr.mxu0 0.0
  %1439 = vmatpush1.msra.mxu0 0.0
  %1440 = vmatprep.subr.mxu0 0.0
  %1441 = vmatpush1.msra.mxu0 0.0
  %1442 = vmatprep.subr.mxu0 0.0
  %1443 = vmatpush1.msra.mxu0 0.0
  %1444 = vmatprep.mubr.f32.mxu0 0.0
  %1445 = vmatmul.mubr.f32.gmra.mrb[0].mxu0 %v1369
  %v1446 = vpop.f32.mrb[0].mxu0
  %v1447 = vadd.f32 %v1350, %v1446
  %v1448 = vpop.f32.mrb[0].mxu0
  %1449 = vmatprep.mubr.f32.mxu0 0.0
  %1450 = vmatmul.mubr.f32.gmra.mrb[0].mxu0 %v1372
  %v1451 = vpop.f32.mrb[0].mxu0
  %v1452 = vadd.f32 %v1355, %v1451
  %v1453 = vpop.f32.mrb[0].mxu0
  %1454 = vmatprep.mubr.f32.mxu0 0.0
  %1455 = vmatmul.mubr.f32.gmra.mrb[0].mxu0 %v1375
  %v1456 = vpop.f32.mrb[0].mxu0
  %v1457 = vadd.f32 %v1360, %v1456
  %v1458 = vpop.f32.mrb[0].mxu0
  %1459 = vmatprep.mubr.f32.mxu0 0.0
  %1460 = vmatmul.mubr.f32.gmra.mrb[0].mxu0 %v1378
  %v1461 = vpop.f32.mrb[0].mxu0
  %v1462 = vadd.f32 %v1365, %v1461
  %v1463 = vpop.f32.mrb[0].mxu0
  %1464 = vdwg.mxu0
  %v1465 = vld [vmem:[%s619] sm:$0xff]
  %v1466 = vld [vmem:[%s619 + $0x8] sm:$0xff]
  %v1467 = vld [vmem:[%s619 + $0x10] sm:$0xff]
  %v1468 = vld [vmem:[%s619 + $0x18] sm:$0xff]
  %1469 = vrot.lane.b32.xlu0 %v1253, 126
  %v1470 = vpop.permute.xlu0 %1469
  %1471 = vrot.lane.b32.xlu0 %v1254, 126
  %v1472 = vpop.permute.xlu0 %1471
  %v1476 = vsel %vm424, %v1465, 0
  %v1479 = vsel %vm424, %v1466, 0
  %v1482 = vsel %vm424, %v1467, 0
  %v1485 = vsel %vm424, %v1468, 0
  %1487 = vmatprep.subr.mxu0 0.0
  %1488 = vmatpush1.msra.mxu0 %v1470
  %1489 = vmatprep.subr.mxu0 0.0
  %1490 = vmatpush1.msra.mxu0 %v1472
  %1491 = vmatprep.subr.mxu0 0.0
  %1492 = vmatpush1.msra.mxu0 0.0
  %1493 = vmatprep.subr.mxu0 0.0
  %1494 = vmatpush1.msra.mxu0 0.0
  %1495 = vmatprep.subr.mxu0 0.0
  %1496 = vmatpush1.msra.mxu0 0.0
  %1497 = vmatprep.subr.mxu0 0.0
  %1498 = vmatpush1.msra.mxu0 0.0
  %1499 = vmatprep.subr.mxu0 0.0
  %1500 = vmatpush1.msra.mxu0 0.0
  %1501 = vmatprep.subr.mxu0 0.0
  %1502 = vmatpush1.msra.mxu0 0.0
  %1503 = vmatprep.subr.mxu0 0.0
  %1504 = vmatpush1.msra.mxu0 0.0
  %1505 = vmatprep.subr.mxu0 0.0
  %1506 = vmatpush1.msra.mxu0 0.0
  %1507 = vmatprep.subr.mxu0 0.0
  %1508 = vmatpush1.msra.mxu0 0.0
  %1509 = vmatprep.subr.mxu0 0.0
  %1510 = vmatpush1.msra.mxu0 0.0
  %1511 = vmatprep.subr.mxu0 0.0
  %1512 = vmatpush1.msra.mxu0 0.0
  %1513 = vmatprep.subr.mxu0 0.0
  %1514 = vmatpush1.msra.mxu0 0.0
  %1515 = vmatprep.subr.mxu0 0.0
  %1516 = vmatpush1.msra.mxu0 0.0
  %1517 = vmatprep.subr.mxu0 0.0
  %1518 = vmatpush1.msra.mxu0 0.0
  %1519 = vmatprep.subr.mxu0 0.0
  %1520 = vmatpush1.msra.mxu0 0.0
  %1521 = vmatprep.subr.mxu0 0.0
  %1522 = vmatpush1.msra.mxu0 0.0
  %1523 = vmatprep.subr.mxu0 0.0
  %1524 = vmatpush1.msra.mxu0 0.0
  %1525 = vmatprep.subr.mxu0 0.0
  %1526 = vmatpush1.msra.mxu0 0.0
  %1527 = vmatprep.subr.mxu0 0.0
  %1528 = vmatpush1.msra.mxu0 0.0
  %1529 = vmatprep.subr.mxu0 0.0
  %1530 = vmatpush1.msra.mxu0 0.0
  %1531 = vmatprep.subr.mxu0 0.0
  %1532 = vmatpush1.msra.mxu0 0.0
  %1533 = vmatprep.subr.mxu0 0.0
  %1534 = vmatpush1.msra.mxu0 0.0
  %1535 = vmatprep.subr.mxu0 0.0
  %1536 = vmatpush1.msra.mxu0 0.0
  %1537 = vmatprep.subr.mxu0 0.0
  %1538 = vmatpush1.msra.mxu0 0.0
  %1539 = vmatprep.subr.mxu0 0.0
  %1540 = vmatpush1.msra.mxu0 0.0
  %1541 = vmatprep.subr.mxu0 0.0
  %1542 = vmatpush1.msra.mxu0 0.0
  %1543 = vmatprep.subr.mxu0 0.0
  %1544 = vmatpush1.msra.mxu0 0.0
  %1545 = vmatprep.subr.mxu0 0.0
  %1546 = vmatpush1.msra.mxu0 0.0
  %1547 = vmatprep.subr.mxu0 0.0
  %1548 = vmatpush1.msra.mxu0 0.0
  %1549 = vmatprep.subr.mxu0 0.0
  %1550 = vmatpush1.msra.mxu0 0.0
  %1551 = vmatprep.mubr.f32.mxu0 0.0
  %1552 = vmatmul.mubr.f32.gmra.mrb[0].mxu0 %v1476
  %v1553 = vpop.f32.mrb[0].mxu0
  %v1554 = vadd.f32 0.0, %v1553
  %v1555 = vpop.f32.mrb[0].mxu0
  %1556 = vmatprep.mubr.f32.mxu0 0.0
  %1557 = vmatmul.mubr.f32.gmra.mrb[0].mxu0 %v1479
  %v1558 = vpop.f32.mrb[0].mxu0
  %v1559 = vadd.f32 0.0, %v1558
  %v1560 = vpop.f32.mrb[0].mxu0
  %1561 = vmatprep.mubr.f32.mxu0 0.0
  %1562 = vmatmul.mubr.f32.gmra.mrb[0].mxu0 %v1482
  %v1563 = vpop.f32.mrb[0].mxu0
  %v1564 = vadd.f32 0.0, %v1563
  %v1565 = vpop.f32.mrb[0].mxu0
  %1566 = vmatprep.mubr.f32.mxu0 0.0
  %1567 = vmatmul.mubr.f32.gmra.mrb[0].mxu0 %v1485
  %v1568 = vpop.f32.mrb[0].mxu0
  %v1569 = vadd.f32 0.0, %v1568
  %v1570 = vpop.f32.mrb[0].mxu0
  %1571 = vdwg.mxu0
  %v1572 = vadd.f32 %v1447, %v1554
  %v1573 = vadd.f32 %v1452, %v1559
  %v1574 = vadd.f32 %v1457, %v1564
  %v1575 = vadd.f32 %v1462, %v1569
  %v1576 = vld [vmem:[%s731] sm:$0xff]
  %v1577 = vld [vmem:[%s731 + $0x8] sm:$0xff]
  %v1578 = vld [vmem:[%s731 + $0x10] sm:$0xff]
  %v1579 = vld [vmem:[%s731 + $0x18] sm:$0xff]
  %1580 = vrot.lane.b32.xlu0 %v1253, 125
  %v1581 = vpop.permute.xlu0 %1580
  %1582 = vrot.lane.b32.xlu0 %v1254, 125
  %v1583 = vpop.permute.xlu0 %1582
  %v1587 = vsel %vm424, %v1576, 0
  %v1590 = vsel %vm424, %v1577, 0
  %v1593 = vsel %vm424, %v1578, 0
  %v1596 = vsel %vm424, %v1579, 0
  %1598 = vmatprep.subr.mxu0 0.0
  %1599 = vmatpush1.msra.mxu0 %v1581
  %1600 = vmatprep.subr.mxu0 0.0
  %1601 = vmatpush1.msra.mxu0 %v1583
  %1602 = vmatprep.subr.mxu0 0.0
  %1603 = vmatpush1.msra.mxu0 0.0
  %1604 = vmatprep.subr.mxu0 0.0
  %1605 = vmatpush1.msra.mxu0 0.0
  %1606 = vmatprep.subr.mxu0 0.0
  %1607 = vmatpush1.msra.mxu0 0.0
  %1608 = vmatprep.subr.mxu0 0.0
  %1609 = vmatpush1.msra.mxu0 0.0
  %1610 = vmatprep.subr.mxu0 0.0
  %1611 = vmatpush1.msra.mxu0 0.0
  %1612 = vmatprep.subr.mxu0 0.0
  %1613 = vmatpush1.msra.mxu0 0.0
  %1614 = vmatprep.subr.mxu0 0.0
  %1615 = vmatpush1.msra.mxu0 0.0
  %1616 = vmatprep.subr.mxu0 0.0
  %1617 = vmatpush1.msra.mxu0 0.0
  %1618 = vmatprep.subr.mxu0 0.0
  %1619 = vmatpush1.msra.mxu0 0.0
  %1620 = vmatprep.subr.mxu0 0.0
  %1621 = vmatpush1.msra.mxu0 0.0
  %1622 = vmatprep.subr.mxu0 0.0
  %1623 = vmatpush1.msra.mxu0 0.0
  %1624 = vmatprep.subr.mxu0 0.0
  %1625 = vmatpush1.msra.mxu0 0.0
  %1626 = vmatprep.subr.mxu0 0.0
  %1627 = vmatpush1.msra.mxu0 0.0
  %1628 = vmatprep.subr.mxu0 0.0
  %1629 = vmatpush1.msra.mxu0 0.0
  %1630 = vmatprep.subr.mxu0 0.0
  %1631 = vmatpush1.msra.mxu0 0.0
  %1632 = vmatprep.subr.mxu0 0.0
  %1633 = vmatpush1.msra.mxu0 0.0
  %1634 = vmatprep.subr.mxu0 0.0
  %1635 = vmatpush1.msra.mxu0 0.0
  %1636 = vmatprep.subr.mxu0 0.0
  %1637 = vmatpush1.msra.mxu0 0.0
  %1638 = vmatprep.subr.mxu0 0.0
  %1639 = vmatpush1.msra.mxu0 0.0
  %1640 = vmatprep.subr.mxu0 0.0
  %1641 = vmatpush1.msra.mxu0 0.0
  %1642 = vmatprep.subr.mxu0 0.0
  %1643 = vmatpush1.msra.mxu0 0.0
  %1644 = vmatprep.subr.mxu0 0.0
  %1645 = vmatpush1.msra.mxu0 0.0
  %1646 = vmatprep.subr.mxu0 0.0
  %1647 = vmatpush1.msra.mxu0 0.0
  %1648 = vmatprep.subr.mxu0 0.0
  %1649 = vmatpush1.msra.mxu0 0.0
  %1650 = vmatprep.subr.mxu0 0.0
  %1651 = vmatpush1.msra.mxu0 0.0
  %1652 = vmatprep.subr.mxu0 0.0
  %1653 = vmatpush1.msra.mxu0 0.0
  %1654 = vmatprep.subr.mxu0 0.0
  %1655 = vmatpush1.msra.mxu0 0.0
  %1656 = vmatprep.subr.mxu0 0.0
  %1657 = vmatpush1.msra.mxu0 0.0
  %1658 = vmatprep.subr.mxu0 0.0
  %1659 = vmatpush1.msra.mxu0 0.0
  %1660 = vmatprep.subr.mxu0 0.0
  %1661 = vmatpush1.msra.mxu0 0.0
  %1662 = vmatprep.mubr.f32.mxu0 0.0
  %1663 = vmatmul.mubr.f32.gmra.mrb[0].mxu0 %v1587
  %v1664 = vpop.f32.mrb[0].mxu0
  %v1665 = vadd.f32 0.0, %v1664
  %v1666 = vpop.f32.mrb[0].mxu0
  %1667 = vmatprep.mubr.f32.mxu0 0.0
  %1668 = vmatmul.mubr.f32.gmra.mrb[0].mxu0 %v1590
  %v1669 = vpop.f32.mrb[0].mxu0
  %v1670 = vadd.f32 0.0, %v1669
  %v1671 = vpop.f32.mrb[0].mxu0
  %1672 = vmatprep.mubr.f32.mxu0 0.0
  %1673 = vmatmul.mubr.f32.gmra.mrb[0].mxu0 %v1593
  %v1674 = vpop.f32.mrb[0].mxu0
  %v1675 = vadd.f32 0.0, %v1674
  %v1676 = vpop.f32.mrb[0].mxu0
  %1677 = vmatprep.mubr.f32.mxu0 0.0
  %1678 = vmatmul.mubr.f32.gmra.mrb[0].mxu0 %v1596
  %v1679 = vpop.f32.mrb[0].mxu0
  %v1680 = vadd.f32 0.0, %v1679
  %v1681 = vpop.f32.mrb[0].mxu0
  %1682 = vdwg.mxu0
  %v1683 = vadd.f32 %v1572, %v1665
  %v1684 = vadd.f32 %v1573, %v1670
  %v1685 = vadd.f32 %v1574, %v1675
  %v1686 = vadd.f32 %v1575, %v1680
  %v1687 = vmul.f32 %v1683, %v846
  %v1688 = vmul.f32 %v1684, %v851
  %v1689 = vmul.f32 %v1685, %v856
  %v1690 = vmul.f32 %v1686, %v861
  %v1691 = vadd.f32 %v1687, %v869
  %v1692 = vadd.f32 %v1688, %v873
  %v1693 = vadd.f32 %v1689, %v877
  %v1694 = vadd.f32 %v1690, %v881
  %v1695 = vmax.f32 %v1691, 0.0
  %v1696 = vmax.f32 %v1692, 0.0
  %v1697 = vmax.f32 %v1693, 0.0
  %v1698 = vmax.f32 %v1694, 0.0
  %s1699 = scalar_lea.vmem %s5, 32
  %1700 = vst.msk [vmem:[%s1699] sm:$0xff] %vm891, %v1695
  %1701 = vst.msk [vmem:[%s1699 + $0x8] sm:$0xff] %vm891, %v1696
  %1702 = vst.msk [vmem:[%s1699 + $0x10] sm:$0xff] %vm891, %v1697
  %1703 = vst.msk [vmem:[%s1699 + $0x18] sm:$0xff] %vm891, %v1698
  // Predicated region
  $region22: #{crnn_forward.2} parent=0 // pred_check
    _
  $region23: #{crnn_forward.2} parent=0 // pred_check_branch
    %1705 = sbr.rel (0) target = $region25
  $region24: #{crnn_forward.2} parent=0 // pred_region
    _
  $region25: #{crnn_forward.2} parent=0 // pred_fallthru
    _
  // Predicated region
  $region26: #{crnn_forward.2} parent=0 // pred_check
    _
  $region27: #{crnn_forward.2} parent=0 // pred_check_branch
    %1707 = sbr.rel (0) target = $region29
  $region28: #{crnn_forward.2} parent=0 // pred_region
    _
  $region29: #{crnn_forward.2} parent=0 // pred_fallthru
    _

// kernel: crnn_forward.3
$region0: #{crnn_forward.3}
  #allocation0 [shape = 'u32[]', space=smem, size = 0x4, offset = 0x4, fixed_abs, tag = 'smem constant byte address 0x4 - core index']
  #allocation1 [shape = 'u32[144,128]{1,0:T(1,128)}', space=vmem, size = 0x12000, scoped, tag = 'internal scratch']
  %s0 = inlined_call_operand.vmem [shape: f32[80,32], index: 0, kind: input, shape index: {}]
  %s1 = inlined_call_operand.vmem [shape: f32[32,256], index: 1, kind: input, shape index: {}]
  %s2 = inlined_call_operand.vmem [shape: f32[64,256], index: 2, kind: input, shape index: {}]
  %s3 = inlined_call_operand.vmem [shape: f32[1,256], index: 3, kind: input, shape index: {}]
  %s4 = inlined_call_operand.vmem [shape: f32[32,256], index: 4, kind: input, shape index: {}]
  %s5 = inlined_call_operand.vmem [shape: f32[1,256], index: 5, kind: input, shape index: {}]
  %s6 = inlined_call_operand.vmem [shape: f32[64,32], index: 6, kind: input, shape index: {}]
  %s7 = inlined_call_operand.vmem [shape: f32[64,32], index: 7, kind: input, shape index: {}]
  %s8 = inlined_call_operand.vmem [shape: f32[1,32], index: 8, kind: input, shape index: {}]
  %s9 = inlined_call_operand.vmem [shape: f32[32,5], index: 9, kind: input, shape index: {}]
  %s10 = inlined_call_operand.vmem [shape: f32[1,5], index: 10, kind: input, shape index: {}]
  %s11 = inlined_call_operand.hbm [shape: f32[2,5], index: 11, kind: output, shape index: {}]
  %s12 = sld [smem:[#allocation0]]
  $region54: #{crnn_forward.3} parent=0
    _
  %s14 = ssub.s32 1, %s12
  %s15 = scalar_select 0, %s14, %s12
  $region1: #{crnn_forward.3} parent=0
    #allocation2 [shape = 'u8[1024]{0}', space=vmem, size = 0x400, scoped, tag = 'output window, operand 0, single buffered']
    #allocation3 [shape = 's32[1]{0}', space=sflag, size = 0x4, scoped, tag = 'scoped memory for crnn_forward.3']
    %16 = vsyncpa [#allocation3], 0
    // Predicated region
    $region2: #{crnn_forward.3} parent=1 // pred_check
      _
    $region3: #{crnn_forward.3} parent=1 // pred_check_branch
      %18 = sbr.rel (0) target = $region5
    $region4: #{crnn_forward.3} parent=1 // pred_region
      _
    $region5: #{crnn_forward.3} parent=1 // pred_fallthru
      _
    // Predicated region
    $region6: #{crnn_forward.3} parent=1 // pred_check
      _
    $region7: #{crnn_forward.3} parent=1 // pred_check_branch
      %20 = sbr.rel (0) target = $region9
    $region8: #{crnn_forward.3} parent=1 // pred_region
      _
    $region9: #{crnn_forward.3} parent=1 // pred_fallthru
      _
    // Predicated region
    $region10: #{crnn_forward.3} parent=1 // pred_check
      _
    $region11: #{crnn_forward.3} parent=1 // pred_check_branch
      %22 = sbr.rel (0) target = $region13
    $region12: #{crnn_forward.3} parent=1 // pred_region
      _
    $region13: #{crnn_forward.3} parent=1 // pred_fallthru
      _
    // Predicated region
    $region14: #{crnn_forward.3} parent=1 // pred_check
      _
    $region15: #{crnn_forward.3} parent=1 // pred_check_branch
      %24 = sbr.rel (0) target = $region17
    $region16: #{crnn_forward.3} parent=1 // pred_region
      _
    $region17: #{crnn_forward.3} parent=1 // pred_fallthru
      _
    // Predicated region
    $region18: #{crnn_forward.3} parent=1 // pred_check
      _
    $region19: #{crnn_forward.3} parent=1 // pred_check_branch
      %26 = sbr.rel (0) target = $region21
    $region20: #{crnn_forward.3} parent=1 // pred_region
      _
    $region21: #{crnn_forward.3} parent=1 // pred_fallthru
      _
    // Predicated region
    $region22: #{crnn_forward.3} parent=1 // pred_check
      _
    $region23: #{crnn_forward.3} parent=1 // pred_check_branch
      %28 = sbr.rel (0) target = $region25
    $region24: #{crnn_forward.3} parent=1 // pred_region
      _
    $region25: #{crnn_forward.3} parent=1 // pred_fallthru
      _
    // Predicated region
    $region26: #{crnn_forward.3} parent=1 // pred_check
      _
    $region27: #{crnn_forward.3} parent=1 // pred_check_branch
      %30 = sbr.rel (0) target = $region29
    $region28: #{crnn_forward.3} parent=1 // pred_region
      _
    $region29: #{crnn_forward.3} parent=1 // pred_fallthru
      _
    // Predicated region
    $region30: #{crnn_forward.3} parent=1 // pred_check
      _
    $region31: #{crnn_forward.3} parent=1 // pred_check_branch
      %32 = sbr.rel (0) target = $region33
    $region32: #{crnn_forward.3} parent=1 // pred_region
      _
    $region33: #{crnn_forward.3} parent=1 // pred_fallthru
      _
    // Predicated region
    $region34: #{crnn_forward.3} parent=1 // pred_check
      _
    $region35: #{crnn_forward.3} parent=1 // pred_check_branch
      %34 = sbr.rel (0) target = $region37
    $region36: #{crnn_forward.3} parent=1 // pred_region
      _
    $region37: #{crnn_forward.3} parent=1 // pred_fallthru
      _
    // Predicated region
    $region38: #{crnn_forward.3} parent=1 // pred_check
      _
    $region39: #{crnn_forward.3} parent=1 // pred_check_branch
      %36 = sbr.rel (0) target = $region41
    $region40: #{crnn_forward.3} parent=1 // pred_region
      _
    $region41: #{crnn_forward.3} parent=1 // pred_fallthru
      _
    // Predicated region
    $region42: #{crnn_forward.3} parent=1 // pred_check
      _
    $region43: #{crnn_forward.3} parent=1 // pred_check_branch
      %38 = sbr.rel (0) target = $region45
    $region44: #{crnn_forward.3} parent=1 // pred_region
      _
    $region45: #{crnn_forward.3} parent=1 // pred_fallthru
      _
    %v39 = vld [vmem:[%s0] sm:$0xff]
    %v40 = vld [vmem:[%s0 + $0x8] sm:$0xff]
    %v41 = vld [vmem:[%s0 + $0x10] sm:$0xff]
    %v42 = vld [vmem:[%s0 + $0x18] sm:$0xff]
    %v43 = vld [vmem:[%s0 + $0x20] sm:$0xff]
    %v44 = vld [vmem:[%s0 + $0x28] sm:$0xff]
    %v45 = vld [vmem:[%s0 + $0x30] sm:$0xff]
    %v46 = vld [vmem:[%s0 + $0x38] sm:$0xff]
    %v47 = vld [vmem:[%s0 + $0x40] sm:$0xff]
    %v48 = vld [vmem:[%s0 + $0x48] sm:$0xff]
    %v49 = vld [vmem:[%s1] sm:$0xff]
    %v50 = vld [vmem:[%s1 + $0x8] sm:$0xff]
    %v51 = vld [vmem:[%s1 + $0x10] sm:$0xff]
    %v52 = vld [vmem:[%s1 + $0x18] sm:$0xff]
    %v53 = vld [vmem:[%s1 + $0x20] sm:$0xff]
    %v54 = vld [vmem:[%s1 + $0x28] sm:$0xff]
    %v55 = vld [vmem:[%s1 + $0x30] sm:$0xff]
    %v56 = vld [vmem:[%s1 + $0x38] sm:$0xff]
    %v57 = vld [vmem:[%s3] sm:$0x3]
    %v59 = vlaneseq
    %v60 = vshrl.u32 %v59, 7
    %v61 = vsub.s32 0, %v60
    %v62 = vrot.slane %v57, %v61
    %v63 = vlaneseq
    %v64 = vshrl.u32 %v63, 7
    %v65 = vsub.s32 1, %v64
    %v66 = vrot.slane %v57, %v65
    %vm69 = vcmask 261120
    %v71 = vsel %vm69, %v39, 0
    %v74 = vsel %vm69, %v40, 0
    %v77 = vsel %vm69, %v41, 0
    %v80 = vsel %vm69, %v42, 0
    %v83 = vsel %vm69, %v43, 0
    %v86 = vsel %vm69, %v44, 0
    %v89 = vsel %vm69, %v45, 0
    %v92 = vsel %vm69, %v46, 0
    %v95 = vsel %vm69, %v47, 0
    %v98 = vsel %vm69, %v48, 0
    %100 = vmatprep.subr.mxu0 %v50
    %101 = vmatpush1.msra.mxu0 %v49
    %102 = vmatprep.subr.mxu0 %v52
    %103 = vmatpush1.msra.mxu0 %v51
    %104 = vmatprep.subr.mxu0 %v54
    %105 = vmatpush1.msra.mxu0 %v53
    %106 = vmatprep.subr.mxu0 %v56
    %107 = vmatpush1.msra.mxu0 %v55
    %108 = vmatprep.subr.mxu0 0.0
    %109 = vmatpush1.msra.mxu0 0.0
    %110 = vmatprep.subr.mxu0 0.0
    %111 = vmatpush1.msra.mxu0 0.0
    %112 = vmatprep.subr.mxu0 0.0
    %113 = vmatpush1.msra.mxu0 0.0
    %114 = vmatprep.subr.mxu0 0.0
    %115 = vmatpush1.msra.mxu0 0.0
    %116 = vmatprep.subr.mxu0 0.0
    %117 = vmatpush1.msra.mxu0 0.0
    %118 = vmatprep.subr.mxu0 0.0
    %119 = vmatpush1.msra.mxu0 0.0
    %120 = vmatprep.subr.mxu0 0.0
    %121 = vmatpush1.msra.mxu0 0.0
    %122 = vmatprep.subr.mxu0 0.0
    %123 = vmatpush1.msra.mxu0 0.0
    %124 = vmatprep.subr.mxu0 0.0
    %125 = vmatpush1.msra.mxu0 0.0
    %126 = vmatprep.subr.mxu0 0.0
    %127 = vmatpush1.msra.mxu0 0.0
    %128 = vmatprep.subr.mxu0 0.0
    %129 = vmatpush1.msra.mxu0 0.0
    %130 = vmatprep.subr.mxu0 0.0
    %131 = vmatpush1.msra.mxu0 0.0
    %132 = vmatprep.subr.mxu0 0.0
    %133 = vmatpush1.msra.mxu0 0.0
    %134 = vmatprep.subr.mxu0 0.0
    %135 = vmatpush1.msra.mxu0 0.0
    %136 = vmatprep.subr.mxu0 0.0
    %137 = vmatpush1.msra.mxu0 0.0
    %138 = vmatprep.subr.mxu0 0.0
    %139 = vmatpush1.msra.mxu0 0.0
    %140 = vmatprep.subr.mxu0 0.0
    %141 = vmatpush1.msra.mxu0 0.0
    %142 = vmatprep.subr.mxu0 0.0
    %143 = vmatpush1.msra.mxu0 0.0
    %144 = vmatprep.subr.mxu0 0.0
    %145 = vmatpush1.msra.mxu0 0.0
    %146 = vmatprep.subr.mxu0 0.0
    %147 = vmatpush1.msra.mxu0 0.0
    %148 = vmatprep.subr.mxu0 0.0
    %149 = vmatpush1.msra.mxu0 0.0
    %150 = vmatprep.subr.mxu0 0.0
    %151 = vmatpush1.msra.mxu0 0.0
    %152 = vmatprep.subr.mxu0 0.0
    %153 = vmatpush1.msra.mxu0 0.0
    %154 = vmatprep.subr.mxu0 0.0
    %155 = vmatpush1.msra.mxu0 0.0
    %156 = vmatprep.subr.mxu0 0.0
    %157 = vmatpush1.msra.mxu0 0.0
    %158 = vmatprep.subr.mxu0 0.0
    %159 = vmatpush1.msra.mxu0 0.0
    %160 = vmatprep.subr.mxu0 0.0
    %161 = vmatpush1.msra.mxu0 0.0
    %162 = vmatprep.subr.mxu0 0.0
    %163 = vmatpush1.msra.mxu0 0.0
    %164 = vmatprep.mubr.f32.mxu0 0.0
    %165 = vmatmul.mubr.f32.gmra.mrb[0].mxu0 %v71
    %v166 = vpop.f32.mrb[0].mxu0
    %v167 = vadd.f32 %v62, %v166
    %v168 = vpop.f32.mrb[0].mxu0
    %v169 = vadd.f32 %v66, %v168
    %170 = vmatprep.mubr.f32.mxu0 0.0
    %171 = vmatmul.mubr.f32.gmra.mrb[0].mxu0 %v74
    %v172 = vpop.f32.mrb[0].mxu0
    %v173 = vadd.f32 %v62, %v172
    %v174 = vpop.f32.mrb[0].mxu0
    %v175 = vadd.f32 %v66, %v174
    %176 = vmatprep.mubr.f32.mxu0 0.0
    %177 = vmatmul.mubr.f32.gmra.mrb[0].mxu0 %v77
    %v178 = vpop.f32.mrb[0].mxu0
    %v179 = vadd.f32 %v62, %v178
    %v180 = vpop.f32.mrb[0].mxu0
    %v181 = vadd.f32 %v66, %v180
    %182 = vmatprep.mubr.f32.mxu0 0.0
    %183 = vmatmul.mubr.f32.gmra.mrb[0].mxu0 %v80
    %v184 = vpop.f32.mrb[0].mxu0
    %v185 = vadd.f32 %v62, %v184
    %v186 = vpop.f32.mrb[0].mxu0
    %v187 = vadd.f32 %v66, %v186
    %188 = vmatprep.mubr.f32.mxu0 0.0
    %189 = vmatmul.mubr.f32.gmra.mrb[0].mxu0 %v83
    %v190 = vpop.f32.mrb[0].mxu0
    %v191 = vadd.f32 %v62, %v190
    %v192 = vpop.f32.mrb[0].mxu0
    %v193 = vadd.f32 %v66, %v192
    %194 = vmatprep.mubr.f32.mxu0 0.0
    %195 = vmatmul.mubr.f32.gmra.mrb[0].mxu0 %v86
    %v196 = vpop.f32.mrb[0].mxu0
    %v197 = vadd.f32 %v62, %v196
    %v198 = vpop.f32.mrb[0].mxu0
    %v199 = vadd.f32 %v66, %v198
    %200 = vmatprep.mubr.f32.mxu0 0.0
    %201 = vmatmul.mubr.f32.gmra.mrb[0].mxu0 %v89
    %v202 = vpop.f32.mrb[0].mxu0
    %v203 = vadd.f32 %v62, %v202
    %v204 = vpop.f32.mrb[0].mxu0
    %v205 = vadd.f32 %v66, %v204
    %206 = vmatprep.mubr.f32.mxu0 0.0
    %207 = vmatmul.mubr.f32.gmra.mrb[0].mxu0 %v92
    %v208 = vpop.f32.mrb[0].mxu0
    %v209 = vadd.f32 %v62, %v208
    %v210 = vpop.f32.mrb[0].mxu0
    %v211 = vadd.f32 %v66, %v210
    %212 = vmatprep.mubr.f32.mxu0 0.0
    %213 = vmatmul.mubr.f32.gmra.mrb[0].mxu0 %v95
    %v214 = vpop.f32.mrb[0].mxu0
    %v215 = vadd.f32 %v62, %v214
    %v216 = vpop.f32.mrb[0].mxu0
    %v217 = vadd.f32 %v66, %v216
    %218 = vmatprep.mubr.f32.mxu0 0.0
    %219 = vmatmul.mubr.f32.gmra.mrb[0].mxu0 %v98
    %v220 = vpop.f32.mrb[0].mxu0
    %v221 = vadd.f32 %v62, %v220
    %v222 = vpop.f32.mrb[0].mxu0
    %v223 = vadd.f32 %v66, %v222
    %224 = vdwg.mxu0
    %v225 = vld [vmem:[%s2] sm:$0xff]
    %v226 = vld [vmem:[%s2 + $0x8] sm:$0xff]
    %v227 = vld [vmem:[%s2 + $0x10] sm:$0xff]
    %v228 = vld [vmem:[%s2 + $0x18] sm:$0xff]
    %v229 = vld [vmem:[%s2 + $0x20] sm:$0xff]
    %v230 = vld [vmem:[%s2 + $0x28] sm:$0xff]
    %v231 = vld [vmem:[%s2 + $0x30] sm:$0xff]
    %v232 = vld [vmem:[%s2 + $0x38] sm:$0xff]
    %v233 = vld [vmem:[%s2 + $0x40] sm:$0xff]
    %v234 = vld [vmem:[%s2 + $0x48] sm:$0xff]
    %v235 = vld [vmem:[%s2 + $0x50] sm:$0xff]
    %v236 = vld [vmem:[%s2 + $0x58] sm:$0xff]
    %v237 = vld [vmem:[%s2 + $0x60] sm:$0xff]
    %v238 = vld [vmem:[%s2 + $0x68] sm:$0xff]
    %v239 = vld [vmem:[%s2 + $0x70] sm:$0xff]
    %v240 = vld [vmem:[%s2 + $0x78] sm:$0xff]
    %vm241 = vcmask 523264
    %v243 = vsel %vm241, 0.0, 0
    %245 = vmatprep.subr.mxu0 %v226
    %246 = vmatpush1.msra.mxu0 %v225
    %247 = vmatprep.subr.mxu0 %v228
    %248 = vmatpush1.msra.mxu0 %v227
    %249 = vmatprep.subr.mxu0 %v230
    %250 = vmatpush1.msra.mxu0 %v229
    %251 = vmatprep.subr.mxu0 %v232
    %252 = vmatpush1.msra.mxu0 %v231
    %253 = vmatprep.subr.mxu0 %v234
    %254 = vmatpush1.msra.mxu0 %v233
    %255 = vmatprep.subr.mxu0 %v236
    %256 = vmatpush1.msra.mxu0 %v235
    %257 = vmatprep.subr.mxu0 %v238
    %258 = vmatpush1.msra.mxu0 %v237
    %259 = vmatprep.subr.mxu0 %v240
    %260 = vmatpush1.msra.mxu0 %v239
    %261 = vmatprep.subr.mxu0 0.0
    %262 = vmatpush1.msra.mxu0 0.0
    %263 = vmatprep.subr.mxu0 0.0
    %264 = vmatpush1.msra.mxu0 0.0
    %265 = vmatprep.subr.mxu0 0.0
    %266 = vmatpush1.msra.mxu0 0.0
    %267 = vmatprep.subr.mxu0 0.0
    %268 = vmatpush1.msra.mxu0 0.0
    %269 = vmatprep.subr.mxu0 0.0
    %270 = vmatpush1.msra.mxu0 0.0
    %271 = vmatprep.subr.mxu0 0.0
    %272 = vmatpush1.msra.mxu0 0.0
    %273 = vmatprep.subr.mxu0 0.0
    %274 = vmatpush1.msra.mxu0 0.0
    %275 = vmatprep.subr.mxu0 0.0
    %276 = vmatpush1.msra.mxu0 0.0
    %277 = vmatprep.subr.mxu0 0.0
    %278 = vmatpush1.msra.mxu0 0.0
    %279 = vmatprep.subr.mxu0 0.0
    %280 = vmatpush1.msra.mxu0 0.0
    %281 = vmatprep.subr.mxu0 0.0
    %282 = vmatpush1.msra.mxu0 0.0
    %283 = vmatprep.subr.mxu0 0.0
    %284 = vmatpush1.msra.mxu0 0.0
    %285 = vmatprep.subr.mxu0 0.0
    %286 = vmatpush1.msra.mxu0 0.0
    %287 = vmatprep.subr.mxu0 0.0
    %288 = vmatpush1.msra.mxu0 0.0
    %289 = vmatprep.subr.mxu0 0.0
    %290 = vmatpush1.msra.mxu0 0.0
    %291 = vmatprep.subr.mxu0 0.0
    %292 = vmatpush1.msra.mxu0 0.0
    %293 = vmatprep.subr.mxu0 0.0
    %294 = vmatpush1.msra.mxu0 0.0
    %295 = vmatprep.subr.mxu0 0.0
    %296 = vmatpush1.msra.mxu0 0.0
    %297 = vmatprep.subr.mxu0 0.0
    %298 = vmatpush1.msra.mxu0 0.0
    %299 = vmatprep.subr.mxu0 0.0
    %300 = vmatpush1.msra.mxu0 0.0
    %301 = vmatprep.subr.mxu0 0.0
    %302 = vmatpush1.msra.mxu0 0.0
    %303 = vmatprep.subr.mxu0 0.0
    %304 = vmatpush1.msra.mxu0 0.0
    %305 = vmatprep.subr.mxu0 0.0
    %306 = vmatpush1.msra.mxu0 0.0
    %307 = vmatprep.subr.mxu0 0.0
    %308 = vmatpush1.msra.mxu0 0.0
    %309 = vmatprep.mubr.f32.mxu0 0.0
    %310 = vmatmul.mubr.f32.gmra.mrb[0].mxu0 %v243
    %v311 = vpop.f32.mrb[0].mxu0
    %v312 = vadd.f32 0.0, %v311
    %v313 = vpop.f32.mrb[0].mxu0
    %v314 = vadd.f32 0.0, %v313
    %315 = vdwg.mxu0
    %v316 = vadd.f32 %v167, %v312
    %v317 = vadd.f32 %v169, %v314
    %v318 = vxor.u32 %v316, 2147483648
    %v319 = vxor.u32 %v317, 2147483648
    %v320 = vmul.f32 %v318, 1.442695
    %v321 = vpow.pop %v320
    %v322 = vmul.f32 %v319, 1.442695
    %v323 = vpow.pop %v322
    %v324 = vadd.f32 %v321, 1.0
    %v325 = vadd.f32 %v323, 1.0
    %v326 = vrcp.pop %v324
    %v327 = vmul.f32 1.0, %v326
    %v328 = vrcp.pop %v325
    %v329 = vmul.f32 1.0, %v328
    %v330 = vtanh.pop %v317
    %v331 = vmul.f32 %v327, 0.0
    %v332 = vmul.f32 %v327, %v330
    %334 = vrot.lane.b32.xlu0 %v332, 64
    %v335 = vpop.permute.xlu0 %334
    %v337 = vadd.f32 %v331, %v335
    %v338 = vtanh.pop %v337
    %v339 = vmul.f32 %v329, %v338
    %341 = vrot.lane.b32.xlu0 %v339, 64
    %v342 = vpop.permute.xlu0 %341
    %v343 = vsel %vm241, %v342, 0
    %345 = vmatprep.subr.mxu0 %v226
    %346 = vmatpush1.msra.mxu0 %v225
    %347 = vmatprep.subr.mxu0 %v228
    %348 = vmatpush1.msra.mxu0 %v227
    %349 = vmatprep.subr.mxu0 %v230
    %350 = vmatpush1.msra.mxu0 %v229
    %351 = vmatprep.subr.mxu0 %v232
    %352 = vmatpush1.msra.mxu0 %v231
    %353 = vmatprep.subr.mxu0 %v234
    %354 = vmatpush1.msra.mxu0 %v233
    %355 = vmatprep.subr.mxu0 %v236
    %356 = vmatpush1.msra.mxu0 %v235
    %357 = vmatprep.subr.mxu0 %v238
    %358 = vmatpush1.msra.mxu0 %v237
    %359 = vmatprep.subr.mxu0 %v240
    %360 = vmatpush1.msra.mxu0 %v239
    %361 = vmatprep.subr.mxu0 0.0
    %362 = vmatpush1.msra.mxu0 0.0
    %363 = vmatprep.subr.mxu0 0.0
    %364 = vmatpush1.msra.mxu0 0.0
    %365 = vmatprep.subr.mxu0 0.0
    %366 = vmatpush1.msra.mxu0 0.0
    %367 = vmatprep.subr.mxu0 0.0
    %368 = vmatpush1.msra.mxu0 0.0
    %369 = vmatprep.subr.mxu0 0.0
    %370 = vmatpush1.msra.mxu0 0.0
    %371 = vmatprep.subr.mxu0 0.0
    %372 = vmatpush1.msra.mxu0 0.0
    %373 = vmatprep.subr.mxu0 0.0
    %374 = vmatpush1.msra.mxu0 0.0
    %375 = vmatprep.subr.mxu0 0.0
    %376 = vmatpush1.msra.mxu0 0.0
    %377 = vmatprep.subr.mxu0 0.0
    %378 = vmatpush1.msra.mxu0 0.0
    %379 = vmatprep.subr.mxu0 0.0
    %380 = vmatpush1.msra.mxu0 0.0
    %381 = vmatprep.subr.mxu0 0.0
    %382 = vmatpush1.msra.mxu0 0.0
    %383 = vmatprep.subr.mxu0 0.0
    %384 = vmatpush1.msra.mxu0 0.0
    %385 = vmatprep.subr.mxu0 0.0
    %386 = vmatpush1.msra.mxu0 0.0
    %387 = vmatprep.subr.mxu0 0.0
    %388 = vmatpush1.msra.mxu0 0.0
    %389 = vmatprep.subr.mxu0 0.0
    %390 = vmatpush1.msra.mxu0 0.0
    %391 = vmatprep.subr.mxu0 0.0
    %392 = vmatpush1.msra.mxu0 0.0
    %393 = vmatprep.subr.mxu0 0.0
    %394 = vmatpush1.msra.mxu0 0.0
    %395 = vmatprep.subr.mxu0 0.0
    %396 = vmatpush1.msra.mxu0 0.0
    %397 = vmatprep.subr.mxu0 0.0
    %398 = vmatpush1.msra.mxu0 0.0
    %399 = vmatprep.subr.mxu0 0.0
    %400 = vmatpush1.msra.mxu0 0.0
    %401 = vmatprep.subr.mxu0 0.0
    %402 = vmatpush1.msra.mxu0 0.0
    %403 = vmatprep.subr.mxu0 0.0
    %404 = vmatpush1.msra.mxu0 0.0
    %405 = vmatprep.subr.mxu0 0.0
    %406 = vmatpush1.msra.mxu0 0.0
    %407 = vmatprep.subr.mxu0 0.0
    %408 = vmatpush1.msra.mxu0 0.0
    %409 = vmatprep.mubr.f32.mxu0 0.0
    %410 = vmatmul.mubr.f32.gmra.mrb[0].mxu0 %v343
    %v411 = vpop.f32.mrb[0].mxu0
    %v412 = vadd.f32 0.0, %v411
    %v413 = vpop.f32.mrb[0].mxu0
    %v414 = vadd.f32 0.0, %v413
    %415 = vdwg.mxu0
    %v416 = vadd.f32 %v173, %v412
    %v417 = vadd.f32 %v175, %v414
    %v418 = vxor.u32 %v416, 2147483648
    %v419 = vxor.u32 %v417, 2147483648
    %v420 = vmul.f32 %v418, 1.442695
    %v421 = vpow.pop %v420
    %v422 = vmul.f32 %v419, 1.442695
    %v423 = vpow.pop %v422
    %v424 = vadd.f32 %v421, 1.0
    %v425 = vadd.f32 %v423, 1.0
    %v426 = vrcp.pop %v424
    %v427 = vmul.f32 1.0, %v426
    %v428 = vrcp.pop %v425
    %v429 = vmul.f32 1.0, %v428
    %v430 = vtanh.pop %v417
    %v431 = vmul.f32 %v427, %v337
    %v432 = vmul.f32 %v427, %v430
    %434 = vrot.lane.b32.xlu0 %v432, 64
    %v435 = vpop.permute.xlu0 %434
    %v437 = vadd.f32 %v431, %v435
    %v438 = vtanh.pop %v437
    %v439 = vmul.f32 %v429, %v438
    %441 = vrot.lane.b32.xlu0 %v439, 64
    %v442 = vpop.permute.xlu0 %441
    %v443 = vsel %vm241, %v442, 0
    %445 = vmatprep.subr.mxu0 %v226
    %446 = vmatpush1.msra.mxu0 %v225
    %447 = vmatprep.subr.mxu0 %v228
    %448 = vmatpush1.msra.mxu0 %v227
    %449 = vmatprep.subr.mxu0 %v230
    %450 = vmatpush1.msra.mxu0 %v229
    %451 = vmatprep.subr.mxu0 %v232
    %452 = vmatpush1.msra.mxu0 %v231
    %453 = vmatprep.subr.mxu0 %v234
    %454 = vmatpush1.msra.mxu0 %v233
    %455 = vmatprep.subr.mxu0 %v236
    %456 = vmatpush1.msra.mxu0 %v235
    %457 = vmatprep.subr.mxu0 %v238
    %458 = vmatpush1.msra.mxu0 %v237
    %459 = vmatprep.subr.mxu0 %v240
    %460 = vmatpush1.msra.mxu0 %v239
    %461 = vmatprep.subr.mxu0 0.0
    %462 = vmatpush1.msra.mxu0 0.0
    %463 = vmatprep.subr.mxu0 0.0
    %464 = vmatpush1.msra.mxu0 0.0
    %465 = vmatprep.subr.mxu0 0.0
    %466 = vmatpush1.msra.mxu0 0.0
    %467 = vmatprep.subr.mxu0 0.0
    %468 = vmatpush1.msra.mxu0 0.0
    %469 = vmatprep.subr.mxu0 0.0
    %470 = vmatpush1.msra.mxu0 0.0
    %471 = vmatprep.subr.mxu0 0.0
    %472 = vmatpush1.msra.mxu0 0.0
    %473 = vmatprep.subr.mxu0 0.0
    %474 = vmatpush1.msra.mxu0 0.0
    %475 = vmatprep.subr.mxu0 0.0
    %476 = vmatpush1.msra.mxu0 0.0
    %477 = vmatprep.subr.mxu0 0.0
    %478 = vmatpush1.msra.mxu0 0.0
    %479 = vmatprep.subr.mxu0 0.0
    %480 = vmatpush1.msra.mxu0 0.0
    %481 = vmatprep.subr.mxu0 0.0
    %482 = vmatpush1.msra.mxu0 0.0
    %483 = vmatprep.subr.mxu0 0.0
    %484 = vmatpush1.msra.mxu0 0.0
    %485 = vmatprep.subr.mxu0 0.0
    %486 = vmatpush1.msra.mxu0 0.0
    %487 = vmatprep.subr.mxu0 0.0
    %488 = vmatpush1.msra.mxu0 0.0
    %489 = vmatprep.subr.mxu0 0.0
    %490 = vmatpush1.msra.mxu0 0.0
    %491 = vmatprep.subr.mxu0 0.0
    %492 = vmatpush1.msra.mxu0 0.0
    %493 = vmatprep.subr.mxu0 0.0
    %494 = vmatpush1.msra.mxu0 0.0
    %495 = vmatprep.subr.mxu0 0.0
    %496 = vmatpush1.msra.mxu0 0.0
    %497 = vmatprep.subr.mxu0 0.0
    %498 = vmatpush1.msra.mxu0 0.0
    %499 = vmatprep.subr.mxu0 0.0
    %500 = vmatpush1.msra.mxu0 0.0
    %501 = vmatprep.subr.mxu0 0.0
    %502 = vmatpush1.msra.mxu0 0.0
    %503 = vmatprep.subr.mxu0 0.0
    %504 = vmatpush1.msra.mxu0 0.0
    %505 = vmatprep.subr.mxu0 0.0
    %506 = vmatpush1.msra.mxu0 0.0
    %507 = vmatprep.subr.mxu0 0.0
    %508 = vmatpush1.msra.mxu0 0.0
    %509 = vmatprep.mubr.f32.mxu0 0.0
    %510 = vmatmul.mubr.f32.gmra.mrb[0].mxu0 %v443
    %v511 = vpop.f32.mrb[0].mxu0
    %v512 = vadd.f32 0.0, %v511
    %v513 = vpop.f32.mrb[0].mxu0
    %v514 = vadd.f32 0.0, %v513
    %515 = vdwg.mxu0
    %v516 = vadd.f32 %v179, %v512
    %v517 = vadd.f32 %v181, %v514
    %v518 = vxor.u32 %v516, 2147483648
    %v519 = vxor.u32 %v517, 2147483648
    %v520 = vmul.f32 %v518, 1.442695
    %v521 = vpow.pop %v520
    %v522 = vmul.f32 %v519, 1.442695
    %v523 = vpow.pop %v522
    %v524 = vadd.f32 %v521, 1.0
    %v525 = vadd.f32 %v523, 1.0
    %v526 = vrcp.pop %v524
    %v527 = vmul.f32 1.0, %v526
    %v528 = vrcp.pop %v525
    %v529 = vmul.f32 1.0, %v528
    %v530 = vtanh.pop %v517
    %v531 = vmul.f32 %v527, %v437
    %v532 = vmul.f32 %v527, %v530
    %534 = vrot.lane.b32.xlu0 %v532, 64
    %v535 = vpop.permute.xlu0 %534
    %v537 = vadd.f32 %v531, %v535
    %v538 = vtanh.pop %v537
    %v539 = vmul.f32 %v529, %v538
    %541 = vrot.lane.b32.xlu0 %v539, 64
    %v542 = vpop.permute.xlu0 %541
    %v543 = vsel %vm241, %v542, 0
    %545 = vmatprep.subr.mxu0 %v226
    %546 = vmatpush1.msra.mxu0 %v225
    %547 = vmatprep.subr.mxu0 %v228
    %548 = vmatpush1.msra.mxu0 %v227
    %549 = vmatprep.subr.mxu0 %v230
    %550 = vmatpush1.msra.mxu0 %v229
    %551 = vmatprep.subr.mxu0 %v232
    %552 = vmatpush1.msra.mxu0 %v231
    %553 = vmatprep.subr.mxu0 %v234
    %554 = vmatpush1.msra.mxu0 %v233
    %555 = vmatprep.subr.mxu0 %v236
    %556 = vmatpush1.msra.mxu0 %v235
    %557 = vmatprep.subr.mxu0 %v238
    %558 = vmatpush1.msra.mxu0 %v237
    %559 = vmatprep.subr.mxu0 %v240
    %560 = vmatpush1.msra.mxu0 %v239
    %561 = vmatprep.subr.mxu0 0.0
    %562 = vmatpush1.msra.mxu0 0.0
    %563 = vmatprep.subr.mxu0 0.0
    %564 = vmatpush1.msra.mxu0 0.0
    %565 = vmatprep.subr.mxu0 0.0
    %566 = vmatpush1.msra.mxu0 0.0
    %567 = vmatprep.subr.mxu0 0.0
    %568 = vmatpush1.msra.mxu0 0.0
    %569 = vmatprep.subr.mxu0 0.0
    %570 = vmatpush1.msra.mxu0 0.0
    %571 = vmatprep.subr.mxu0 0.0
    %572 = vmatpush1.msra.mxu0 0.0
    %573 = vmatprep.subr.mxu0 0.0
    %574 = vmatpush1.msra.mxu0 0.0
    %575 = vmatprep.subr.mxu0 0.0
    %576 = vmatpush1.msra.mxu0 0.0
    %577 = vmatprep.subr.mxu0 0.0
    %578 = vmatpush1.msra.mxu0 0.0
    %579 = vmatprep.subr.mxu0 0.0
    %580 = vmatpush1.msra.mxu0 0.0
    %581 = vmatprep.subr.mxu0 0.0
    %582 = vmatpush1.msra.mxu0 0.0
    %583 = vmatprep.subr.mxu0 0.0
    %584 = vmatpush1.msra.mxu0 0.0
    %585 = vmatprep.subr.mxu0 0.0
    %586 = vmatpush1.msra.mxu0 0.0
    %587 = vmatprep.subr.mxu0 0.0
    %588 = vmatpush1.msra.mxu0 0.0
    %589 = vmatprep.subr.mxu0 0.0
    %590 = vmatpush1.msra.mxu0 0.0
    %591 = vmatprep.subr.mxu0 0.0
    %592 = vmatpush1.msra.mxu0 0.0
    %593 = vmatprep.subr.mxu0 0.0
    %594 = vmatpush1.msra.mxu0 0.0
    %595 = vmatprep.subr.mxu0 0.0
    %596 = vmatpush1.msra.mxu0 0.0
    %597 = vmatprep.subr.mxu0 0.0
    %598 = vmatpush1.msra.mxu0 0.0
    %599 = vmatprep.subr.mxu0 0.0
    %600 = vmatpush1.msra.mxu0 0.0
    %601 = vmatprep.subr.mxu0 0.0
    %602 = vmatpush1.msra.mxu0 0.0
    %603 = vmatprep.subr.mxu0 0.0
    %604 = vmatpush1.msra.mxu0 0.0
    %605 = vmatprep.subr.mxu0 0.0
    %606 = vmatpush1.msra.mxu0 0.0
    %607 = vmatprep.subr.mxu0 0.0
    %608 = vmatpush1.msra.mxu0 0.0
    %609 = vmatprep.mubr.f32.mxu0 0.0
    %610 = vmatmul.mubr.f32.gmra.mrb[0].mxu0 %v543
    %v611 = vpop.f32.mrb[0].mxu0
    %v612 = vadd.f32 0.0, %v611
    %v613 = vpop.f32.mrb[0].mxu0
    %v614 = vadd.f32 0.0, %v613
    %615 = vdwg.mxu0
    %v616 = vadd.f32 %v185, %v612
    %v617 = vadd.f32 %v187, %v614
    %v618 = vxor.u32 %v616, 2147483648
    %v619 = vxor.u32 %v617, 2147483648
    %v620 = vmul.f32 %v618, 1.442695
    %v621 = vpow.pop %v620
    %v622 = vmul.f32 %v619, 1.442695
    %v623 = vpow.pop %v622
    %v624 = vadd.f32 %v621, 1.0
    %v625 = vadd.f32 %v623, 1.0
    %v626 = vrcp.pop %v624
    %v627 = vmul.f32 1.0, %v626
    %v628 = vrcp.pop %v625
    %v629 = vmul.f32 1.0, %v628
    %v630 = vtanh.pop %v617
    %v631 = vmul.f32 %v627, %v537
    %v632 = vmul.f32 %v627, %v630
    %634 = vrot.lane.b32.xlu0 %v632, 64
    %v635 = vpop.permute.xlu0 %634
    %v637 = vadd.f32 %v631, %v635
    %v638 = vtanh.pop %v637
    %v639 = vmul.f32 %v629, %v638
    %641 = vrot.lane.b32.xlu0 %v639, 64
    %v642 = vpop.permute.xlu0 %641
    %v643 = vsel %vm241, %v642, 0
    %645 = vmatprep.subr.mxu0 %v226
    %646 = vmatpush1.msra.mxu0 %v225
    %647 = vmatprep.subr.mxu0 %v228
    %648 = vmatpush1.msra.mxu0 %v227
    %649 = vmatprep.subr.mxu0 %v230
    %650 = vmatpush1.msra.mxu0 %v229
    %651 = vmatprep.subr.mxu0 %v232
    %652 = vmatpush1.msra.mxu0 %v231
    %653 = vmatprep.subr.mxu0 %v234
    %654 = vmatpush1.msra.mxu0 %v233
    %655 = vmatprep.subr.mxu0 %v236
    %656 = vmatpush1.msra.mxu0 %v235
    %657 = vmatprep.subr.mxu0 %v238
    %658 = vmatpush1.msra.mxu0 %v237
    %659 = vmatprep.subr.mxu0 %v240
    %660 = vmatpush1.msra.mxu0 %v239
    %661 = vmatprep.subr.mxu0 0.0
    %662 = vmatpush1.msra.mxu0 0.0
    %663 = vmatprep.subr.mxu0 0.0
    %664 = vmatpush1.msra.mxu0 0.0
    %665 = vmatprep.subr.mxu0 0.0
    %666 = vmatpush1.msra.mxu0 0.0
    %667 = vmatprep.subr.mxu0 0.0
    %668 = vmatpush1.msra.mxu0 0.0
    %669 = vmatprep.subr.mxu0 0.0
    %670 = vmatpush1.msra.mxu0 0.0
    %671 = vmatprep.subr.mxu0 0.0
    %672 = vmatpush1.msra.mxu0 0.0
    %673 = vmatprep.subr.mxu0 0.0
    %674 = vmatpush1.msra.mxu0 0.0
    %675 = vmatprep.subr.mxu0 0.0
    %676 = vmatpush1.msra.mxu0 0.0
    %677 = vmatprep.subr.mxu0 0.0
    %678 = vmatpush1.msra.mxu0 0.0
    %679 = vmatprep.subr.mxu0 0.0
    %680 = vmatpush1.msra.mxu0 0.0
    %681 = vmatprep.subr.mxu0 0.0
    %682 = vmatpush1.msra.mxu0 0.0
    %683 = vmatprep.subr.mxu0 0.0
    %684 = vmatpush1.msra.mxu0 0.0
    %685 = vmatprep.subr.mxu0 0.0
    %686 = vmatpush1.msra.mxu0 0.0
    %687 = vmatprep.subr.mxu0 0.0
    %688 = vmatpush1.msra.mxu0 0.0
    %689 = vmatprep.subr.mxu0 0.0
    %690 = vmatpush1.msra.mxu0 0.0
    %691 = vmatprep.subr.mxu0 0.0
    %692 = vmatpush1.msra.mxu0 0.0
    %693 = vmatprep.subr.mxu0 0.0
    %694 = vmatpush1.msra.mxu0 0.0
    %695 = vmatprep.subr.mxu0 0.0
    %696 = vmatpush1.msra.mxu0 0.0
    %697 = vmatprep.subr.mxu0 0.0
    %698 = vmatpush1.msra.mxu0 0.0
    %699 = vmatprep.subr.mxu0 0.0
    %700 = vmatpush1.msra.mxu0 0.0
    %701 = vmatprep.subr.mxu0 0.0
    %702 = vmatpush1.msra.mxu0 0.0
    %703 = vmatprep.subr.mxu0 0.0
    %704 = vmatpush1.msra.mxu0 0.0
    %705 = vmatprep.subr.mxu0 0.0
    %706 = vmatpush1.msra.mxu0 0.0
    %707 = vmatprep.subr.mxu0 0.0
    %708 = vmatpush1.msra.mxu0 0.0
    %709 = vmatprep.mubr.f32.mxu0 0.0
    %710 = vmatmul.mubr.f32.gmra.mrb[0].mxu0 %v643
    %v711 = vpop.f32.mrb[0].mxu0
    %v712 = vadd.f32 0.0, %v711
    %v713 = vpop.f32.mrb[0].mxu0
    %v714 = vadd.f32 0.0, %v713
    %715 = vdwg.mxu0
    %v716 = vadd.f32 %v191, %v712
    %v717 = vadd.f32 %v193, %v714
    %v718 = vxor.u32 %v716, 2147483648
    %v719 = vxor.u32 %v717, 2147483648
    %v720 = vmul.f32 %v718, 1.442695
    %v721 = vpow.pop %v720
    %v722 = vmul.f32 %v719, 1.442695
    %v723 = vpow.pop %v722
    %v724 = vadd.f32 %v721, 1.0
    %v725 = vadd.f32 %v723, 1.0
    %v726 = vrcp.pop %v724
    %v727 = vmul.f32 1.0, %v726
    %v728 = vrcp.pop %v725
    %v729 = vmul.f32 1.0, %v728
    %v730 = vtanh.pop %v717
    %v731 = vmul.f32 %v727, %v637
    %v732 = vmul.f32 %v727, %v730
    %734 = vrot.lane.b32.xlu0 %v732, 64
    %v735 = vpop.permute.xlu0 %734
    %v737 = vadd.f32 %v731, %v735
    %v738 = vtanh.pop %v737
    %v739 = vmul.f32 %v729, %v738
    %741 = vrot.lane.b32.xlu0 %v739, 64
    %v742 = vpop.permute.xlu0 %741
    %v743 = vsel %vm241, %v742, 0
    %745 = vmatprep.subr.mxu0 %v226
    %746 = vmatpush1.msra.mxu0 %v225
    %747 = vmatprep.subr.mxu0 %v228
    %748 = vmatpush1.msra.mxu0 %v227
    %749 = vmatprep.subr.mxu0 %v230
    %750 = vmatpush1.msra.mxu0 %v229
    %751 = vmatprep.subr.mxu0 %v232
    %752 = vmatpush1.msra.mxu0 %v231
    %753 = vmatprep.subr.mxu0 %v234
    %754 = vmatpush1.msra.mxu0 %v233
    %755 = vmatprep.subr.mxu0 %v236
    %756 = vmatpush1.msra.mxu0 %v235
    %757 = vmatprep.subr.mxu0 %v238
    %758 = vmatpush1.msra.mxu0 %v237
    %759 = vmatprep.subr.mxu0 %v240
    %760 = vmatpush1.msra.mxu0 %v239
    %761 = vmatprep.subr.mxu0 0.0
    %762 = vmatpush1.msra.mxu0 0.0
    %763 = vmatprep.subr.mxu0 0.0
    %764 = vmatpush1.msra.mxu0 0.0
    %765 = vmatprep.subr.mxu0 0.0
    %766 = vmatpush1.msra.mxu0 0.0
    %767 = vmatprep.subr.mxu0 0.0
    %768 = vmatpush1.msra.mxu0 0.0
    %769 = vmatprep.subr.mxu0 0.0
    %770 = vmatpush1.msra.mxu0 0.0
    %771 = vmatprep.subr.mxu0 0.0
    %772 = vmatpush1.msra.mxu0 0.0
    %773 = vmatprep.subr.mxu0 0.0
    %774 = vmatpush1.msra.mxu0 0.0
    %775 = vmatprep.subr.mxu0 0.0
    %776 = vmatpush1.msra.mxu0 0.0
    %777 = vmatprep.subr.mxu0 0.0
    %778 = vmatpush1.msra.mxu0 0.0
    %779 = vmatprep.subr.mxu0 0.0
    %780 = vmatpush1.msra.mxu0 0.0
    %781 = vmatprep.subr.mxu0 0.0
    %782 = vmatpush1.msra.mxu0 0.0
    %783 = vmatprep.subr.mxu0 0.0
    %784 = vmatpush1.msra.mxu0 0.0
    %785 = vmatprep.subr.mxu0 0.0
    %786 = vmatpush1.msra.mxu0 0.0
    %787 = vmatprep.subr.mxu0 0.0
    %788 = vmatpush1.msra.mxu0 0.0
    %789 = vmatprep.subr.mxu0 0.0
    %790 = vmatpush1.msra.mxu0 0.0
    %791 = vmatprep.subr.mxu0 0.0
    %792 = vmatpush1.msra.mxu0 0.0
    %793 = vmatprep.subr.mxu0 0.0
    %794 = vmatpush1.msra.mxu0 0.0
    %795 = vmatprep.subr.mxu0 0.0
    %796 = vmatpush1.msra.mxu0 0.0
    %797 = vmatprep.subr.mxu0 0.0
    %798 = vmatpush1.msra.mxu0 0.0
    %799 = vmatprep.subr.mxu0 0.0
    %800 = vmatpush1.msra.mxu0 0.0
    %801 = vmatprep.subr.mxu0 0.0
    %802 = vmatpush1.msra.mxu0 0.0
    %803 = vmatprep.subr.mxu0 0.0
    %804 = vmatpush1.msra.mxu0 0.0
    %805 = vmatprep.subr.mxu0 0.0
    %806 = vmatpush1.msra.mxu0 0.0
    %807 = vmatprep.subr.mxu0 0.0
    %808 = vmatpush1.msra.mxu0 0.0
    %809 = vmatprep.mubr.f32.mxu0 0.0
    %810 = vmatmul.mubr.f32.gmra.mrb[0].mxu0 %v743
    %v811 = vpop.f32.mrb[0].mxu0
    %v812 = vadd.f32 0.0, %v811
    %v813 = vpop.f32.mrb[0].mxu0
    %v814 = vadd.f32 0.0, %v813
    %815 = vdwg.mxu0
    %v816 = vadd.f32 %v197, %v812
    %v817 = vadd.f32 %v199, %v814
    %v818 = vxor.u32 %v816, 2147483648
    %v819 = vxor.u32 %v817, 2147483648
    %v820 = vmul.f32 %v818, 1.442695
    %v821 = vpow.pop %v820
    %v822 = vmul.f32 %v819, 1.442695
    %v823 = vpow.pop %v822
    %v824 = vadd.f32 %v821, 1.0
    %v825 = vadd.f32 %v823, 1.0
    %v826 = vrcp.pop %v824
    %v827 = vmul.f32 1.0, %v826
    %v828 = vrcp.pop %v825
    %v829 = vmul.f32 1.0, %v828
    %v830 = vtanh.pop %v817
    %v831 = vmul.f32 %v827, %v737
    %v832 = vmul.f32 %v827, %v830
    %834 = vrot.lane.b32.xlu0 %v832, 64
    %v835 = vpop.permute.xlu0 %834
    %v837 = vadd.f32 %v831, %v835
    %v838 = vtanh.pop %v837
    %v839 = vmul.f32 %v829, %v838
    %841 = vrot.lane.b32.xlu0 %v839, 64
    %v842 = vpop.permute.xlu0 %841
    %v843 = vsel %vm241, %v842, 0
    %845 = vmatprep.subr.mxu0 %v226
    %846 = vmatpush1.msra.mxu0 %v225
    %847 = vmatprep.subr.mxu0 %v228
    %848 = vmatpush1.msra.mxu0 %v227
    %849 = vmatprep.subr.mxu0 %v230
    %850 = vmatpush1.msra.mxu0 %v229
    %851 = vmatprep.subr.mxu0 %v232
    %852 = vmatpush1.msra.mxu0 %v231
    %853 = vmatprep.subr.mxu0 %v234
    %854 = vmatpush1.msra.mxu0 %v233
    %855 = vmatprep.subr.mxu0 %v236
    %856 = vmatpush1.msra.mxu0 %v235
    %857 = vmatprep.subr.mxu0 %v238
    %858 = vmatpush1.msra.mxu0 %v237
    %859 = vmatprep.subr.mxu0 %v240
    %860 = vmatpush1.msra.mxu0 %v239
    %861 = vmatprep.subr.mxu0 0.0
    %862 = vmatpush1.msra.mxu0 0.0
    %863 = vmatprep.subr.mxu0 0.0
    %864 = vmatpush1.msra.mxu0 0.0
    %865 = vmatprep.subr.mxu0 0.0
    %866 = vmatpush1.msra.mxu0 0.0
    %867 = vmatprep.subr.mxu0 0.0
    %868 = vmatpush1.msra.mxu0 0.0
    %869 = vmatprep.subr.mxu0 0.0
    %870 = vmatpush1.msra.mxu0 0.0
    %871 = vmatprep.subr.mxu0 0.0
    %872 = vmatpush1.msra.mxu0 0.0
    %873 = vmatprep.subr.mxu0 0.0
    %874 = vmatpush1.msra.mxu0 0.0
    %875 = vmatprep.subr.mxu0 0.0
    %876 = vmatpush1.msra.mxu0 0.0
    %877 = vmatprep.subr.mxu0 0.0
    %878 = vmatpush1.msra.mxu0 0.0
    %879 = vmatprep.subr.mxu0 0.0
    %880 = vmatpush1.msra.mxu0 0.0
    %881 = vmatprep.subr.mxu0 0.0
    %882 = vmatpush1.msra.mxu0 0.0
    %883 = vmatprep.subr.mxu0 0.0
    %884 = vmatpush1.msra.mxu0 0.0
    %885 = vmatprep.subr.mxu0 0.0
    %886 = vmatpush1.msra.mxu0 0.0
    %887 = vmatprep.subr.mxu0 0.0
    %888 = vmatpush1.msra.mxu0 0.0
    %889 = vmatprep.subr.mxu0 0.0
    %890 = vmatpush1.msra.mxu0 0.0
    %891 = vmatprep.subr.mxu0 0.0
    %892 = vmatpush1.msra.mxu0 0.0
    %893 = vmatprep.subr.mxu0 0.0
    %894 = vmatpush1.msra.mxu0 0.0
    %895 = vmatprep.subr.mxu0 0.0
    %896 = vmatpush1.msra.mxu0 0.0
    %897 = vmatprep.subr.mxu0 0.0
    %898 = vmatpush1.msra.mxu0 0.0
    %899 = vmatprep.subr.mxu0 0.0
    %900 = vmatpush1.msra.mxu0 0.0
    %901 = vmatprep.subr.mxu0 0.0
    %902 = vmatpush1.msra.mxu0 0.0
    %903 = vmatprep.subr.mxu0 0.0
    %904 = vmatpush1.msra.mxu0 0.0
    %905 = vmatprep.subr.mxu0 0.0
    %906 = vmatpush1.msra.mxu0 0.0
    %907 = vmatprep.subr.mxu0 0.0
    %908 = vmatpush1.msra.mxu0 0.0
    %909 = vmatprep.mubr.f32.mxu0 0.0
    %910 = vmatmul.mubr.f32.gmra.mrb[0].mxu0 %v843
    %v911 = vpop.f32.mrb[0].mxu0
    %v912 = vadd.f32 0.0, %v911
    %v913 = vpop.f32.mrb[0].mxu0
    %v914 = vadd.f32 0.0, %v913
    %915 = vdwg.mxu0
    %v916 = vadd.f32 %v203, %v912
    %v917 = vadd.f32 %v205, %v914
    %v918 = vxor.u32 %v916, 2147483648
    %v919 = vxor.u32 %v917, 2147483648
    %v920 = vmul.f32 %v918, 1.442695
    %v921 = vpow.pop %v920
    %v922 = vmul.f32 %v919, 1.442695
    %v923 = vpow.pop %v922
    %v924 = vadd.f32 %v921, 1.0
    %v925 = vadd.f32 %v923, 1.0
    %v926 = vrcp.pop %v924
    %v927 = vmul.f32 1.0, %v926
    %v928 = vrcp.pop %v925
    %v929 = vmul.f32 1.0, %v928
    %v930 = vtanh.pop %v917
    %v931 = vmul.f32 %v927, %v837
    %v932 = vmul.f32 %v927, %v930
    %934 = vrot.lane.b32.xlu0 %v932, 64
    %v935 = vpop.permute.xlu0 %934
    %v937 = vadd.f32 %v931, %v935
    %v938 = vtanh.pop %v937
    %v939 = vmul.f32 %v929, %v938
    %941 = vrot.lane.b32.xlu0 %v939, 64
    %v942 = vpop.permute.xlu0 %941
    %v943 = vsel %vm241, %v942, 0
    %945 = vmatprep.subr.mxu0 %v226
    %946 = vmatpush1.msra.mxu0 %v225
    %947 = vmatprep.subr.mxu0 %v228
    %948 = vmatpush1.msra.mxu0 %v227
    %949 = vmatprep.subr.mxu0 %v230
    %950 = vmatpush1.msra.mxu0 %v229
    %951 = vmatprep.subr.mxu0 %v232
    %952 = vmatpush1.msra.mxu0 %v231
    %953 = vmatprep.subr.mxu0 %v234
    %954 = vmatpush1.msra.mxu0 %v233
    %955 = vmatprep.subr.mxu0 %v236
    %956 = vmatpush1.msra.mxu0 %v235
    %957 = vmatprep.subr.mxu0 %v238
    %958 = vmatpush1.msra.mxu0 %v237
    %959 = vmatprep.subr.mxu0 %v240
    %960 = vmatpush1.msra.mxu0 %v239
    %961 = vmatprep.subr.mxu0 0.0
    %962 = vmatpush1.msra.mxu0 0.0
    %963 = vmatprep.subr.mxu0 0.0
    %964 = vmatpush1.msra.mxu0 0.0
    %965 = vmatprep.subr.mxu0 0.0
    %966 = vmatpush1.msra.mxu0 0.0
    %967 = vmatprep.subr.mxu0 0.0
    %968 = vmatpush1.msra.mxu0 0.0
    %969 = vmatprep.subr.mxu0 0.0
    %970 = vmatpush1.msra.mxu0 0.0
    %971 = vmatprep.subr.mxu0 0.0
    %972 = vmatpush1.msra.mxu0 0.0
    %973 = vmatprep.subr.mxu0 0.0
    %974 = vmatpush1.msra.mxu0 0.0
    %975 = vmatprep.subr.mxu0 0.0
    %976 = vmatpush1.msra.mxu0 0.0
    %977 = vmatprep.subr.mxu0 0.0
    %978 = vmatpush1.msra.mxu0 0.0
    %979 = vmatprep.subr.mxu0 0.0
    %980 = vmatpush1.msra.mxu0 0.0
    %981 = vmatprep.subr.mxu0 0.0
    %982 = vmatpush1.msra.mxu0 0.0
    %983 = vmatprep.subr.mxu0 0.0
    %984 = vmatpush1.msra.mxu0 0.0
    %985 = vmatprep.subr.mxu0 0.0
    %986 = vmatpush1.msra.mxu0 0.0
    %987 = vmatprep.subr.mxu0 0.0
    %988 = vmatpush1.msra.mxu0 0.0
    %989 = vmatprep.subr.mxu0 0.0
    %990 = vmatpush1.msra.mxu0 0.0
    %991 = vmatprep.subr.mxu0 0.0
    %992 = vmatpush1.msra.mxu0 0.0
    %993 = vmatprep.subr.mxu0 0.0
    %994 = vmatpush1.msra.mxu0 0.0
    %995 = vmatprep.subr.mxu0 0.0
    %996 = vmatpush1.msra.mxu0 0.0
    %997 = vmatprep.subr.mxu0 0.0
    %998 = vmatpush1.msra.mxu0 0.0
    %999 = vmatprep.subr.mxu0 0.0
    %1000 = vmatpush1.msra.mxu0 0.0
    %1001 = vmatprep.subr.mxu0 0.0
    %1002 = vmatpush1.msra.mxu0 0.0
    %1003 = vmatprep.subr.mxu0 0.0
    %1004 = vmatpush1.msra.mxu0 0.0
    %1005 = vmatprep.subr.mxu0 0.0
    %1006 = vmatpush1.msra.mxu0 0.0
    %1007 = vmatprep.subr.mxu0 0.0
    %1008 = vmatpush1.msra.mxu0 0.0
    %1009 = vmatprep.mubr.f32.mxu0 0.0
    %1010 = vmatmul.mubr.f32.gmra.mrb[0].mxu0 %v943
    %v1011 = vpop.f32.mrb[0].mxu0
    %v1012 = vadd.f32 0.0, %v1011
    %v1013 = vpop.f32.mrb[0].mxu0
    %v1014 = vadd.f32 0.0, %v1013
    %1015 = vdwg.mxu0
    %v1016 = vadd.f32 %v209, %v1012
    %v1017 = vadd.f32 %v211, %v1014
    %v1018 = vxor.u32 %v1016, 2147483648
    %v1019 = vxor.u32 %v1017, 2147483648
    %v1020 = vmul.f32 %v1018, 1.442695
    %v1021 = vpow.pop %v1020
    %v1022 = vmul.f32 %v1019, 1.442695
    %v1023 = vpow.pop %v1022
    %v1024 = vadd.f32 %v1021, 1.0
    %v1025 = vadd.f32 %v1023, 1.0
    %v1026 = vrcp.pop %v1024
    %v1027 = vmul.f32 1.0, %v1026
    %v1028 = vrcp.pop %v1025
    %v1029 = vmul.f32 1.0, %v1028
    %v1030 = vtanh.pop %v1017
    %v1031 = vmul.f32 %v1027, %v937
    %v1032 = vmul.f32 %v1027, %v1030
    %1034 = vrot.lane.b32.xlu0 %v1032, 64
    %v1035 = vpop.permute.xlu0 %1034
    %v1037 = vadd.f32 %v1031, %v1035
    %v1038 = vtanh.pop %v1037
    %v1039 = vmul.f32 %v1029, %v1038
    %1041 = vrot.lane.b32.xlu0 %v1039, 64
    %v1042 = vpop.permute.xlu0 %1041
    %v1043 = vsel %vm241, %v1042, 0
    %1045 = vmatprep.subr.mxu0 %v226
    %1046 = vmatpush1.msra.mxu0 %v225
    %1047 = vmatprep.subr.mxu0 %v228
    %1048 = vmatpush1.msra.mxu0 %v227
    %1049 = vmatprep.subr.mxu0 %v230
    %1050 = vmatpush1.msra.mxu0 %v229
    %1051 = vmatprep.subr.mxu0 %v232
    %1052 = vmatpush1.msra.mxu0 %v231
    %1053 = vmatprep.subr.mxu0 %v234
    %1054 = vmatpush1.msra.mxu0 %v233
    %1055 = vmatprep.subr.mxu0 %v236
    %1056 = vmatpush1.msra.mxu0 %v235
    %1057 = vmatprep.subr.mxu0 %v238
    %1058 = vmatpush1.msra.mxu0 %v237
    %1059 = vmatprep.subr.mxu0 %v240
    %1060 = vmatpush1.msra.mxu0 %v239
    %1061 = vmatprep.subr.mxu0 0.0
    %1062 = vmatpush1.msra.mxu0 0.0
    %1063 = vmatprep.subr.mxu0 0.0
    %1064 = vmatpush1.msra.mxu0 0.0
    %1065 = vmatprep.subr.mxu0 0.0
    %1066 = vmatpush1.msra.mxu0 0.0
    %1067 = vmatprep.subr.mxu0 0.0
    %1068 = vmatpush1.msra.mxu0 0.0
    %1069 = vmatprep.subr.mxu0 0.0
    %1070 = vmatpush1.msra.mxu0 0.0
    %1071 = vmatprep.subr.mxu0 0.0
    %1072 = vmatpush1.msra.mxu0 0.0
    %1073 = vmatprep.subr.mxu0 0.0
    %1074 = vmatpush1.msra.mxu0 0.0
    %1075 = vmatprep.subr.mxu0 0.0
    %1076 = vmatpush1.msra.mxu0 0.0
    %1077 = vmatprep.subr.mxu0 0.0
    %1078 = vmatpush1.msra.mxu0 0.0
    %1079 = vmatprep.subr.mxu0 0.0
    %1080 = vmatpush1.msra.mxu0 0.0
    %1081 = vmatprep.subr.mxu0 0.0
    %1082 = vmatpush1.msra.mxu0 0.0
    %1083 = vmatprep.subr.mxu0 0.0
    %1084 = vmatpush1.msra.mxu0 0.0
    %1085 = vmatprep.subr.mxu0 0.0
    %1086 = vmatpush1.msra.mxu0 0.0
    %1087 = vmatprep.subr.mxu0 0.0
    %1088 = vmatpush1.msra.mxu0 0.0
    %1089 = vmatprep.subr.mxu0 0.0
    %1090 = vmatpush1.msra.mxu0 0.0
    %1091 = vmatprep.subr.mxu0 0.0
    %1092 = vmatpush1.msra.mxu0 0.0
    %1093 = vmatprep.subr.mxu0 0.0
    %1094 = vmatpush1.msra.mxu0 0.0
    %1095 = vmatprep.subr.mxu0 0.0
    %1096 = vmatpush1.msra.mxu0 0.0
    %1097 = vmatprep.subr.mxu0 0.0
    %1098 = vmatpush1.msra.mxu0 0.0
    %1099 = vmatprep.subr.mxu0 0.0
    %1100 = vmatpush1.msra.mxu0 0.0
    %1101 = vmatprep.subr.mxu0 0.0
    %1102 = vmatpush1.msra.mxu0 0.0
    %1103 = vmatprep.subr.mxu0 0.0
    %1104 = vmatpush1.msra.mxu0 0.0
    %1105 = vmatprep.subr.mxu0 0.0
    %1106 = vmatpush1.msra.mxu0 0.0
    %1107 = vmatprep.subr.mxu0 0.0
    %1108 = vmatpush1.msra.mxu0 0.0
    %1109 = vmatprep.mubr.f32.mxu0 0.0
    %1110 = vmatmul.mubr.f32.gmra.mrb[0].mxu0 %v1043
    %v1111 = vpop.f32.mrb[0].mxu0
    %v1112 = vadd.f32 0.0, %v1111
    %v1113 = vpop.f32.mrb[0].mxu0
    %v1114 = vadd.f32 0.0, %v1113
    %1115 = vdwg.mxu0
    %v1116 = vadd.f32 %v215, %v1112
    %v1117 = vadd.f32 %v217, %v1114
    %v1118 = vxor.u32 %v1116, 2147483648
    %v1119 = vxor.u32 %v1117, 2147483648
    %v1120 = vmul.f32 %v1118, 1.442695
    %v1121 = vpow.pop %v1120
    %v1122 = vmul.f32 %v1119, 1.442695
    %v1123 = vpow.pop %v1122
    %v1124 = vadd.f32 %v1121, 1.0
    %v1125 = vadd.f32 %v1123, 1.0
    %v1126 = vrcp.pop %v1124
    %v1127 = vmul.f32 1.0, %v1126
    %v1128 = vrcp.pop %v1125
    %v1129 = vmul.f32 1.0, %v1128
    %v1130 = vtanh.pop %v1117
    %v1131 = vmul.f32 %v1127, %v1037
    %v1132 = vmul.f32 %v1127, %v1130
    %1134 = vrot.lane.b32.xlu0 %v1132, 64
    %v1135 = vpop.permute.xlu0 %1134
    %v1137 = vadd.f32 %v1131, %v1135
    %v1138 = vtanh.pop %v1137
    %v1139 = vmul.f32 %v1129, %v1138
    %1141 = vrot.lane.b32.xlu0 %v1139, 64
    %v1142 = vpop.permute.xlu0 %1141
    %v1143 = vsel %vm241, %v1142, 0
    %1145 = vmatprep.subr.mxu0 %v226
    %1146 = vmatpush1.msra.mxu0 %v225
    %1147 = vmatprep.subr.mxu0 %v228
    %1148 = vmatpush1.msra.mxu0 %v227
    %1149 = vmatprep.subr.mxu0 %v230
    %1150 = vmatpush1.msra.mxu0 %v229
    %1151 = vmatprep.subr.mxu0 %v232
    %1152 = vmatpush1.msra.mxu0 %v231
    %1153 = vmatprep.subr.mxu0 %v234
    %1154 = vmatpush1.msra.mxu0 %v233
    %1155 = vmatprep.subr.mxu0 %v236
    %1156 = vmatpush1.msra.mxu0 %v235
    %1157 = vmatprep.subr.mxu0 %v238
    %1158 = vmatpush1.msra.mxu0 %v237
    %1159 = vmatprep.subr.mxu0 %v240
    %1160 = vmatpush1.msra.mxu0 %v239
    %1161 = vmatprep.subr.mxu0 0.0
    %1162 = vmatpush1.msra.mxu0 0.0
    %1163 = vmatprep.subr.mxu0 0.0
    %1164 = vmatpush1.msra.mxu0 0.0
    %1165 = vmatprep.subr.mxu0 0.0
    %1166 = vmatpush1.msra.mxu0 0.0
    %1167 = vmatprep.subr.mxu0 0.0
    %1168 = vmatpush1.msra.mxu0 0.0
    %1169 = vmatprep.subr.mxu0 0.0
    %1170 = vmatpush1.msra.mxu0 0.0
    %1171 = vmatprep.subr.mxu0 0.0
    %1172 = vmatpush1.msra.mxu0 0.0
    %1173 = vmatprep.subr.mxu0 0.0
    %1174 = vmatpush1.msra.mxu0 0.0
    %1175 = vmatprep.subr.mxu0 0.0
    %1176 = vmatpush1.msra.mxu0 0.0
    %1177 = vmatprep.subr.mxu0 0.0
    %1178 = vmatpush1.msra.mxu0 0.0
    %1179 = vmatprep.subr.mxu0 0.0
    %1180 = vmatpush1.msra.mxu0 0.0
    %1181 = vmatprep.subr.mxu0 0.0
    %1182 = vmatpush1.msra.mxu0 0.0
    %1183 = vmatprep.subr.mxu0 0.0
    %1184 = vmatpush1.msra.mxu0 0.0
    %1185 = vmatprep.subr.mxu0 0.0
    %1186 = vmatpush1.msra.mxu0 0.0
    %1187 = vmatprep.subr.mxu0 0.0
    %1188 = vmatpush1.msra.mxu0 0.0
    %1189 = vmatprep.subr.mxu0 0.0
    %1190 = vmatpush1.msra.mxu0 0.0
    %1191 = vmatprep.subr.mxu0 0.0
    %1192 = vmatpush1.msra.mxu0 0.0
    %1193 = vmatprep.subr.mxu0 0.0
    %1194 = vmatpush1.msra.mxu0 0.0
    %1195 = vmatprep.subr.mxu0 0.0
    %1196 = vmatpush1.msra.mxu0 0.0
    %1197 = vmatprep.subr.mxu0 0.0
    %1198 = vmatpush1.msra.mxu0 0.0
    %1199 = vmatprep.subr.mxu0 0.0
    %1200 = vmatpush1.msra.mxu0 0.0
    %1201 = vmatprep.subr.mxu0 0.0
    %1202 = vmatpush1.msra.mxu0 0.0
    %1203 = vmatprep.subr.mxu0 0.0
    %1204 = vmatpush1.msra.mxu0 0.0
    %1205 = vmatprep.subr.mxu0 0.0
    %1206 = vmatpush1.msra.mxu0 0.0
    %1207 = vmatprep.subr.mxu0 0.0
    %1208 = vmatpush1.msra.mxu0 0.0
    %1209 = vmatprep.mubr.f32.mxu0 0.0
    %1210 = vmatmul.mubr.f32.gmra.mrb[0].mxu0 %v1143
    %v1211 = vpop.f32.mrb[0].mxu0
    %v1212 = vadd.f32 0.0, %v1211
    %v1213 = vpop.f32.mrb[0].mxu0
    %v1214 = vadd.f32 0.0, %v1213
    %1215 = vdwg.mxu0
    %v1216 = vadd.f32 %v221, %v1212
    %v1217 = vadd.f32 %v223, %v1214
    %v1218 = vxor.u32 %v1216, 2147483648
    %v1219 = vxor.u32 %v1217, 2147483648
    %v1220 = vmul.f32 %v1218, 1.442695
    %v1221 = vpow.pop %v1220
    %v1222 = vmul.f32 %v1219, 1.442695
    %v1223 = vpow.pop %v1222
    %v1224 = vadd.f32 %v1221, 1.0
    %v1225 = vadd.f32 %v1223, 1.0
    %v1226 = vrcp.pop %v1224
    %v1227 = vmul.f32 1.0, %v1226
    %v1228 = vrcp.pop %v1225
    %v1229 = vmul.f32 1.0, %v1228
    %v1230 = vtanh.pop %v1217
    %v1231 = vmul.f32 %v1227, %v1137
    %v1232 = vmul.f32 %v1227, %v1230
    %1234 = vrot.lane.b32.xlu0 %v1232, 64
    %v1235 = vpop.permute.xlu0 %1234
    %v1237 = vadd.f32 %v1231, %v1235
    %v1238 = vtanh.pop %v1237
    %v1239 = vmul.f32 %v1229, %v1238
    %v1240 = vld [vmem:[%s4] sm:$0xff]
    %v1241 = vld [vmem:[%s4 + $0x8] sm:$0xff]
    %v1242 = vld [vmem:[%s4 + $0x10] sm:$0xff]
    %v1243 = vld [vmem:[%s4 + $0x18] sm:$0xff]
    %v1244 = vld [vmem:[%s4 + $0x20] sm:$0xff]
    %v1245 = vld [vmem:[%s4 + $0x28] sm:$0xff]
    %v1246 = vld [vmem:[%s4 + $0x30] sm:$0xff]
    %v1247 = vld [vmem:[%s4 + $0x38] sm:$0xff]
    %v1248 = vld [vmem:[%s5] sm:$0x3]
    %v1250 = vlaneseq
    %v1251 = vshrl.u32 %v1250, 7
    %v1252 = vsub.s32 0, %v1251
    %v1253 = vrot.slane %v1248, %v1252
    %v1254 = vlaneseq
    %v1255 = vshrl.u32 %v1254, 7
    %v1256 = vsub.s32 1, %v1255
    %v1257 = vrot.slane %v1248, %v1256
    %1260 = vmatprep.subr.mxu0 %v1241
    %1261 = vmatpush1.msra.mxu0 %v1240
    %1262 = vmatprep.subr.mxu0 %v1243
    %1263 = vmatpush1.msra.mxu0 %v1242
    %1264 = vmatprep.subr.mxu0 %v1245
    %1265 = vmatpush1.msra.mxu0 %v1244
    %1266 = vmatprep.subr.mxu0 %v1247
    %1267 = vmatpush1.msra.mxu0 %v1246
    %1268 = vmatprep.subr.mxu0 0.0
    %1269 = vmatpush1.msra.mxu0 0.0
    %1270 = vmatprep.subr.mxu0 0.0
    %1271 = vmatpush1.msra.mxu0 0.0
    %1272 = vmatprep.subr.mxu0 0.0
    %1273 = vmatpush1.msra.mxu0 0.0
    %1274 = vmatprep.subr.mxu0 0.0
    %1275 = vmatpush1.msra.mxu0 0.0
    %1276 = vmatprep.subr.mxu0 0.0
    %1277 = vmatpush1.msra.mxu0 0.0
    %1278 = vmatprep.subr.mxu0 0.0
    %1279 = vmatpush1.msra.mxu0 0.0
    %1280 = vmatprep.subr.mxu0 0.0
    %1281 = vmatpush1.msra.mxu0 0.0
    %1282 = vmatprep.subr.mxu0 0.0
    %1283 = vmatpush1.msra.mxu0 0.0
    %1284 = vmatprep.subr.mxu0 0.0
    %1285 = vmatpush1.msra.mxu0 0.0
    %1286 = vmatprep.subr.mxu0 0.0
    %1287 = vmatpush1.msra.mxu0 0.0
    %1288 = vmatprep.subr.mxu0 0.0
    %1289 = vmatpush1.msra.mxu0 0.0
    %1290 = vmatprep.subr.mxu0 0.0
    %1291 = vmatpush1.msra.mxu0 0.0
    %1292 = vmatprep.subr.mxu0 0.0
    %1293 = vmatpush1.msra.mxu0 0.0
    %1294 = vmatprep.subr.mxu0 0.0
    %1295 = vmatpush1.msra.mxu0 0.0
    %1296 = vmatprep.subr.mxu0 0.0
    %1297 = vmatpush1.msra.mxu0 0.0
    %1298 = vmatprep.subr.mxu0 0.0
    %1299 = vmatpush1.msra.mxu0 0.0
    %1300 = vmatprep.subr.mxu0 0.0
    %1301 = vmatpush1.msra.mxu0 0.0
    %1302 = vmatprep.subr.mxu0 0.0
    %1303 = vmatpush1.msra.mxu0 0.0
    %1304 = vmatprep.subr.mxu0 0.0
    %1305 = vmatpush1.msra.mxu0 0.0
    %1306 = vmatprep.subr.mxu0 0.0
    %1307 = vmatpush1.msra.mxu0 0.0
    %1308 = vmatprep.subr.mxu0 0.0
    %1309 = vmatpush1.msra.mxu0 0.0
    %1310 = vmatprep.subr.mxu0 0.0
    %1311 = vmatpush1.msra.mxu0 0.0
    %1312 = vmatprep.subr.mxu0 0.0
    %1313 = vmatpush1.msra.mxu0 0.0
    %1314 = vmatprep.subr.mxu0 0.0
    %1315 = vmatpush1.msra.mxu0 0.0
    %1316 = vmatprep.subr.mxu0 0.0
    %1317 = vmatpush1.msra.mxu0 0.0
    %1318 = vmatprep.subr.mxu0 0.0
    %1319 = vmatpush1.msra.mxu0 0.0
    %1320 = vmatprep.subr.mxu0 0.0
    %1321 = vmatpush1.msra.mxu0 0.0
    %1322 = vmatprep.subr.mxu0 0.0
    %1323 = vmatpush1.msra.mxu0 0.0
    %1324 = vmatprep.mubr.f32.mxu0 0.0
    %1325 = vmatmul.mubr.f32.gmra.mrb[0].mxu0 %v98
    %v1326 = vpop.f32.mrb[0].mxu0
    %v1327 = vadd.f32 %v1253, %v1326
    %v1328 = vpop.f32.mrb[0].mxu0
    %v1329 = vadd.f32 %v1257, %v1328
    %1330 = vdwg.mxu0
    %v1331 = vxor.u32 %v1327, 2147483648
    %v1332 = vxor.u32 %v1329, 2147483648
    %v1333 = vmul.f32 %v1331, 1.442695
    %v1334 = vpow.pop %v1333
    %v1335 = vmul.f32 %v1332, 1.442695
    %v1336 = vpow.pop %v1335
    %v1337 = vadd.f32 %v1334, 1.0
    %v1338 = vadd.f32 %v1336, 1.0
    %v1339 = vrcp.pop %v1337
    %v1340 = vmul.f32 1.0, %v1339
    %v1341 = vrcp.pop %v1338
    %v1342 = vmul.f32 1.0, %v1341
    %v1343 = vtanh.pop %v1329
    %v1344 = vmul.f32 %v1340, %v1343
    %v1345 = vtanh.pop %v1344
    %1347 = vrot.lane.b32.xlu0 %v1345, 64
    %v1348 = vpop.permute.xlu0 %1347
    %v1350 = vmul.f32 %v1342, %v1348
    %v1351 = vld [vmem:[%s6] sm:$0xff]
    %v1352 = vld [vmem:[%s6 + $0x8] sm:$0xff]
    %v1353 = vld [vmem:[%s6 + $0x10] sm:$0xff]
    %v1354 = vld [vmem:[%s6 + $0x18] sm:$0xff]
    %v1355 = vld [vmem:[%s6 + $0x20] sm:$0xff]
    %v1356 = vld [vmem:[%s6 + $0x28] sm:$0xff]
    %v1357 = vld [vmem:[%s6 + $0x30] sm:$0xff]
    %v1358 = vld [vmem:[%s6 + $0x38] sm:$0xff]
    %v1359 = vld [vmem:[%s7] sm:$0xff]
    %v1360 = vld [vmem:[%s7 + $0x8] sm:$0xff]
    %v1361 = vld [vmem:[%s7 + $0x10] sm:$0xff]
    %v1362 = vld [vmem:[%s7 + $0x18] sm:$0xff]
    %v1363 = vld [vmem:[%s7 + $0x20] sm:$0xff]
    %v1364 = vld [vmem:[%s7 + $0x28] sm:$0xff]
    %v1365 = vld [vmem:[%s7 + $0x30] sm:$0xff]
    %v1366 = vld [vmem:[%s7 + $0x38] sm:$0xff]
    %1368 = vrot.lane.b32.xlu0 %v1350, 64
    %v1369 = vpop.permute.xlu0 %1368
    %v1370 = vsel %vm241, %v1369, 0
    %1372 = vmatprep.subr.mxu0 0.0
    %1373 = vmatpush1.msra.mxu0 %v1359
    %1374 = vmatprep.subr.mxu0 0.0
    %1375 = vmatpush1.msra.mxu0 %v1360
    %1376 = vmatprep.subr.mxu0 0.0
    %1377 = vmatpush1.msra.mxu0 %v1361
    %1378 = vmatprep.subr.mxu0 0.0
    %1379 = vmatpush1.msra.mxu0 %v1362
    %1380 = vmatprep.subr.mxu0 0.0
    %1381 = vmatpush1.msra.mxu0 %v1363
    %1382 = vmatprep.subr.mxu0 0.0
    %1383 = vmatpush1.msra.mxu0 %v1364
    %1384 = vmatprep.subr.mxu0 0.0
    %1385 = vmatpush1.msra.mxu0 %v1365
    %1386 = vmatprep.subr.mxu0 0.0
    %1387 = vmatpush1.msra.mxu0 %v1366
    %1388 = vmatprep.subr.mxu0 0.0
    %1389 = vmatpush1.msra.mxu0 0.0
    %1390 = vmatprep.subr.mxu0 0.0
    %1391 = vmatpush1.msra.mxu0 0.0
    %1392 = vmatprep.subr.mxu0 0.0
    %1393 = vmatpush1.msra.mxu0 0.0
    %1394 = vmatprep.subr.mxu0 0.0
    %1395 = vmatpush1.msra.mxu0 0.0
    %1396 = vmatprep.subr.mxu0 0.0
    %1397 = vmatpush1.msra.mxu0 0.0
    %1398 = vmatprep.subr.mxu0 0.0
    %1399 = vmatpush1.msra.mxu0 0.0
    %1400 = vmatprep.subr.mxu0 0.0
    %1401 = vmatpush1.msra.mxu0 0.0
    %1402 = vmatprep.subr.mxu0 0.0
    %1403 = vmatpush1.msra.mxu0 0.0
    %1404 = vmatprep.subr.mxu0 0.0
    %1405 = vmatpush1.msra.mxu0 0.0
    %1406 = vmatprep.subr.mxu0 0.0
    %1407 = vmatpush1.msra.mxu0 0.0
    %1408 = vmatprep.subr.mxu0 0.0
    %1409 = vmatpush1.msra.mxu0 0.0
    %1410 = vmatprep.subr.mxu0 0.0
    %1411 = vmatpush1.msra.mxu0 0.0
    %1412 = vmatprep.subr.mxu0 0.0
    %1413 = vmatpush1.msra.mxu0 0.0
    %1414 = vmatprep.subr.mxu0 0.0
    %1415 = vmatpush1.msra.mxu0 0.0
    %1416 = vmatprep.subr.mxu0 0.0
    %1417 = vmatpush1.msra.mxu0 0.0
    %1418 = vmatprep.subr.mxu0 0.0
    %1419 = vmatpush1.msra.mxu0 0.0
    %1420 = vmatprep.subr.mxu0 0.0
    %1421 = vmatpush1.msra.mxu0 0.0
    %1422 = vmatprep.subr.mxu0 0.0
    %1423 = vmatpush1.msra.mxu0 0.0
    %1424 = vmatprep.subr.mxu0 0.0
    %1425 = vmatpush1.msra.mxu0 0.0
    %1426 = vmatprep.subr.mxu0 0.0
    %1427 = vmatpush1.msra.mxu0 0.0
    %1428 = vmatprep.subr.mxu0 0.0
    %1429 = vmatpush1.msra.mxu0 0.0
    %1430 = vmatprep.subr.mxu0 0.0
    %1431 = vmatpush1.msra.mxu0 0.0
    %1432 = vmatprep.subr.mxu0 0.0
    %1433 = vmatpush1.msra.mxu0 0.0
    %1434 = vmatprep.subr.mxu0 0.0
    %1435 = vmatpush1.msra.mxu0 0.0
    %1436 = vmatprep.mubr.f32.mxu0 0.0
    %1437 = vmatmul.mubr.f32.gmra.mrb[0].mxu0 %v1370
    %v1438 = vpop.f32.mrb[0].mxu0
    %v1439 = vadd.f32 0.0, %v1438
    %v1440 = vpop.f32.mrb[0].mxu0
    %1441 = vdwg.mxu0
    %1443 = vrot.lane.b32.xlu0 %v1239, 64
    %v1444 = vpop.permute.xlu0 %1443
    %v1445 = vsel %vm241, %v1444, 0
    %1447 = vmatprep.subr.mxu0 0.0
    %1448 = vmatpush1.msra.mxu0 %v1351
    %1449 = vmatprep.subr.mxu0 0.0
    %1450 = vmatpush1.msra.mxu0 %v1352
    %1451 = vmatprep.subr.mxu0 0.0
    %1452 = vmatpush1.msra.mxu0 %v1353
    %1453 = vmatprep.subr.mxu0 0.0
    %1454 = vmatpush1.msra.mxu0 %v1354
    %1455 = vmatprep.subr.mxu0 0.0
    %1456 = vmatpush1.msra.mxu0 %v1355
    %1457 = vmatprep.subr.mxu0 0.0
    %1458 = vmatpush1.msra.mxu0 %v1356
    %1459 = vmatprep.subr.mxu0 0.0
    %1460 = vmatpush1.msra.mxu0 %v1357
    %1461 = vmatprep.subr.mxu0 0.0
    %1462 = vmatpush1.msra.mxu0 %v1358
    %1463 = vmatprep.subr.mxu0 0.0
    %1464 = vmatpush1.msra.mxu0 0.0
    %1465 = vmatprep.subr.mxu0 0.0
    %1466 = vmatpush1.msra.mxu0 0.0
    %1467 = vmatprep.subr.mxu0 0.0
    %1468 = vmatpush1.msra.mxu0 0.0
    %1469 = vmatprep.subr.mxu0 0.0
    %1470 = vmatpush1.msra.mxu0 0.0
    %1471 = vmatprep.subr.mxu0 0.0
    %1472 = vmatpush1.msra.mxu0 0.0
    %1473 = vmatprep.subr.mxu0 0.0
    %1474 = vmatpush1.msra.mxu0 0.0
    %1475 = vmatprep.subr.mxu0 0.0
    %1476 = vmatpush1.msra.mxu0 0.0
    %1477 = vmatprep.subr.mxu0 0.0
    %1478 = vmatpush1.msra.mxu0 0.0
    %1479 = vmatprep.subr.mxu0 0.0
    %1480 = vmatpush1.msra.mxu0 0.0
    %1481 = vmatprep.subr.mxu0 0.0
    %1482 = vmatpush1.msra.mxu0 0.0
    %1483 = vmatprep.subr.mxu0 0.0
    %1484 = vmatpush1.msra.mxu0 0.0
    %1485 = vmatprep.subr.mxu0 0.0
    %1486 = vmatpush1.msra.mxu0 0.0
    %1487 = vmatprep.subr.mxu0 0.0
    %1488 = vmatpush1.msra.mxu0 0.0
    %1489 = vmatprep.subr.mxu0 0.0
    %1490 = vmatpush1.msra.mxu0 0.0
    %1491 = vmatprep.subr.mxu0 0.0
    %1492 = vmatpush1.msra.mxu0 0.0
    %1493 = vmatprep.subr.mxu0 0.0
    %1494 = vmatpush1.msra.mxu0 0.0
    %1495 = vmatprep.subr.mxu0 0.0
    %1496 = vmatpush1.msra.mxu0 0.0
    %1497 = vmatprep.subr.mxu0 0.0
    %1498 = vmatpush1.msra.mxu0 0.0
    %1499 = vmatprep.subr.mxu0 0.0
    %1500 = vmatpush1.msra.mxu0 0.0
    %1501 = vmatprep.subr.mxu0 0.0
    %1502 = vmatpush1.msra.mxu0 0.0
    %1503 = vmatprep.subr.mxu0 0.0
    %1504 = vmatpush1.msra.mxu0 0.0
    %1505 = vmatprep.subr.mxu0 0.0
    %1506 = vmatpush1.msra.mxu0 0.0
    %1507 = vmatprep.subr.mxu0 0.0
    %1508 = vmatpush1.msra.mxu0 0.0
    %1509 = vmatprep.subr.mxu0 0.0
    %1510 = vmatpush1.msra.mxu0 0.0
    %1511 = vmatprep.mubr.f32.mxu0 0.0
    %1512 = vmatmul.mubr.f32.gmra.mrb[0].mxu0 %v1445
    %v1513 = vpop.f32.mrb[0].mxu0
    %v1514 = vadd.f32 %v1439, %v1513
    %v1515 = vpop.f32.mrb[0].mxu0
    %1516 = vdwg.mxu0
    %v1517 = vld [vmem:[%s8] sm:$0x1]
    %v1519 = vlaneseq
    %v1520 = vshrl.u32 %v1519, 7
    %v1521 = vsub.s32 0, %v1520
    %v1522 = vrot.slane %v1517, %v1521
    %v1524 = vadd.f32 %v1514, %v1522
    %v1525 = vmax.f32 %v1524, 0.0
    %v1526 = vld [vmem:[%s9] sm:$0xff]
    %v1527 = vld [vmem:[%s9 + $0x8] sm:$0xff]
    %v1528 = vld [vmem:[%s9 + $0x10] sm:$0xff]
    %v1529 = vld [vmem:[%s9 + $0x18] sm:$0xff]
    %v1530 = vld [vmem:[%s10] sm:$0x1]
    %v1532 = vlaneseq
    %v1533 = vshrl.u32 %v1532, 7
    %v1534 = vsub.s32 0, %v1533
    %v1535 = vrot.slane %v1530, %v1534
    %v1538 = vsel %vm69, %v1525, 0
    %1540 = vmatprep.subr.mxu0 0.0
    %1541 = vmatpush1.msra.mxu0 %v1526
    %1542 = vmatprep.subr.mxu0 0.0
    %1543 = vmatpush1.msra.mxu0 %v1527
    %1544 = vmatprep.subr.mxu0 0.0
    %1545 = vmatpush1.msra.mxu0 %v1528
    %1546 = vmatprep.subr.mxu0 0.0
    %1547 = vmatpush1.msra.mxu0 %v1529
    %1548 = vmatprep.subr.mxu0 0.0
    %1549 = vmatpush1.msra.mxu0 0.0
    %1550 = vmatprep.subr.mxu0 0.0
    %1551 = vmatpush1.msra.mxu0 0.0
    %1552 = vmatprep.subr.mxu0 0.0
    %1553 = vmatpush1.msra.mxu0 0.0
    %1554 = vmatprep.subr.mxu0 0.0
    %1555 = vmatpush1.msra.mxu0 0.0
    %1556 = vmatprep.subr.mxu0 0.0
    %1557 = vmatpush1.msra.mxu0 0.0
    %1558 = vmatprep.subr.mxu0 0.0
    %1559 = vmatpush1.msra.mxu0 0.0
    %1560 = vmatprep.subr.mxu0 0.0
    %1561 = vmatpush1.msra.mxu0 0.0
    %1562 = vmatprep.subr.mxu0 0.0
    %1563 = vmatpush1.msra.mxu0 0.0
    %1564 = vmatprep.subr.mxu0 0.0
    %1565 = vmatpush1.msra.mxu0 0.0
    %1566 = vmatprep.subr.mxu0 0.0
    %1567 = vmatpush1.msra.mxu0 0.0
    %1568 = vmatprep.subr.mxu0 0.0
    %1569 = vmatpush1.msra.mxu0 0.0
    %1570 = vmatprep.subr.mxu0 0.0
    %1571 = vmatpush1.msra.mxu0 0.0
    %1572 = vmatprep.subr.mxu0 0.0
    %1573 = vmatpush1.msra.mxu0 0.0
    %1574 = vmatprep.subr.mxu0 0.0
    %1575 = vmatpush1.msra.mxu0 0.0
    %1576 = vmatprep.subr.mxu0 0.0
    %1577 = vmatpush1.msra.mxu0 0.0
    %1578 = vmatprep.subr.mxu0 0.0
    %1579 = vmatpush1.msra.mxu0 0.0
    %1580 = vmatprep.subr.mxu0 0.0
    %1581 = vmatpush1.msra.mxu0 0.0
    %1582 = vmatprep.subr.mxu0 0.0
    %1583 = vmatpush1.msra.mxu0 0.0
    %1584 = vmatprep.subr.mxu0 0.0
    %1585 = vmatpush1.msra.mxu0 0.0
    %1586 = vmatprep.subr.mxu0 0.0
    %1587 = vmatpush1.msra.mxu0 0.0
    %1588 = vmatprep.subr.mxu0 0.0
    %1589 = vmatpush1.msra.mxu0 0.0
    %1590 = vmatprep.subr.mxu0 0.0
    %1591 = vmatpush1.msra.mxu0 0.0
    %1592 = vmatprep.subr.mxu0 0.0
    %1593 = vmatpush1.msra.mxu0 0.0
    %1594 = vmatprep.subr.mxu0 0.0
    %1595 = vmatpush1.msra.mxu0 0.0
    %1596 = vmatprep.subr.mxu0 0.0
    %1597 = vmatpush1.msra.mxu0 0.0
    %1598 = vmatprep.subr.mxu0 0.0
    %1599 = vmatpush1.msra.mxu0 0.0
    %1600 = vmatprep.subr.mxu0 0.0
    %1601 = vmatpush1.msra.mxu0 0.0
    %1602 = vmatprep.subr.mxu0 0.0
    %1603 = vmatpush1.msra.mxu0 0.0
    %1604 = vmatprep.mubr.f32.mxu0 0.0
    %1605 = vmatmul.mubr.f32.gmra.mrb[0].mxu0 %v1538
    %v1606 = vpop.f32.mrb[0].mxu0
    %v1607 = vadd.f32 %v1535, %v1606
    %v1608 = vpop.f32.mrb[0].mxu0
    %1609 = vdwg.mxu0
    %vm1610 = vcmask 33792
    %1611 = vst.msk [vmem:[#allocation2] sm:$0x3] %vm1610, %v1607
    // Predicated region
    $region46: #{crnn_forward.3} parent=1 // pred_check
      _
    $region47: #{crnn_forward.3} parent=1 // pred_check_branch
      %1613 = sbr.rel (0) target = $region49
    $region48: #{crnn_forward.3} parent=1 // pred_region
      %s1615 = ssub.s32 32, 32
      %1616 = vsyncadd [#allocation3], %s1615
      %s1618 = sshll.u32 [#allocation2], 4
      %s1619 = int_to_ptr.vmem [resolvable:$true] %s1618
      %1621 = dma.vmem_to_hbm [thread:$0]  %s1619, 32, %s11, [#allocation3]
    $region49: #{crnn_forward.3} parent=1 // pred_fallthru
      _
    // Predicated region
    $region50: #{crnn_forward.3} parent=1 // pred_check
      _
    $region51: #{crnn_forward.3} parent=1 // pred_check_branch
      %1623 = sbr.rel (0) target = $region53
    $region52: #{crnn_forward.3} parent=1 // pred_region
      %1624 = dma.done [#allocation3], 32
    $region53: #{crnn_forward.3} parent=1 // pred_fallthru
      _
    %1625 = vsyncpa [#allocation3], 1

</llo_original>
